<compile_context>
chip_gen: v7x
topology: tpu7x:2x2x1
jax: 0.10.0
libtpu: 0.0.40
codegen_flags: <defaults>
</compile_context>

<pallas_src>
import numpy as np
import jax
import jax.numpy as jnp
from jax.experimental import pallas as pl
from jax.experimental.pallas import tpu as pltpu

WIDTHS = (8, 16, 32, 32, 32)   # synthetic encoder channel widths


# --------------------------------------------------------------------------
# parameters (raw 3x3 HWIO conv weights)
# --------------------------------------------------------------------------
def init_down_params(key, cin=4, widths=WIDTHS):
    params = []
    c_prev = cin
    for i, cout in enumerate(widths):
        kw, kb = jax.random.split(jax.random.fold_in(key, i))
        w = jax.random.normal(kw, (3, 3, c_prev, cout), jnp.float32)
        w = w / jnp.sqrt(9.0 * c_prev)
        b = 0.01 * jax.random.normal(kb, (cout,), jnp.float32)
        params.append((w, b))
        c_prev = cout
    return params


def _stage_dims(cin, widths, h, w):
    dims, c_prev, hh, ww = [], cin, h, w
    for i, cout in enumerate(widths):
        dims.append((hh, ww, c_prev, cout))
        c_prev = cout
        if i < len(widths) - 1:
            hh //= 2
            ww //= 2
    return tuple(dims)


def _pack_conv(w, b, W):
    """Pack (3,3,Cin,Cout) HWIO weights into 3 banded matrices (one per
    vertical tap ky), each (W*Cin, W*Cout), acting on the row-planar layout
    (lane = x*C + c).  Horizontal taps and x zero-padding are encoded by the
    band structure (out-of-range columns simply have no matrix entry)."""
    Cin, Cout = int(w.shape[2]), int(w.shape[3])
    xin = np.arange(W)[:, None]          # input x
    xout = np.arange(W)[None, :]         # output x
    kx = xin - xout + 1                  # horizontal tap index
    valid = (kx >= 0) & (kx <= 2)
    kxc = np.clip(kx, 0, 2)
    wg = w[:, kxc, :, :]                 # (3, W, W, Cin, Cout) = [ky, xin, xout, ci, co]
    wg = jnp.where(jnp.asarray(valid)[None, :, :, None, None], wg, 0.0)
    wk = wg.transpose(0, 1, 3, 2, 4).reshape(3, W * Cin, W * Cout)
    bias = jnp.tile(b, W).reshape(1, W * Cout)      # lane = x*Cout + co -> b[co]
    return wk.astype(jnp.bfloat16), bias.astype(jnp.float32)


# --------------------------------------------------------------------------
# fused encoder kernel
# --------------------------------------------------------------------------
def _make_encoder_kernel(nb, dims):
    ns = len(dims)

    def _sel(shape, fn):
        # 0/1 selection / shift matrix built from 2-D iotas (cheap VPU work),
        # emitted directly in bf16 (exact) so every MXU matmul is single-pass.
        i = jax.lax.broadcasted_iota(jnp.int32, shape, 0)
        j = jax.lax.broadcasted_iota(jnp.int32, shape, 1)
        return jnp.where(fn(i, j), 1.0, 0.0).astype(jnp.bfloat16)

    def conv_stage(a, w_ref, b_ref, H, W, Cin, Cout):
        # a: (nb*H, W*Cin) f32/bf16 ; w_ref: (3, W*Cin, W*Cout) bf16 ; b_ref: (1, W*Cout)
        R = nb * H
        ab = a.astype(jnp.bfloat16)
        acc = jnp.dot(ab, w_ref[1], preferred_element_type=jnp.float32)  # center row tap
        if H > 1:
            # vertical tap shifts as image-boundary-aware 0/1 bf16 matmuls
            # (rows are (image, y); H is a power of two so y = r & (H-1)).
            s_dn = _sel((R, R), lambda i, j: jnp.logical_and(
                j == i - 1, (i & (H - 1)) != 0))              # reads row y-1
            s_up = _sel((R, R), lambda i, j: jnp.logical_and(
                j == i + 1, (i & (H - 1)) != (H - 1)))        # reads row y+1
            t_dn = jnp.dot(s_dn, ab,
                           preferred_element_type=jnp.float32).astype(jnp.bfloat16)
            t_up = jnp.dot(s_up, ab,
                           preferred_element_type=jnp.float32).astype(jnp.bfloat16)
            acc = acc + jnp.dot(t_dn, w_ref[0], preferred_element_type=jnp.float32)
            acc = acc + jnp.dot(t_up, w_ref[2], preferred_element_type=jnp.float32)
        acc = acc + b_ref[...]                                # bias + ReLU in f32
        return jnp.maximum(acc, 0.0)                          # (R, W*Cout) f32

    def pool_stage(a, H, W, C):
        # 2x2 max-pool, stride 2, on the row-planar layout.  Pair-max and
        # compaction are fused: 4 half-size 0/1 bf16 matmuls total.
        R, L = nb * H, W * C
        Ro, Lo = R // 2, (W // 2) * C
        logc = C.bit_length() - 1                             # C is a power of two
        ab = a.astype(jnp.bfloat16)
        # vertical pair-max of rows (2i, 2i+1) directly into compacted rows
        s_r0 = _sel((Ro, R), lambda i, j: j == 2 * i)
        s_r1 = _sel((Ro, R), lambda i, j: j == 2 * i + 1)
        r0 = jnp.dot(s_r0, ab, preferred_element_type=jnp.float32)
        r1 = jnp.dot(s_r1, ab, preferred_element_type=jnp.float32)
        rmax = jnp.maximum(r0, r1).astype(jnp.bfloat16)       # (Ro, L)
        # horizontal pair-max of x-blocks (2q, 2q+1) directly into compacted lanes
        s_c0 = _sel((L, Lo), lambda p, q: jnp.logical_and(
            (p >> logc) == 2 * (q >> logc), (p & (C - 1)) == (q & (C - 1))))
        s_c1 = _sel((L, Lo), lambda p, q: jnp.logical_and(
            (p >> logc) == 2 * (q >> logc) + 1, (p & (C - 1)) == (q & (C - 1))))
        c0 = jnp.dot(rmax, s_c0, preferred_element_type=jnp.float32)
        c1 = jnp.dot(rmax, s_c1, preferred_element_type=jnp.float32)
        return jnp.maximum(c0, c1)                            # (Ro, Lo) f32

    def kernel(*refs):
        x_ref = refs[0]
        wrefs = refs[1:1 + 2 * ns]        # interleaved (wk, bias) per stage
        orefs = refs[1 + 2 * ns:]         # (x1, x2, x3, drop4, drop5)
        a = x_ref[0]                      # (nb*H1, W1*Cin1) f32, resident in VMEM
        for s, (H, W, Cin, Cout) in enumerate(dims):
            a = conv_stage(a, wrefs[2 * s], wrefs[2 * s + 1], H, W, Cin, Cout)
            orefs[s][0] = a.astype(orefs[s].dtype)            # single HBM write
            if s + 1 < ns:
                a = pool_stage(a, H, W, Cout)

    return kernel


def _run_encoder(x2d, packed, dims, nb, grid):
    H1, W1, C1, _ = dims[0]
    kernel = _make_encoder_kernel(nb, dims)

    in_specs = [pl.BlockSpec((1, nb * H1, W1 * C1), lambda g: (g, 0, 0))]
    flat_args = [x2d]
    for wk, bias in packed:
        in_specs.append(pl.BlockSpec(wk.shape, lambda g: (0, 0, 0)))
        in_specs.append(pl.BlockSpec(bias.shape, lambda g: (0, 0)))
        flat_args += [wk, bias]

    out_shapes, out_specs = [], []
    for (H, W, _, Cout) in dims:
        out_shapes.append(jax.ShapeDtypeStruct((grid, nb * H, W * Cout),
                                               jnp.float32))
        out_specs.append(pl.BlockSpec((1, nb * H, W * Cout),
                                      lambda g: (g, 0, 0)))

    return pl.pallas_call(
        kernel,
        out_shape=tuple(out_shapes),
        grid_spec=pltpu.PrefetchScalarGridSpec(
            num_scalar_prefetch=0,
            grid=(grid,),
            in_specs=in_specs,
            out_specs=tuple(out_specs),
        ),
        compiler_params=pltpu.CompilerParams(
            dimension_semantics=("parallel",)),
    )(*flat_args)


# --------------------------------------------------------------------------
# TimeDistributedDown forward
# --------------------------------------------------------------------------
def time_distributed_down(images, params, batch_first=True):
    """images: (B, T, C, H, W) float32 (PyTorch NCHW per frame)."""
    B, T, C, H, W = images.shape
    N = B * T
    grid = 2 if N % 2 == 0 else 1          # 2-way batch split: megacore / dual-TC
    nb = N // grid
    dims = _stage_dims(C, WIDTHS, H, W)
    packed = [_pack_conv(w, b, d[1]) for (w, b), d in zip(params, dims)]

    # NCHW -> row-planar (grid, nb*H, W*C): row = (local image, y), lane = x*C + c
    x = images.reshape(N, C, H, W).transpose(0, 2, 3, 1)
    x2d = x.reshape(grid, nb * H, W * C).astype(jnp.float32)

    outs = _run_encoder(x2d, packed, dims, nb, grid)

    nchw = []
    for o, (sh, sw, _, sc) in zip(outs, dims):
        nchw.append(o.reshape(N, sh, sw, sc).transpose(0, 3, 1, 2))
    x1, x2, x3, d4, d5 = nchw
    _, c5, h5, w5 = d5.shape
    if batch_first:
        d5 = d5.reshape(B, T, c5, h5, w5)
    else:
        d5 = d5.reshape(T, B, c5, h5, w5)   # mirrors PyTorch .view semantics
    return d5, d4, x1, x2, x3


# --------------------------------------------------------------------------
# pure-XLA reference (for a loose numerical sanity check)
# --------------------------------------------------------------------------
def reference_down(images, params, batch_first=True):
    B, T, C, H, W = images.shape
    x = images.reshape(B * T, C, H, W)

    def conv(v, w, b):
        y = jax.lax.conv_general_dilated(
            v, w, window_strides=(1, 1), padding="SAME",
            dimension_numbers=("NCHW", "HWIO", "NCHW"))
        return jnp.maximum(y + b[None, :, None, None], 0.0)

    def pool(v):
        return jax.lax.reduce_window(v, -jnp.inf, jax.lax.max,
                                     (1, 1, 2, 2), (1, 1, 2, 2), "VALID")

    (w1, b1), (w2, b2), (w3, b3), (w4, b4), (w5, b5) = params
    x1 = conv(x, w1, b1)
    x2 = conv(pool(x1), w2, b2)
    x3 = conv(pool(x2), w3, b3)
    d4 = conv(pool(x3), w4, b4)
    d5 = conv(pool(d4), w5, b5)
    c5, h5, w5_ = d5.shape[1:]
    if batch_first:
        d5 = d5.reshape(B, T, c5, h5, w5_)
    else:
        d5 = d5.reshape(T, B, c5, h5, w5_)
    return d5, d4, x1, x2, x3


if __name__ == "__main__":
    key = jax.random.PRNGKey(0)
    k_in, k_par = jax.random.split(key)
    B, T, C, H, W = 2, 3, 4, 16, 16
    images = jax.random.normal(k_in, (B, T, C, H, W), jnp.float32)
    params = init_down_params(k_par, cin=C)

    fwd = jax.jit(time_distributed_down, static_argnums=(2,))
    outs = jax.block_until_ready(fwd(images, params, True))
    d5, d4, x1, x2, x3 = outs

    assert d5.shape == (B, T, 32, 1, 1)
    assert d4.shape == (B * T, 32, 2, 2)
    assert x1.shape == (B * T, 8, 16, 16)
    assert x2.shape == (B * T, 16, 8, 8)
    assert x3.shape == (B * T, 32, 4, 4)
    assert all(bool(jnp.all(jnp.isfinite(o))) for o in outs)

    # loose check vs pure-XLA f32 reference (kernel uses bf16 MXU operands)
    refs = reference_down(images, params, True)
    for got, ref in zip(outs, refs):
        assert got.shape == ref.shape
        assert bool(jnp.allclose(got, ref, rtol=0.1, atol=0.1))

    print("KERNEL_OK")
</pallas_src>

<mosaic_0001>
module attributes {stable_mosaic.version = 11 : i64} {
  func.func @kernel(%arg0: i32, %arg1: memref<1x48x64xf32, #tpu.memory_space<vmem>>, %arg2: memref<3x64x128xbf16, #tpu.memory_space<vmem>>, %arg3: memref<1x128xf32, #tpu.memory_space<vmem>>, %arg4: memref<3x64x128xbf16, #tpu.memory_space<vmem>>, %arg5: memref<1x128xf32, #tpu.memory_space<vmem>>, %arg6: memref<3x64x128xbf16, #tpu.memory_space<vmem>>, %arg7: memref<1x128xf32, #tpu.memory_space<vmem>>, %arg8: memref<3x64x64xbf16, #tpu.memory_space<vmem>>, %arg9: memref<1x64xf32, #tpu.memory_space<vmem>>, %arg10: memref<3x32x32xbf16, #tpu.memory_space<vmem>>, %arg11: memref<1x32xf32, #tpu.memory_space<vmem>>, %arg12: memref<1x48x128xf32, #tpu.memory_space<vmem>>, %arg13: memref<1x24x128xf32, #tpu.memory_space<vmem>>, %arg14: memref<1x12x128xf32, #tpu.memory_space<vmem>>, %arg15: memref<1x6x64xf32, #tpu.memory_space<vmem>>, %arg16: memref<1x3x32xf32, #tpu.memory_space<vmem>>) attributes {dimension_semantics = [#tpu.dimension_semantics<parallel>], iteration_bounds = array<i64: 2>, scalar_prefetch = 0 : i64, scratch_operands = 0 : i64, tpu.core_type = #tpu.core_type<tc>, window_params = [{transform_indices = @transform_0, window_bounds = array<i64: 1, 48, 64>}, {pipeline_mode = #tpu.pipeline_mode<synchronous>, transform_indices = @transform_1, window_bounds = array<i64: 3, 64, 128>}, {pipeline_mode = #tpu.pipeline_mode<synchronous>, transform_indices = @transform_2, window_bounds = array<i64: 1, 128>}, {pipeline_mode = #tpu.pipeline_mode<synchronous>, transform_indices = @transform_3, window_bounds = array<i64: 3, 64, 128>}, {pipeline_mode = #tpu.pipeline_mode<synchronous>, transform_indices = @transform_4, window_bounds = array<i64: 1, 128>}, {pipeline_mode = #tpu.pipeline_mode<synchronous>, transform_indices = @transform_5, window_bounds = array<i64: 3, 64, 128>}, {pipeline_mode = #tpu.pipeline_mode<synchronous>, transform_indices = @transform_6, window_bounds = array<i64: 1, 128>}, {pipeline_mode = #tpu.pipeline_mode<synchronous>, transform_indices = @transform_7, window_bounds = array<i64: 3, 64, 64>}, {pipeline_mode = #tpu.pipeline_mode<synchronous>, transform_indices = @transform_8, window_bounds = array<i64: 1, 64>}, {pipeline_mode = #tpu.pipeline_mode<synchronous>, transform_indices = @transform_9, window_bounds = array<i64: 3, 32, 32>}, {pipeline_mode = #tpu.pipeline_mode<synchronous>, transform_indices = @transform_10, window_bounds = array<i64: 1, 32>}, {transform_indices = @transform_11, window_bounds = array<i64: 1, 48, 128>}, {transform_indices = @transform_12, window_bounds = array<i64: 1, 24, 128>}, {transform_indices = @transform_13, window_bounds = array<i64: 1, 12, 128>}, {transform_indices = @transform_14, window_bounds = array<i64: 1, 6, 64>}, {transform_indices = @transform_15, window_bounds = array<i64: 1, 3, 32>}]} {
    %c0 = arith.constant 0 : index
    %c0_0 = arith.constant 0 : index
    %c0_1 = arith.constant 0 : index
    %0 = vector.load %arg1[%c0, %c0_0, %c0_1] : memref<1x48x64xf32, #tpu.memory_space<vmem>>, vector<1x48x64xf32>
    %1 = vector.shape_cast %0 : vector<1x48x64xf32> to vector<48x64xf32>
    %2 = arith.truncf %1 : vector<48x64xf32> to vector<48x64xbf16>
    %c1 = arith.constant 1 : index
    %c0_2 = arith.constant 0 : index
    %c0_3 = arith.constant 0 : index
    %3 = vector.load %arg2[%c1, %c0_2, %c0_3] : memref<3x64x128xbf16, #tpu.memory_space<vmem>>, vector<1x64x128xbf16>
    %4 = vector.shape_cast %3 : vector<1x64x128xbf16> to vector<64x128xbf16>
    %cst = arith.constant dense<0.000000e+00> : vector<48x128xf32>
    %5 = tpu.matmul %2, %4, %cst {dimension_numbers = #tpu.dot_dimension_numbers<[1], [0], [0], [1], [0, 0, 1, 1], [], []>} : vector<48x64xbf16>, vector<64x128xbf16>, vector<48x128xf32> -> vector<48x128xf32>
    %6 = tpu.iota {dimensions = array<i32: 0>} : vector<48x48xi32>
    %7 = tpu.iota {dimensions = array<i32: 1>} : vector<48x48xi32>
    %c1_i32 = arith.constant 1 : i32
    %8 = vector.broadcast %c1_i32 : i32 to vector<48x48xi32>
    %9 = arith.subi %6, %8 : vector<48x48xi32>
    %10 = arith.cmpi eq, %7, %9 : vector<48x48xi32>
    %c15_i32 = arith.constant 15 : i32
    %11 = vector.broadcast %c15_i32 : i32 to vector<48x48xi32>
    %12 = arith.andi %6, %11 : vector<48x48xi32>
    %c0_i32 = arith.constant 0 : i32
    %13 = vector.broadcast %c0_i32 : i32 to vector<48x48xi32>
    %14 = arith.cmpi ne, %12, %13 : vector<48x48xi32>
    %15 = arith.andi %10, %14 : vector<48x48xi1>
    %cst_4 = arith.constant 1.000000e+00 : f32
    %cst_5 = arith.constant 0.000000e+00 : f32
    %16 = vector.broadcast %cst_4 : f32 to vector<48x48xf32>
    %17 = vector.broadcast %cst_5 : f32 to vector<48x48xf32>
    %18 = arith.select %15, %16, %17 : vector<48x48xi1>, vector<48x48xf32>
    %19 = arith.truncf %18 : vector<48x48xf32> to vector<48x48xbf16>
    %20 = tpu.iota {dimensions = array<i32: 0>} : vector<48x48xi32>
    %21 = tpu.iota {dimensions = array<i32: 1>} : vector<48x48xi32>
    %c1_i32_6 = arith.constant 1 : i32
    %22 = vector.broadcast %c1_i32_6 : i32 to vector<48x48xi32>
    %23 = arith.addi %20, %22 : vector<48x48xi32>
    %24 = arith.cmpi eq, %21, %23 : vector<48x48xi32>
    %c15_i32_7 = arith.constant 15 : i32
    %25 = vector.broadcast %c15_i32_7 : i32 to vector<48x48xi32>
    %26 = arith.andi %20, %25 : vector<48x48xi32>
    %c15_i32_8 = arith.constant 15 : i32
    %27 = vector.broadcast %c15_i32_8 : i32 to vector<48x48xi32>
    %28 = arith.cmpi ne, %26, %27 : vector<48x48xi32>
    %29 = arith.andi %24, %28 : vector<48x48xi1>
    %cst_9 = arith.constant 1.000000e+00 : f32
    %cst_10 = arith.constant 0.000000e+00 : f32
    %30 = vector.broadcast %cst_9 : f32 to vector<48x48xf32>
    %31 = vector.broadcast %cst_10 : f32 to vector<48x48xf32>
    %32 = arith.select %29, %30, %31 : vector<48x48xi1>, vector<48x48xf32>
    %33 = arith.truncf %32 : vector<48x48xf32> to vector<48x48xbf16>
    %cst_11 = arith.constant dense<0.000000e+00> : vector<48x64xf32>
    %34 = tpu.matmul %19, %2, %cst_11 {dimension_numbers = #tpu.dot_dimension_numbers<[1], [0], [0], [1], [0, 0, 1, 1], [], []>} : vector<48x48xbf16>, vector<48x64xbf16>, vector<48x64xf32> -> vector<48x64xf32>
    %35 = arith.truncf %34 : vector<48x64xf32> to vector<48x64xbf16>
    %cst_12 = arith.constant dense<0.000000e+00> : vector<48x64xf32>
    %36 = tpu.matmul %33, %2, %cst_12 {dimension_numbers = #tpu.dot_dimension_numbers<[1], [0], [0], [1], [0, 0, 1, 1], [], []>} : vector<48x48xbf16>, vector<48x64xbf16>, vector<48x64xf32> -> vector<48x64xf32>
    %37 = arith.truncf %36 : vector<48x64xf32> to vector<48x64xbf16>
    %c0_13 = arith.constant 0 : index
    %c0_14 = arith.constant 0 : index
    %c0_15 = arith.constant 0 : index
    %38 = vector.load %arg2[%c0_13, %c0_14, %c0_15] : memref<3x64x128xbf16, #tpu.memory_space<vmem>>, vector<1x64x128xbf16>
    %39 = vector.shape_cast %38 : vector<1x64x128xbf16> to vector<64x128xbf16>
    %cst_16 = arith.constant dense<0.000000e+00> : vector<48x128xf32>
    %40 = tpu.matmul %35, %39, %cst_16 {dimension_numbers = #tpu.dot_dimension_numbers<[1], [0], [0], [1], [0, 0, 1, 1], [], []>} : vector<48x64xbf16>, vector<64x128xbf16>, vector<48x128xf32> -> vector<48x128xf32>
    %41 = arith.addf %5, %40 : vector<48x128xf32>
    %c2 = arith.constant 2 : index
    %c0_17 = arith.constant 0 : index
    %c0_18 = arith.constant 0 : index
    %42 = vector.load %arg2[%c2, %c0_17, %c0_18] : memref<3x64x128xbf16, #tpu.memory_space<vmem>>, vector<1x64x128xbf16>
    %43 = vector.shape_cast %42 : vector<1x64x128xbf16> to vector<64x128xbf16>
    %cst_19 = arith.constant dense<0.000000e+00> : vector<48x128xf32>
    %44 = tpu.matmul %37, %43, %cst_19 {dimension_numbers = #tpu.dot_dimension_numbers<[1], [0], [0], [1], [0, 0, 1, 1], [], []>} : vector<48x64xbf16>, vector<64x128xbf16>, vector<48x128xf32> -> vector<48x128xf32>
    %45 = arith.addf %41, %44 : vector<48x128xf32>
    %c0_20 = arith.constant 0 : index
    %c0_21 = arith.constant 0 : index
    %46 = vector.load %arg3[%c0_20, %c0_21] : memref<1x128xf32, #tpu.memory_space<vmem>>, vector<1x128xf32>
    %47 = vector.broadcast %46 : vector<1x128xf32> to vector<48x128xf32>
    %48 = arith.addf %45, %47 : vector<48x128xf32>
    %cst_22 = arith.constant 0.000000e+00 : f32
    %49 = vector.broadcast %cst_22 : f32 to vector<48x128xf32>
    %50 = arith.maximumf %48, %49 : vector<48x128xf32>
    %c0_23 = arith.constant 0 : index
    %c0_24 = arith.constant 0 : index
    %c0_25 = arith.constant 0 : index
    %51 = vector.load %arg12[%c0_23, %c0_24, %c0_25] : memref<1x48x128xf32, #tpu.memory_space<vmem>>, vector<1x48x128xf32>
    %52 = vector.shape_cast %51 : vector<1x48x128xf32> to vector<48x128xf32>
    %53 = vector.shape_cast %50 : vector<48x128xf32> to vector<1x48x128xf32>
    tpu.vector_store %arg12[%c0_23, %c0_24, %c0_25], %53 {strides = array<i32>} : memref<1x48x128xf32, #tpu.memory_space<vmem>>, vector<1x48x128xf32>,
    %54 = arith.truncf %50 : vector<48x128xf32> to vector<48x128xbf16>
    %55 = tpu.iota {dimensions = array<i32: 0>} : vector<24x48xi32>
    %56 = tpu.iota {dimensions = array<i32: 1>} : vector<24x48xi32>
    %c2_i32 = arith.constant 2 : i32
    %57 = vector.broadcast %c2_i32 : i32 to vector<24x48xi32>
    %58 = arith.muli %57, %55 : vector<24x48xi32>
    %59 = arith.cmpi eq, %56, %58 : vector<24x48xi32>
    %cst_26 = arith.constant 1.000000e+00 : f32
    %cst_27 = arith.constant 0.000000e+00 : f32
    %60 = vector.broadcast %cst_26 : f32 to vector<24x48xf32>
    %61 = vector.broadcast %cst_27 : f32 to vector<24x48xf32>
    %62 = arith.select %59, %60, %61 : vector<24x48xi1>, vector<24x48xf32>
    %63 = arith.truncf %62 : vector<24x48xf32> to vector<24x48xbf16>
    %64 = tpu.iota {dimensions = array<i32: 0>} : vector<24x48xi32>
    %65 = tpu.iota {dimensions = array<i32: 1>} : vector<24x48xi32>
    %c2_i32_28 = arith.constant 2 : i32
    %66 = vector.broadcast %c2_i32_28 : i32 to vector<24x48xi32>
    %67 = arith.muli %66, %64 : vector<24x48xi32>
    %c1_i32_29 = arith.constant 1 : i32
    %68 = vector.broadcast %c1_i32_29 : i32 to vector<24x48xi32>
    %69 = arith.addi %67, %68 : vector<24x48xi32>
    %70 = arith.cmpi eq, %65, %69 : vector<24x48xi32>
    %cst_30 = arith.constant 1.000000e+00 : f32
    %cst_31 = arith.constant 0.000000e+00 : f32
    %71 = vector.broadcast %cst_30 : f32 to vector<24x48xf32>
    %72 = vector.broadcast %cst_31 : f32 to vector<24x48xf32>
    %73 = arith.select %70, %71, %72 : vector<24x48xi1>, vector<24x48xf32>
    %74 = arith.truncf %73 : vector<24x48xf32> to vector<24x48xbf16>
    %cst_32 = arith.constant dense<0.000000e+00> : vector<24x128xf32>
    %75 = tpu.matmul %63, %54, %cst_32 {dimension_numbers = #tpu.dot_dimension_numbers<[1], [0], [0], [1], [0, 0, 1, 1], [], []>} : vector<24x48xbf16>, vector<48x128xbf16>, vector<24x128xf32> -> vector<24x128xf32>
    %cst_33 = arith.constant dense<0.000000e+00> : vector<24x128xf32>
    %76 = tpu.matmul %74, %54, %cst_33 {dimension_numbers = #tpu.dot_dimension_numbers<[1], [0], [0], [1], [0, 0, 1, 1], [], []>} : vector<24x48xbf16>, vector<48x128xbf16>, vector<24x128xf32> -> vector<24x128xf32>
    %77 = arith.maximumf %75, %76 : vector<24x128xf32>
    %78 = arith.truncf %77 : vector<24x128xf32> to vector<24x128xbf16>
    %79 = tpu.iota {dimensions = array<i32: 0>} : vector<128x64xi32>
    %80 = tpu.iota {dimensions = array<i32: 1>} : vector<128x64xi32>
    %c3_i32 = arith.constant 3 : i32
    %81 = vector.broadcast %c3_i32 : i32 to vector<128x64xi32>
    %82 = arith.shrsi %79, %81 : vector<128x64xi32>
    %c3_i32_34 = arith.constant 3 : i32
    %83 = vector.broadcast %c3_i32_34 : i32 to vector<128x64xi32>
    %84 = arith.shrsi %80, %83 : vector<128x64xi32>
    %c2_i32_35 = arith.constant 2 : i32
    %85 = vector.broadcast %c2_i32_35 : i32 to vector<128x64xi32>
    %86 = arith.muli %85, %84 : vector<128x64xi32>
    %87 = arith.cmpi eq, %82, %86 : vector<128x64xi32>
    %c7_i32 = arith.constant 7 : i32
    %88 = vector.broadcast %c7_i32 : i32 to vector<128x64xi32>
    %89 = arith.andi %79, %88 : vector<128x64xi32>
    %c7_i32_36 = arith.constant 7 : i32
    %90 = vector.broadcast %c7_i32_36 : i32 to vector<128x64xi32>
    %91 = arith.andi %80, %90 : vector<128x64xi32>
    %92 = arith.cmpi eq, %89, %91 : vector<128x64xi32>
    %93 = arith.andi %87, %92 : vector<128x64xi1>
    %cst_37 = arith.constant 1.000000e+00 : f32
    %cst_38 = arith.constant 0.000000e+00 : f32
    %94 = vector.broadcast %cst_37 : f32 to vector<128x64xf32>
    %95 = vector.broadcast %cst_38 : f32 to vector<128x64xf32>
    %96 = arith.select %93, %94, %95 : vector<128x64xi1>, vector<128x64xf32>
    %97 = arith.truncf %96 : vector<128x64xf32> to vector<128x64xbf16>
    %98 = tpu.iota {dimensions = array<i32: 0>} : vector<128x64xi32>
    %99 = tpu.iota {dimensions = array<i32: 1>} : vector<128x64xi32>
    %c3_i32_39 = arith.constant 3 : i32
    %100 = vector.broadcast %c3_i32_39 : i32 to vector<128x64xi32>
    %101 = arith.shrsi %98, %100 : vector<128x64xi32>
    %c3_i32_40 = arith.constant 3 : i32
    %102 = vector.broadcast %c3_i32_40 : i32 to vector<128x64xi32>
    %103 = arith.shrsi %99, %102 : vector<128x64xi32>
    %c2_i32_41 = arith.constant 2 : i32
    %104 = vector.broadcast %c2_i32_41 : i32 to vector<128x64xi32>
    %105 = arith.muli %104, %103 : vector<128x64xi32>
    %c1_i32_42 = arith.constant 1 : i32
    %106 = vector.broadcast %c1_i32_42 : i32 to vector<128x64xi32>
    %107 = arith.addi %105, %106 : vector<128x64xi32>
    %108 = arith.cmpi eq, %101, %107 : vector<128x64xi32>
    %c7_i32_43 = arith.constant 7 : i32
    %109 = vector.broadcast %c7_i32_43 : i32 to vector<128x64xi32>
    %110 = arith.andi %98, %109 : vector<128x64xi32>
    %c7_i32_44 = arith.constant 7 : i32
    %111 = vector.broadcast %c7_i32_44 : i32 to vector<128x64xi32>
    %112 = arith.andi %99, %111 : vector<128x64xi32>
    %113 = arith.cmpi eq, %110, %112 : vector<128x64xi32>
    %114 = arith.andi %108, %113 : vector<128x64xi1>
    %cst_45 = arith.constant 1.000000e+00 : f32
    %cst_46 = arith.constant 0.000000e+00 : f32
    %115 = vector.broadcast %cst_45 : f32 to vector<128x64xf32>
    %116 = vector.broadcast %cst_46 : f32 to vector<128x64xf32>
    %117 = arith.select %114, %115, %116 : vector<128x64xi1>, vector<128x64xf32>
    %118 = arith.truncf %117 : vector<128x64xf32> to vector<128x64xbf16>
    %cst_47 = arith.constant dense<0.000000e+00> : vector<24x64xf32>
    %119 = tpu.matmul %78, %97, %cst_47 {dimension_numbers = #tpu.dot_dimension_numbers<[1], [0], [0], [1], [0, 0, 1, 1], [], []>} : vector<24x128xbf16>, vector<128x64xbf16>, vector<24x64xf32> -> vector<24x64xf32>
    %cst_48 = arith.constant dense<0.000000e+00> : vector<24x64xf32>
    %120 = tpu.matmul %78, %118, %cst_48 {dimension_numbers = #tpu.dot_dimension_numbers<[1], [0], [0], [1], [0, 0, 1, 1], [], []>} : vector<24x128xbf16>, vector<128x64xbf16>, vector<24x64xf32> -> vector<24x64xf32>
    %121 = arith.maximumf %119, %120 : vector<24x64xf32>
    %122 = arith.truncf %121 : vector<24x64xf32> to vector<24x64xbf16>
    %c1_49 = arith.constant 1 : index
    %c0_50 = arith.constant 0 : index
    %c0_51 = arith.constant 0 : index
    %123 = vector.load %arg4[%c1_49, %c0_50, %c0_51] : memref<3x64x128xbf16, #tpu.memory_space<vmem>>, vector<1x64x128xbf16>
    %124 = vector.shape_cast %123 : vector<1x64x128xbf16> to vector<64x128xbf16>
    %cst_52 = arith.constant dense<0.000000e+00> : vector<24x128xf32>
    %125 = tpu.matmul %122, %124, %cst_52 {dimension_numbers = #tpu.dot_dimension_numbers<[1], [0], [0], [1], [0, 0, 1, 1], [], []>} : vector<24x64xbf16>, vector<64x128xbf16>, vector<24x128xf32> -> vector<24x128xf32>
    %126 = tpu.iota {dimensions = array<i32: 0>} : vector<24x24xi32>
    %127 = tpu.iota {dimensions = array<i32: 1>} : vector<24x24xi32>
    %c1_i32_53 = arith.constant 1 : i32
    %128 = vector.broadcast %c1_i32_53 : i32 to vector<24x24xi32>
    %129 = arith.subi %126, %128 : vector<24x24xi32>
    %130 = arith.cmpi eq, %127, %129 : vector<24x24xi32>
    %c7_i32_54 = arith.constant 7 : i32
    %131 = vector.broadcast %c7_i32_54 : i32 to vector<24x24xi32>
    %132 = arith.andi %126, %131 : vector<24x24xi32>
    %c0_i32_55 = arith.constant 0 : i32
    %133 = vector.broadcast %c0_i32_55 : i32 to vector<24x24xi32>
    %134 = arith.cmpi ne, %132, %133 : vector<24x24xi32>
    %135 = arith.andi %130, %134 : vector<24x24xi1>
    %cst_56 = arith.constant 1.000000e+00 : f32
    %cst_57 = arith.constant 0.000000e+00 : f32
    %136 = vector.broadcast %cst_56 : f32 to vector<24x24xf32>
    %137 = vector.broadcast %cst_57 : f32 to vector<24x24xf32>
    %138 = arith.select %135, %136, %137 : vector<24x24xi1>, vector<24x24xf32>
    %139 = arith.truncf %138 : vector<24x24xf32> to vector<24x24xbf16>
    %140 = tpu.iota {dimensions = array<i32: 0>} : vector<24x24xi32>
    %141 = tpu.iota {dimensions = array<i32: 1>} : vector<24x24xi32>
    %c1_i32_58 = arith.constant 1 : i32
    %142 = vector.broadcast %c1_i32_58 : i32 to vector<24x24xi32>
    %143 = arith.addi %140, %142 : vector<24x24xi32>
    %144 = arith.cmpi eq, %141, %143 : vector<24x24xi32>
    %c7_i32_59 = arith.constant 7 : i32
    %145 = vector.broadcast %c7_i32_59 : i32 to vector<24x24xi32>
    %146 = arith.andi %140, %145 : vector<24x24xi32>
    %c7_i32_60 = arith.constant 7 : i32
    %147 = vector.broadcast %c7_i32_60 : i32 to vector<24x24xi32>
    %148 = arith.cmpi ne, %146, %147 : vector<24x24xi32>
    %149 = arith.andi %144, %148 : vector<24x24xi1>
    %cst_61 = arith.constant 1.000000e+00 : f32
    %cst_62 = arith.constant 0.000000e+00 : f32
    %150 = vector.broadcast %cst_61 : f32 to vector<24x24xf32>
    %151 = vector.broadcast %cst_62 : f32 to vector<24x24xf32>
    %152 = arith.select %149, %150, %151 : vector<24x24xi1>, vector<24x24xf32>
    %153 = arith.truncf %152 : vector<24x24xf32> to vector<24x24xbf16>
    %cst_63 = arith.constant dense<0.000000e+00> : vector<24x64xf32>
    %154 = tpu.matmul %139, %122, %cst_63 {dimension_numbers = #tpu.dot_dimension_numbers<[1], [0], [0], [1], [0, 0, 1, 1], [], []>} : vector<24x24xbf16>, vector<24x64xbf16>, vector<24x64xf32> -> vector<24x64xf32>
    %155 = arith.truncf %154 : vector<24x64xf32> to vector<24x64xbf16>
    %cst_64 = arith.constant dense<0.000000e+00> : vector<24x64xf32>
    %156 = tpu.matmul %153, %122, %cst_64 {dimension_numbers = #tpu.dot_dimension_numbers<[1], [0], [0], [1], [0, 0, 1, 1], [], []>} : vector<24x24xbf16>, vector<24x64xbf16>, vector<24x64xf32> -> vector<24x64xf32>
    %157 = arith.truncf %156 : vector<24x64xf32> to vector<24x64xbf16>
    %c0_65 = arith.constant 0 : index
    %c0_66 = arith.constant 0 : index
    %c0_67 = arith.constant 0 : index
    %158 = vector.load %arg4[%c0_65, %c0_66, %c0_67] : memref<3x64x128xbf16, #tpu.memory_space<vmem>>, vector<1x64x128xbf16>
    %159 = vector.shape_cast %158 : vector<1x64x128xbf16> to vector<64x128xbf16>
    %cst_68 = arith.constant dense<0.000000e+00> : vector<24x128xf32>
    %160 = tpu.matmul %155, %159, %cst_68 {dimension_numbers = #tpu.dot_dimension_numbers<[1], [0], [0], [1], [0, 0, 1, 1], [], []>} : vector<24x64xbf16>, vector<64x128xbf16>, vector<24x128xf32> -> vector<24x128xf32>
    %161 = arith.addf %125, %160 : vector<24x128xf32>
    %c2_69 = arith.constant 2 : index
    %c0_70 = arith.constant 0 : index
    %c0_71 = arith.constant 0 : index
    %162 = vector.load %arg4[%c2_69, %c0_70, %c0_71] : memref<3x64x128xbf16, #tpu.memory_space<vmem>>, vector<1x64x128xbf16>
    %163 = vector.shape_cast %162 : vector<1x64x128xbf16> to vector<64x128xbf16>
    %cst_72 = arith.constant dense<0.000000e+00> : vector<24x128xf32>
    %164 = tpu.matmul %157, %163, %cst_72 {dimension_numbers = #tpu.dot_dimension_numbers<[1], [0], [0], [1], [0, 0, 1, 1], [], []>} : vector<24x64xbf16>, vector<64x128xbf16>, vector<24x128xf32> -> vector<24x128xf32>
    %165 = arith.addf %161, %164 : vector<24x128xf32>
    %c0_73 = arith.constant 0 : index
    %c0_74 = arith.constant 0 : index
    %166 = vector.load %arg5[%c0_73, %c0_74] : memref<1x128xf32, #tpu.memory_space<vmem>>, vector<1x128xf32>
    %167 = vector.broadcast %166 : vector<1x128xf32> to vector<24x128xf32>
    %168 = arith.addf %165, %167 : vector<24x128xf32>
    %cst_75 = arith.constant 0.000000e+00 : f32
    %169 = vector.broadcast %cst_75 : f32 to vector<24x128xf32>
    %170 = arith.maximumf %168, %169 : vector<24x128xf32>
    %c0_76 = arith.constant 0 : index
    %c0_77 = arith.constant 0 : index
    %c0_78 = arith.constant 0 : index
    %171 = vector.load %arg13[%c0_76, %c0_77, %c0_78] : memref<1x24x128xf32, #tpu.memory_space<vmem>>, vector<1x24x128xf32>
    %172 = vector.shape_cast %171 : vector<1x24x128xf32> to vector<24x128xf32>
    %173 = vector.shape_cast %170 : vector<24x128xf32> to vector<1x24x128xf32>
    tpu.vector_store %arg13[%c0_76, %c0_77, %c0_78], %173 {strides = array<i32>} : memref<1x24x128xf32, #tpu.memory_space<vmem>>, vector<1x24x128xf32>,
    %174 = arith.truncf %170 : vector<24x128xf32> to vector<24x128xbf16>
    %175 = tpu.iota {dimensions = array<i32: 0>} : vector<12x24xi32>
    %176 = tpu.iota {dimensions = array<i32: 1>} : vector<12x24xi32>
    %c2_i32_79 = arith.constant 2 : i32
    %177 = vector.broadcast %c2_i32_79 : i32 to vector<12x24xi32>
    %178 = arith.muli %177, %175 : vector<12x24xi32>
    %179 = arith.cmpi eq, %176, %178 : vector<12x24xi32>
    %cst_80 = arith.constant 1.000000e+00 : f32
    %cst_81 = arith.constant 0.000000e+00 : f32
    %180 = vector.broadcast %cst_80 : f32 to vector<12x24xf32>
    %181 = vector.broadcast %cst_81 : f32 to vector<12x24xf32>
    %182 = arith.select %179, %180, %181 : vector<12x24xi1>, vector<12x24xf32>
    %183 = arith.truncf %182 : vector<12x24xf32> to vector<12x24xbf16>
    %184 = tpu.iota {dimensions = array<i32: 0>} : vector<12x24xi32>
    %185 = tpu.iota {dimensions = array<i32: 1>} : vector<12x24xi32>
    %c2_i32_82 = arith.constant 2 : i32
    %186 = vector.broadcast %c2_i32_82 : i32 to vector<12x24xi32>
    %187 = arith.muli %186, %184 : vector<12x24xi32>
    %c1_i32_83 = arith.constant 1 : i32
    %188 = vector.broadcast %c1_i32_83 : i32 to vector<12x24xi32>
    %189 = arith.addi %187, %188 : vector<12x24xi32>
    %190 = arith.cmpi eq, %185, %189 : vector<12x24xi32>
    %cst_84 = arith.constant 1.000000e+00 : f32
    %cst_85 = arith.constant 0.000000e+00 : f32
    %191 = vector.broadcast %cst_84 : f32 to vector<12x24xf32>
    %192 = vector.broadcast %cst_85 : f32 to vector<12x24xf32>
    %193 = arith.select %190, %191, %192 : vector<12x24xi1>, vector<12x24xf32>
    %194 = arith.truncf %193 : vector<12x24xf32> to vector<12x24xbf16>
    %cst_86 = arith.constant dense<0.000000e+00> : vector<12x128xf32>
    %195 = tpu.matmul %183, %174, %cst_86 {dimension_numbers = #tpu.dot_dimension_numbers<[1], [0], [0], [1], [0, 0, 1, 1], [], []>} : vector<12x24xbf16>, vector<24x128xbf16>, vector<12x128xf32> -> vector<12x128xf32>
    %cst_87 = arith.constant dense<0.000000e+00> : vector<12x128xf32>
    %196 = tpu.matmul %194, %174, %cst_87 {dimension_numbers = #tpu.dot_dimension_numbers<[1], [0], [0], [1], [0, 0, 1, 1], [], []>} : vector<12x24xbf16>, vector<24x128xbf16>, vector<12x128xf32> -> vector<12x128xf32>
    %197 = arith.maximumf %195, %196 : vector<12x128xf32>
    %198 = arith.truncf %197 : vector<12x128xf32> to vector<12x128xbf16>
    %199 = tpu.iota {dimensions = array<i32: 0>} : vector<128x64xi32>
    %200 = tpu.iota {dimensions = array<i32: 1>} : vector<128x64xi32>
    %c4_i32 = arith.constant 4 : i32
    %201 = vector.broadcast %c4_i32 : i32 to vector<128x64xi32>
    %202 = arith.shrsi %199, %201 : vector<128x64xi32>
    %c4_i32_88 = arith.constant 4 : i32
    %203 = vector.broadcast %c4_i32_88 : i32 to vector<128x64xi32>
    %204 = arith.shrsi %200, %203 : vector<128x64xi32>
    %c2_i32_89 = arith.constant 2 : i32
    %205 = vector.broadcast %c2_i32_89 : i32 to vector<128x64xi32>
    %206 = arith.muli %205, %204 : vector<128x64xi32>
    %207 = arith.cmpi eq, %202, %206 : vector<128x64xi32>
    %c15_i32_90 = arith.constant 15 : i32
    %208 = vector.broadcast %c15_i32_90 : i32 to vector<128x64xi32>
    %209 = arith.andi %199, %208 : vector<128x64xi32>
    %c15_i32_91 = arith.constant 15 : i32
    %210 = vector.broadcast %c15_i32_91 : i32 to vector<128x64xi32>
    %211 = arith.andi %200, %210 : vector<128x64xi32>
    %212 = arith.cmpi eq, %209, %211 : vector<128x64xi32>
    %213 = arith.andi %207, %212 : vector<128x64xi1>
    %cst_92 = arith.constant 1.000000e+00 : f32
    %cst_93 = arith.constant 0.000000e+00 : f32
    %214 = vector.broadcast %cst_92 : f32 to vector<128x64xf32>
    %215 = vector.broadcast %cst_93 : f32 to vector<128x64xf32>
    %216 = arith.select %213, %214, %215 : vector<128x64xi1>, vector<128x64xf32>
    %217 = arith.truncf %216 : vector<128x64xf32> to vector<128x64xbf16>
    %218 = tpu.iota {dimensions = array<i32: 0>} : vector<128x64xi32>
    %219 = tpu.iota {dimensions = array<i32: 1>} : vector<128x64xi32>
    %c4_i32_94 = arith.constant 4 : i32
    %220 = vector.broadcast %c4_i32_94 : i32 to vector<128x64xi32>
    %221 = arith.shrsi %218, %220 : vector<128x64xi32>
    %c4_i32_95 = arith.constant 4 : i32
    %222 = vector.broadcast %c4_i32_95 : i32 to vector<128x64xi32>
    %223 = arith.shrsi %219, %222 : vector<128x64xi32>
    %c2_i32_96 = arith.constant 2 : i32
    %224 = vector.broadcast %c2_i32_96 : i32 to vector<128x64xi32>
    %225 = arith.muli %224, %223 : vector<128x64xi32>
    %c1_i32_97 = arith.constant 1 : i32
    %226 = vector.broadcast %c1_i32_97 : i32 to vector<128x64xi32>
    %227 = arith.addi %225, %226 : vector<128x64xi32>
    %228 = arith.cmpi eq, %221, %227 : vector<128x64xi32>
    %c15_i32_98 = arith.constant 15 : i32
    %229 = vector.broadcast %c15_i32_98 : i32 to vector<128x64xi32>
    %230 = arith.andi %218, %229 : vector<128x64xi32>
    %c15_i32_99 = arith.constant 15 : i32
    %231 = vector.broadcast %c15_i32_99 : i32 to vector<128x64xi32>
    %232 = arith.andi %219, %231 : vector<128x64xi32>
    %233 = arith.cmpi eq, %230, %232 : vector<128x64xi32>
    %234 = arith.andi %228, %233 : vector<128x64xi1>
    %cst_100 = arith.constant 1.000000e+00 : f32
    %cst_101 = arith.constant 0.000000e+00 : f32
    %235 = vector.broadcast %cst_100 : f32 to vector<128x64xf32>
    %236 = vector.broadcast %cst_101 : f32 to vector<128x64xf32>
    %237 = arith.select %234, %235, %236 : vector<128x64xi1>, vector<128x64xf32>
    %238 = arith.truncf %237 : vector<128x64xf32> to vector<128x64xbf16>
    %cst_102 = arith.constant dense<0.000000e+00> : vector<12x64xf32>
    %239 = tpu.matmul %198, %217, %cst_102 {dimension_numbers = #tpu.dot_dimension_numbers<[1], [0], [0], [1], [0, 0, 1, 1], [], []>} : vector<12x128xbf16>, vector<128x64xbf16>, vector<12x64xf32> -> vector<12x64xf32>
    %cst_103 = arith.constant dense<0.000000e+00> : vector<12x64xf32>
    %240 = tpu.matmul %198, %238, %cst_103 {dimension_numbers = #tpu.dot_dimension_numbers<[1], [0], [0], [1], [0, 0, 1, 1], [], []>} : vector<12x128xbf16>, vector<128x64xbf16>, vector<12x64xf32> -> vector<12x64xf32>
    %241 = arith.maximumf %239, %240 : vector<12x64xf32>
    %242 = arith.truncf %241 : vector<12x64xf32> to vector<12x64xbf16>
    %c1_104 = arith.constant 1 : index
    %c0_105 = arith.constant 0 : index
    %c0_106 = arith.constant 0 : index
    %243 = vector.load %arg6[%c1_104, %c0_105, %c0_106] : memref<3x64x128xbf16, #tpu.memory_space<vmem>>, vector<1x64x128xbf16>
    %244 = vector.shape_cast %243 : vector<1x64x128xbf16> to vector<64x128xbf16>
    %cst_107 = arith.constant dense<0.000000e+00> : vector<12x128xf32>
    %245 = tpu.matmul %242, %244, %cst_107 {dimension_numbers = #tpu.dot_dimension_numbers<[1], [0], [0], [1], [0, 0, 1, 1], [], []>} : vector<12x64xbf16>, vector<64x128xbf16>, vector<12x128xf32> -> vector<12x128xf32>
    %246 = tpu.iota {dimensions = array<i32: 0>} : vector<12x12xi32>
    %247 = tpu.iota {dimensions = array<i32: 1>} : vector<12x12xi32>
    %c1_i32_108 = arith.constant 1 : i32
    %248 = vector.broadcast %c1_i32_108 : i32 to vector<12x12xi32>
    %249 = arith.subi %246, %248 : vector<12x12xi32>
    %250 = arith.cmpi eq, %247, %249 : vector<12x12xi32>
    %c3_i32_109 = arith.constant 3 : i32
    %251 = vector.broadcast %c3_i32_109 : i32 to vector<12x12xi32>
    %252 = arith.andi %246, %251 : vector<12x12xi32>
    %c0_i32_110 = arith.constant 0 : i32
    %253 = vector.broadcast %c0_i32_110 : i32 to vector<12x12xi32>
    %254 = arith.cmpi ne, %252, %253 : vector<12x12xi32>
    %255 = arith.andi %250, %254 : vector<12x12xi1>
    %cst_111 = arith.constant 1.000000e+00 : f32
    %cst_112 = arith.constant 0.000000e+00 : f32
    %256 = vector.broadcast %cst_111 : f32 to vector<12x12xf32>
    %257 = vector.broadcast %cst_112 : f32 to vector<12x12xf32>
    %258 = arith.select %255, %256, %257 : vector<12x12xi1>, vector<12x12xf32>
    %259 = arith.truncf %258 : vector<12x12xf32> to vector<12x12xbf16>
    %260 = tpu.iota {dimensions = array<i32: 0>} : vector<12x12xi32>
    %261 = tpu.iota {dimensions = array<i32: 1>} : vector<12x12xi32>
    %c1_i32_113 = arith.constant 1 : i32
    %262 = vector.broadcast %c1_i32_113 : i32 to vector<12x12xi32>
    %263 = arith.addi %260, %262 : vector<12x12xi32>
    %264 = arith.cmpi eq, %261, %263 : vector<12x12xi32>
    %c3_i32_114 = arith.constant 3 : i32
    %265 = vector.broadcast %c3_i32_114 : i32 to vector<12x12xi32>
    %266 = arith.andi %260, %265 : vector<12x12xi32>
    %c3_i32_115 = arith.constant 3 : i32
    %267 = vector.broadcast %c3_i32_115 : i32 to vector<12x12xi32>
    %268 = arith.cmpi ne, %266, %267 : vector<12x12xi32>
    %269 = arith.andi %264, %268 : vector<12x12xi1>
    %cst_116 = arith.constant 1.000000e+00 : f32
    %cst_117 = arith.constant 0.000000e+00 : f32
    %270 = vector.broadcast %cst_116 : f32 to vector<12x12xf32>
    %271 = vector.broadcast %cst_117 : f32 to vector<12x12xf32>
    %272 = arith.select %269, %270, %271 : vector<12x12xi1>, vector<12x12xf32>
    %273 = arith.truncf %272 : vector<12x12xf32> to vector<12x12xbf16>
    %cst_118 = arith.constant dense<0.000000e+00> : vector<12x64xf32>
    %274 = tpu.matmul %259, %242, %cst_118 {dimension_numbers = #tpu.dot_dimension_numbers<[1], [0], [0], [1], [0, 0, 1, 1], [], []>} : vector<12x12xbf16>, vector<12x64xbf16>, vector<12x64xf32> -> vector<12x64xf32>
    %275 = arith.truncf %274 : vector<12x64xf32> to vector<12x64xbf16>
    %cst_119 = arith.constant dense<0.000000e+00> : vector<12x64xf32>
    %276 = tpu.matmul %273, %242, %cst_119 {dimension_numbers = #tpu.dot_dimension_numbers<[1], [0], [0], [1], [0, 0, 1, 1], [], []>} : vector<12x12xbf16>, vector<12x64xbf16>, vector<12x64xf32> -> vector<12x64xf32>
    %277 = arith.truncf %276 : vector<12x64xf32> to vector<12x64xbf16>
    %c0_120 = arith.constant 0 : index
    %c0_121 = arith.constant 0 : index
    %c0_122 = arith.constant 0 : index
    %278 = vector.load %arg6[%c0_120, %c0_121, %c0_122] : memref<3x64x128xbf16, #tpu.memory_space<vmem>>, vector<1x64x128xbf16>
    %279 = vector.shape_cast %278 : vector<1x64x128xbf16> to vector<64x128xbf16>
    %cst_123 = arith.constant dense<0.000000e+00> : vector<12x128xf32>
    %280 = tpu.matmul %275, %279, %cst_123 {dimension_numbers = #tpu.dot_dimension_numbers<[1], [0], [0], [1], [0, 0, 1, 1], [], []>} : vector<12x64xbf16>, vector<64x128xbf16>, vector<12x128xf32> -> vector<12x128xf32>
    %281 = arith.addf %245, %280 : vector<12x128xf32>
    %c2_124 = arith.constant 2 : index
    %c0_125 = arith.constant 0 : index
    %c0_126 = arith.constant 0 : index
    %282 = vector.load %arg6[%c2_124, %c0_125, %c0_126] : memref<3x64x128xbf16, #tpu.memory_space<vmem>>, vector<1x64x128xbf16>
    %283 = vector.shape_cast %282 : vector<1x64x128xbf16> to vector<64x128xbf16>
    %cst_127 = arith.constant dense<0.000000e+00> : vector<12x128xf32>
    %284 = tpu.matmul %277, %283, %cst_127 {dimension_numbers = #tpu.dot_dimension_numbers<[1], [0], [0], [1], [0, 0, 1, 1], [], []>} : vector<12x64xbf16>, vector<64x128xbf16>, vector<12x128xf32> -> vector<12x128xf32>
    %285 = arith.addf %281, %284 : vector<12x128xf32>
    %c0_128 = arith.constant 0 : index
    %c0_129 = arith.constant 0 : index
    %286 = vector.load %arg7[%c0_128, %c0_129] : memref<1x128xf32, #tpu.memory_space<vmem>>, vector<1x128xf32>
    %287 = vector.broadcast %286 : vector<1x128xf32> to vector<12x128xf32>
    %288 = arith.addf %285, %287 : vector<12x128xf32>
    %cst_130 = arith.constant 0.000000e+00 : f32
    %289 = vector.broadcast %cst_130 : f32 to vector<12x128xf32>
    %290 = arith.maximumf %288, %289 : vector<12x128xf32>
    %c0_131 = arith.constant 0 : index
    %c0_132 = arith.constant 0 : index
    %c0_133 = arith.constant 0 : index
    %291 = vector.load %arg14[%c0_131, %c0_132, %c0_133] : memref<1x12x128xf32, #tpu.memory_space<vmem>>, vector<1x12x128xf32>
    %292 = vector.shape_cast %291 : vector<1x12x128xf32> to vector<12x128xf32>
    %293 = vector.shape_cast %290 : vector<12x128xf32> to vector<1x12x128xf32>
    tpu.vector_store %arg14[%c0_131, %c0_132, %c0_133], %293 {strides = array<i32>} : memref<1x12x128xf32, #tpu.memory_space<vmem>>, vector<1x12x128xf32>,
    %294 = arith.truncf %290 : vector<12x128xf32> to vector<12x128xbf16>
    %295 = tpu.iota {dimensions = array<i32: 0>} : vector<6x12xi32>
    %296 = tpu.iota {dimensions = array<i32: 1>} : vector<6x12xi32>
    %c2_i32_134 = arith.constant 2 : i32
    %297 = vector.broadcast %c2_i32_134 : i32 to vector<6x12xi32>
    %298 = arith.muli %297, %295 : vector<6x12xi32>
    %299 = arith.cmpi eq, %296, %298 : vector<6x12xi32>
    %cst_135 = arith.constant 1.000000e+00 : f32
    %cst_136 = arith.constant 0.000000e+00 : f32
    %300 = vector.broadcast %cst_135 : f32 to vector<6x12xf32>
    %301 = vector.broadcast %cst_136 : f32 to vector<6x12xf32>
    %302 = arith.select %299, %300, %301 : vector<6x12xi1>, vector<6x12xf32>
    %303 = arith.truncf %302 : vector<6x12xf32> to vector<6x12xbf16>
    %304 = tpu.iota {dimensions = array<i32: 0>} : vector<6x12xi32>
    %305 = tpu.iota {dimensions = array<i32: 1>} : vector<6x12xi32>
    %c2_i32_137 = arith.constant 2 : i32
    %306 = vector.broadcast %c2_i32_137 : i32 to vector<6x12xi32>
    %307 = arith.muli %306, %304 : vector<6x12xi32>
    %c1_i32_138 = arith.constant 1 : i32
    %308 = vector.broadcast %c1_i32_138 : i32 to vector<6x12xi32>
    %309 = arith.addi %307, %308 : vector<6x12xi32>
    %310 = arith.cmpi eq, %305, %309 : vector<6x12xi32>
    %cst_139 = arith.constant 1.000000e+00 : f32
    %cst_140 = arith.constant 0.000000e+00 : f32
    %311 = vector.broadcast %cst_139 : f32 to vector<6x12xf32>
    %312 = vector.broadcast %cst_140 : f32 to vector<6x12xf32>
    %313 = arith.select %310, %311, %312 : vector<6x12xi1>, vector<6x12xf32>
    %314 = arith.truncf %313 : vector<6x12xf32> to vector<6x12xbf16>
    %cst_141 = arith.constant dense<0.000000e+00> : vector<6x128xf32>
    %315 = tpu.matmul %303, %294, %cst_141 {dimension_numbers = #tpu.dot_dimension_numbers<[1], [0], [0], [1], [0, 0, 1, 1], [], []>} : vector<6x12xbf16>, vector<12x128xbf16>, vector<6x128xf32> -> vector<6x128xf32>
    %cst_142 = arith.constant dense<0.000000e+00> : vector<6x128xf32>
    %316 = tpu.matmul %314, %294, %cst_142 {dimension_numbers = #tpu.dot_dimension_numbers<[1], [0], [0], [1], [0, 0, 1, 1], [], []>} : vector<6x12xbf16>, vector<12x128xbf16>, vector<6x128xf32> -> vector<6x128xf32>
    %317 = arith.maximumf %315, %316 : vector<6x128xf32>
    %318 = arith.truncf %317 : vector<6x128xf32> to vector<6x128xbf16>
    %319 = tpu.iota {dimensions = array<i32: 0>} : vector<128x64xi32>
    %320 = tpu.iota {dimensions = array<i32: 1>} : vector<128x64xi32>
    %c5_i32 = arith.constant 5 : i32
    %321 = vector.broadcast %c5_i32 : i32 to vector<128x64xi32>
    %322 = arith.shrsi %319, %321 : vector<128x64xi32>
    %c5_i32_143 = arith.constant 5 : i32
    %323 = vector.broadcast %c5_i32_143 : i32 to vector<128x64xi32>
    %324 = arith.shrsi %320, %323 : vector<128x64xi32>
    %c2_i32_144 = arith.constant 2 : i32
    %325 = vector.broadcast %c2_i32_144 : i32 to vector<128x64xi32>
    %326 = arith.muli %325, %324 : vector<128x64xi32>
    %327 = arith.cmpi eq, %322, %326 : vector<128x64xi32>
    %c31_i32 = arith.constant 31 : i32
    %328 = vector.broadcast %c31_i32 : i32 to vector<128x64xi32>
    %329 = arith.andi %319, %328 : vector<128x64xi32>
    %c31_i32_145 = arith.constant 31 : i32
    %330 = vector.broadcast %c31_i32_145 : i32 to vector<128x64xi32>
    %331 = arith.andi %320, %330 : vector<128x64xi32>
    %332 = arith.cmpi eq, %329, %331 : vector<128x64xi32>
    %333 = arith.andi %327, %332 : vector<128x64xi1>
    %cst_146 = arith.constant 1.000000e+00 : f32
    %cst_147 = arith.constant 0.000000e+00 : f32
    %334 = vector.broadcast %cst_146 : f32 to vector<128x64xf32>
    %335 = vector.broadcast %cst_147 : f32 to vector<128x64xf32>
    %336 = arith.select %333, %334, %335 : vector<128x64xi1>, vector<128x64xf32>
    %337 = arith.truncf %336 : vector<128x64xf32> to vector<128x64xbf16>
    %338 = tpu.iota {dimensions = array<i32: 0>} : vector<128x64xi32>
    %339 = tpu.iota {dimensions = array<i32: 1>} : vector<128x64xi32>
    %c5_i32_148 = arith.constant 5 : i32
    %340 = vector.broadcast %c5_i32_148 : i32 to vector<128x64xi32>
    %341 = arith.shrsi %338, %340 : vector<128x64xi32>
    %c5_i32_149 = arith.constant 5 : i32
    %342 = vector.broadcast %c5_i32_149 : i32 to vector<128x64xi32>
    %343 = arith.shrsi %339, %342 : vector<128x64xi32>
    %c2_i32_150 = arith.constant 2 : i32
    %344 = vector.broadcast %c2_i32_150 : i32 to vector<128x64xi32>
    %345 = arith.muli %344, %343 : vector<128x64xi32>
    %c1_i32_151 = arith.constant 1 : i32
    %346 = vector.broadcast %c1_i32_151 : i32 to vector<128x64xi32>
    %347 = arith.addi %345, %346 : vector<128x64xi32>
    %348 = arith.cmpi eq, %341, %347 : vector<128x64xi32>
    %c31_i32_152 = arith.constant 31 : i32
    %349 = vector.broadcast %c31_i32_152 : i32 to vector<128x64xi32>
    %350 = arith.andi %338, %349 : vector<128x64xi32>
    %c31_i32_153 = arith.constant 31 : i32
    %351 = vector.broadcast %c31_i32_153 : i32 to vector<128x64xi32>
    %352 = arith.andi %339, %351 : vector<128x64xi32>
    %353 = arith.cmpi eq, %350, %352 : vector<128x64xi32>
    %354 = arith.andi %348, %353 : vector<128x64xi1>
    %cst_154 = arith.constant 1.000000e+00 : f32
    %cst_155 = arith.constant 0.000000e+00 : f32
    %355 = vector.broadcast %cst_154 : f32 to vector<128x64xf32>
    %356 = vector.broadcast %cst_155 : f32 to vector<128x64xf32>
    %357 = arith.select %354, %355, %356 : vector<128x64xi1>, vector<128x64xf32>
    %358 = arith.truncf %357 : vector<128x64xf32> to vector<128x64xbf16>
    %cst_156 = arith.constant dense<0.000000e+00> : vector<6x64xf32>
    %359 = tpu.matmul %318, %337, %cst_156 {dimension_numbers = #tpu.dot_dimension_numbers<[1], [0], [0], [1], [0, 0, 1, 1], [], []>} : vector<6x128xbf16>, vector<128x64xbf16>, vector<6x64xf32> -> vector<6x64xf32>
    %cst_157 = arith.constant dense<0.000000e+00> : vector<6x64xf32>
    %360 = tpu.matmul %318, %358, %cst_157 {dimension_numbers = #tpu.dot_dimension_numbers<[1], [0], [0], [1], [0, 0, 1, 1], [], []>} : vector<6x128xbf16>, vector<128x64xbf16>, vector<6x64xf32> -> vector<6x64xf32>
    %361 = arith.maximumf %359, %360 : vector<6x64xf32>
    %362 = arith.truncf %361 : vector<6x64xf32> to vector<6x64xbf16>
    %c1_158 = arith.constant 1 : index
    %c0_159 = arith.constant 0 : index
    %c0_160 = arith.constant 0 : index
    %363 = vector.load %arg8[%c1_158, %c0_159, %c0_160] : memref<3x64x64xbf16, #tpu.memory_space<vmem>>, vector<1x64x64xbf16>
    %364 = vector.shape_cast %363 : vector<1x64x64xbf16> to vector<64x64xbf16>
    %cst_161 = arith.constant dense<0.000000e+00> : vector<6x64xf32>
    %365 = tpu.matmul %362, %364, %cst_161 {dimension_numbers = #tpu.dot_dimension_numbers<[1], [0], [0], [1], [0, 0, 1, 1], [], []>} : vector<6x64xbf16>, vector<64x64xbf16>, vector<6x64xf32> -> vector<6x64xf32>
    %366 = tpu.iota {dimensions = array<i32: 0>} : vector<6x6xi32>
    %367 = tpu.iota {dimensions = array<i32: 1>} : vector<6x6xi32>
    %c1_i32_162 = arith.constant 1 : i32
    %368 = vector.broadcast %c1_i32_162 : i32 to vector<6x6xi32>
    %369 = arith.subi %366, %368 : vector<6x6xi32>
    %370 = arith.cmpi eq, %367, %369 : vector<6x6xi32>
    %c1_i32_163 = arith.constant 1 : i32
    %371 = vector.broadcast %c1_i32_163 : i32 to vector<6x6xi32>
    %372 = arith.andi %366, %371 : vector<6x6xi32>
    %c0_i32_164 = arith.constant 0 : i32
    %373 = vector.broadcast %c0_i32_164 : i32 to vector<6x6xi32>
    %374 = arith.cmpi ne, %372, %373 : vector<6x6xi32>
    %375 = arith.andi %370, %374 : vector<6x6xi1>
    %cst_165 = arith.constant 1.000000e+00 : f32
    %cst_166 = arith.constant 0.000000e+00 : f32
    %376 = vector.broadcast %cst_165 : f32 to vector<6x6xf32>
    %377 = vector.broadcast %cst_166 : f32 to vector<6x6xf32>
    %378 = arith.select %375, %376, %377 : vector<6x6xi1>, vector<6x6xf32>
    %379 = arith.truncf %378 : vector<6x6xf32> to vector<6x6xbf16>
    %380 = tpu.iota {dimensions = array<i32: 0>} : vector<6x6xi32>
    %381 = tpu.iota {dimensions = array<i32: 1>} : vector<6x6xi32>
    %c1_i32_167 = arith.constant 1 : i32
    %382 = vector.broadcast %c1_i32_167 : i32 to vector<6x6xi32>
    %383 = arith.addi %380, %382 : vector<6x6xi32>
    %384 = arith.cmpi eq, %381, %383 : vector<6x6xi32>
    %c1_i32_168 = arith.constant 1 : i32
    %385 = vector.broadcast %c1_i32_168 : i32 to vector<6x6xi32>
    %386 = arith.andi %380, %385 : vector<6x6xi32>
    %c1_i32_169 = arith.constant 1 : i32
    %387 = vector.broadcast %c1_i32_169 : i32 to vector<6x6xi32>
    %388 = arith.cmpi ne, %386, %387 : vector<6x6xi32>
    %389 = arith.andi %384, %388 : vector<6x6xi1>
    %cst_170 = arith.constant 1.000000e+00 : f32
    %cst_171 = arith.constant 0.000000e+00 : f32
    %390 = vector.broadcast %cst_170 : f32 to vector<6x6xf32>
    %391 = vector.broadcast %cst_171 : f32 to vector<6x6xf32>
    %392 = arith.select %389, %390, %391 : vector<6x6xi1>, vector<6x6xf32>
    %393 = arith.truncf %392 : vector<6x6xf32> to vector<6x6xbf16>
    %cst_172 = arith.constant dense<0.000000e+00> : vector<6x64xf32>
    %394 = tpu.matmul %379, %362, %cst_172 {dimension_numbers = #tpu.dot_dimension_numbers<[1], [0], [0], [1], [0, 0, 1, 1], [], []>} : vector<6x6xbf16>, vector<6x64xbf16>, vector<6x64xf32> -> vector<6x64xf32>
    %395 = arith.truncf %394 : vector<6x64xf32> to vector<6x64xbf16>
    %cst_173 = arith.constant dense<0.000000e+00> : vector<6x64xf32>
    %396 = tpu.matmul %393, %362, %cst_173 {dimension_numbers = #tpu.dot_dimension_numbers<[1], [0], [0], [1], [0, 0, 1, 1], [], []>} : vector<6x6xbf16>, vector<6x64xbf16>, vector<6x64xf32> -> vector<6x64xf32>
    %397 = arith.truncf %396 : vector<6x64xf32> to vector<6x64xbf16>
    %c0_174 = arith.constant 0 : index
    %c0_175 = arith.constant 0 : index
    %c0_176 = arith.constant 0 : index
    %398 = vector.load %arg8[%c0_174, %c0_175, %c0_176] : memref<3x64x64xbf16, #tpu.memory_space<vmem>>, vector<1x64x64xbf16>
    %399 = vector.shape_cast %398 : vector<1x64x64xbf16> to vector<64x64xbf16>
    %cst_177 = arith.constant dense<0.000000e+00> : vector<6x64xf32>
    %400 = tpu.matmul %395, %399, %cst_177 {dimension_numbers = #tpu.dot_dimension_numbers<[1], [0], [0], [1], [0, 0, 1, 1], [], []>} : vector<6x64xbf16>, vector<64x64xbf16>, vector<6x64xf32> -> vector<6x64xf32>
    %401 = arith.addf %365, %400 : vector<6x64xf32>
    %c2_178 = arith.constant 2 : index
    %c0_179 = arith.constant 0 : index
    %c0_180 = arith.constant 0 : index
    %402 = vector.load %arg8[%c2_178, %c0_179, %c0_180] : memref<3x64x64xbf16, #tpu.memory_space<vmem>>, vector<1x64x64xbf16>
    %403 = vector.shape_cast %402 : vector<1x64x64xbf16> to vector<64x64xbf16>
    %cst_181 = arith.constant dense<0.000000e+00> : vector<6x64xf32>
    %404 = tpu.matmul %397, %403, %cst_181 {dimension_numbers = #tpu.dot_dimension_numbers<[1], [0], [0], [1], [0, 0, 1, 1], [], []>} : vector<6x64xbf16>, vector<64x64xbf16>, vector<6x64xf32> -> vector<6x64xf32>
    %405 = arith.addf %401, %404 : vector<6x64xf32>
    %c0_182 = arith.constant 0 : index
    %c0_183 = arith.constant 0 : index
    %406 = vector.load %arg9[%c0_182, %c0_183] : memref<1x64xf32, #tpu.memory_space<vmem>>, vector<1x64xf32>
    %407 = vector.broadcast %406 : vector<1x64xf32> to vector<6x64xf32>
    %408 = arith.addf %405, %407 : vector<6x64xf32>
    %cst_184 = arith.constant 0.000000e+00 : f32
    %409 = vector.broadcast %cst_184 : f32 to vector<6x64xf32>
    %410 = arith.maximumf %408, %409 : vector<6x64xf32>
    %c0_185 = arith.constant 0 : index
    %c0_186 = arith.constant 0 : index
    %c0_187 = arith.constant 0 : index
    %411 = vector.load %arg15[%c0_185, %c0_186, %c0_187] : memref<1x6x64xf32, #tpu.memory_space<vmem>>, vector<1x6x64xf32>
    %412 = vector.shape_cast %411 : vector<1x6x64xf32> to vector<6x64xf32>
    %413 = vector.shape_cast %410 : vector<6x64xf32> to vector<1x6x64xf32>
    tpu.vector_store %arg15[%c0_185, %c0_186, %c0_187], %413 {strides = array<i32>} : memref<1x6x64xf32, #tpu.memory_space<vmem>>, vector<1x6x64xf32>,
    %414 = arith.truncf %410 : vector<6x64xf32> to vector<6x64xbf16>
    %415 = tpu.iota {dimensions = array<i32: 0>} : vector<3x6xi32>
    %416 = tpu.iota {dimensions = array<i32: 1>} : vector<3x6xi32>
    %c2_i32_188 = arith.constant 2 : i32
    %417 = vector.broadcast %c2_i32_188 : i32 to vector<3x6xi32>
    %418 = arith.muli %417, %415 : vector<3x6xi32>
    %419 = arith.cmpi eq, %416, %418 : vector<3x6xi32>
    %cst_189 = arith.constant 1.000000e+00 : f32
    %cst_190 = arith.constant 0.000000e+00 : f32
    %420 = vector.broadcast %cst_189 : f32 to vector<3x6xf32>
    %421 = vector.broadcast %cst_190 : f32 to vector<3x6xf32>
    %422 = arith.select %419, %420, %421 : vector<3x6xi1>, vector<3x6xf32>
    %423 = arith.truncf %422 : vector<3x6xf32> to vector<3x6xbf16>
    %424 = tpu.iota {dimensions = array<i32: 0>} : vector<3x6xi32>
    %425 = tpu.iota {dimensions = array<i32: 1>} : vector<3x6xi32>
    %c2_i32_191 = arith.constant 2 : i32
    %426 = vector.broadcast %c2_i32_191 : i32 to vector<3x6xi32>
    %427 = arith.muli %426, %424 : vector<3x6xi32>
    %c1_i32_192 = arith.constant 1 : i32
    %428 = vector.broadcast %c1_i32_192 : i32 to vector<3x6xi32>
    %429 = arith.addi %427, %428 : vector<3x6xi32>
    %430 = arith.cmpi eq, %425, %429 : vector<3x6xi32>
    %cst_193 = arith.constant 1.000000e+00 : f32
    %cst_194 = arith.constant 0.000000e+00 : f32
    %431 = vector.broadcast %cst_193 : f32 to vector<3x6xf32>
    %432 = vector.broadcast %cst_194 : f32 to vector<3x6xf32>
    %433 = arith.select %430, %431, %432 : vector<3x6xi1>, vector<3x6xf32>
    %434 = arith.truncf %433 : vector<3x6xf32> to vector<3x6xbf16>
    %cst_195 = arith.constant dense<0.000000e+00> : vector<3x64xf32>
    %435 = tpu.matmul %423, %414, %cst_195 {dimension_numbers = #tpu.dot_dimension_numbers<[1], [0], [0], [1], [0, 0, 1, 1], [], []>} : vector<3x6xbf16>, vector<6x64xbf16>, vector<3x64xf32> -> vector<3x64xf32>
    %cst_196 = arith.constant dense<0.000000e+00> : vector<3x64xf32>
    %436 = tpu.matmul %434, %414, %cst_196 {dimension_numbers = #tpu.dot_dimension_numbers<[1], [0], [0], [1], [0, 0, 1, 1], [], []>} : vector<3x6xbf16>, vector<6x64xbf16>, vector<3x64xf32> -> vector<3x64xf32>
    %437 = arith.maximumf %435, %436 : vector<3x64xf32>
    %438 = arith.truncf %437 : vector<3x64xf32> to vector<3x64xbf16>
    %439 = tpu.iota {dimensions = array<i32: 0>} : vector<64x32xi32>
    %440 = tpu.iota {dimensions = array<i32: 1>} : vector<64x32xi32>
    %c5_i32_197 = arith.constant 5 : i32
    %441 = vector.broadcast %c5_i32_197 : i32 to vector<64x32xi32>
    %442 = arith.shrsi %439, %441 : vector<64x32xi32>
    %c5_i32_198 = arith.constant 5 : i32
    %443 = vector.broadcast %c5_i32_198 : i32 to vector<64x32xi32>
    %444 = arith.shrsi %440, %443 : vector<64x32xi32>
    %c2_i32_199 = arith.constant 2 : i32
    %445 = vector.broadcast %c2_i32_199 : i32 to vector<64x32xi32>
    %446 = arith.muli %445, %444 : vector<64x32xi32>
    %447 = arith.cmpi eq, %442, %446 : vector<64x32xi32>
    %c31_i32_200 = arith.constant 31 : i32
    %448 = vector.broadcast %c31_i32_200 : i32 to vector<64x32xi32>
    %449 = arith.andi %439, %448 : vector<64x32xi32>
    %c31_i32_201 = arith.constant 31 : i32
    %450 = vector.broadcast %c31_i32_201 : i32 to vector<64x32xi32>
    %451 = arith.andi %440, %450 : vector<64x32xi32>
    %452 = arith.cmpi eq, %449, %451 : vector<64x32xi32>
    %453 = arith.andi %447, %452 : vector<64x32xi1>
    %cst_202 = arith.constant 1.000000e+00 : f32
    %cst_203 = arith.constant 0.000000e+00 : f32
    %454 = vector.broadcast %cst_202 : f32 to vector<64x32xf32>
    %455 = vector.broadcast %cst_203 : f32 to vector<64x32xf32>
    %456 = arith.select %453, %454, %455 : vector<64x32xi1>, vector<64x32xf32>
    %457 = arith.truncf %456 : vector<64x32xf32> to vector<64x32xbf16>
    %458 = tpu.iota {dimensions = array<i32: 0>} : vector<64x32xi32>
    %459 = tpu.iota {dimensions = array<i32: 1>} : vector<64x32xi32>
    %c5_i32_204 = arith.constant 5 : i32
    %460 = vector.broadcast %c5_i32_204 : i32 to vector<64x32xi32>
    %461 = arith.shrsi %458, %460 : vector<64x32xi32>
    %c5_i32_205 = arith.constant 5 : i32
    %462 = vector.broadcast %c5_i32_205 : i32 to vector<64x32xi32>
    %463 = arith.shrsi %459, %462 : vector<64x32xi32>
    %c2_i32_206 = arith.constant 2 : i32
    %464 = vector.broadcast %c2_i32_206 : i32 to vector<64x32xi32>
    %465 = arith.muli %464, %463 : vector<64x32xi32>
    %c1_i32_207 = arith.constant 1 : i32
    %466 = vector.broadcast %c1_i32_207 : i32 to vector<64x32xi32>
    %467 = arith.addi %465, %466 : vector<64x32xi32>
    %468 = arith.cmpi eq, %461, %467 : vector<64x32xi32>
    %c31_i32_208 = arith.constant 31 : i32
    %469 = vector.broadcast %c31_i32_208 : i32 to vector<64x32xi32>
    %470 = arith.andi %458, %469 : vector<64x32xi32>
    %c31_i32_209 = arith.constant 31 : i32
    %471 = vector.broadcast %c31_i32_209 : i32 to vector<64x32xi32>
    %472 = arith.andi %459, %471 : vector<64x32xi32>
    %473 = arith.cmpi eq, %470, %472 : vector<64x32xi32>
    %474 = arith.andi %468, %473 : vector<64x32xi1>
    %cst_210 = arith.constant 1.000000e+00 : f32
    %cst_211 = arith.constant 0.000000e+00 : f32
    %475 = vector.broadcast %cst_210 : f32 to vector<64x32xf32>
    %476 = vector.broadcast %cst_211 : f32 to vector<64x32xf32>
    %477 = arith.select %474, %475, %476 : vector<64x32xi1>, vector<64x32xf32>
    %478 = arith.truncf %477 : vector<64x32xf32> to vector<64x32xbf16>
    %cst_212 = arith.constant dense<0.000000e+00> : vector<3x32xf32>
    %479 = tpu.matmul %438, %457, %cst_212 {dimension_numbers = #tpu.dot_dimension_numbers<[1], [0], [0], [1], [0, 0, 1, 1], [], []>} : vector<3x64xbf16>, vector<64x32xbf16>, vector<3x32xf32> -> vector<3x32xf32>
    %cst_213 = arith.constant dense<0.000000e+00> : vector<3x32xf32>
    %480 = tpu.matmul %438, %478, %cst_213 {dimension_numbers = #tpu.dot_dimension_numbers<[1], [0], [0], [1], [0, 0, 1, 1], [], []>} : vector<3x64xbf16>, vector<64x32xbf16>, vector<3x32xf32> -> vector<3x32xf32>
    %481 = arith.maximumf %479, %480 : vector<3x32xf32>
    %482 = arith.truncf %481 : vector<3x32xf32> to vector<3x32xbf16>
    %c1_214 = arith.constant 1 : index
    %c0_215 = arith.constant 0 : index
    %c0_216 = arith.constant 0 : index
    %483 = vector.load %arg10[%c1_214, %c0_215, %c0_216] : memref<3x32x32xbf16, #tpu.memory_space<vmem>>, vector<1x32x32xbf16>
    %484 = vector.shape_cast %483 : vector<1x32x32xbf16> to vector<32x32xbf16>
    %cst_217 = arith.constant dense<0.000000e+00> : vector<3x32xf32>
    %485 = tpu.matmul %482, %484, %cst_217 {dimension_numbers = #tpu.dot_dimension_numbers<[1], [0], [0], [1], [0, 0, 1, 1], [], []>} : vector<3x32xbf16>, vector<32x32xbf16>, vector<3x32xf32> -> vector<3x32xf32>
    %c0_218 = arith.constant 0 : index
    %c0_219 = arith.constant 0 : index
    %486 = vector.load %arg11[%c0_218, %c0_219] : memref<1x32xf32, #tpu.memory_space<vmem>>, vector<1x32xf32>
    %487 = vector.broadcast %486 : vector<1x32xf32> to vector<3x32xf32>
    %488 = arith.addf %485, %487 : vector<3x32xf32>
    %cst_220 = arith.constant 0.000000e+00 : f32
    %489 = vector.broadcast %cst_220 : f32 to vector<3x32xf32>
    %490 = arith.maximumf %488, %489 : vector<3x32xf32>
    %c0_221 = arith.constant 0 : index
    %c0_222 = arith.constant 0 : index
    %c0_223 = arith.constant 0 : index
    %491 = vector.load %arg16[%c0_221, %c0_222, %c0_223] : memref<1x3x32xf32, #tpu.memory_space<vmem>>, vector<1x3x32xf32>
    %492 = vector.shape_cast %491 : vector<1x3x32xf32> to vector<3x32xf32>
    %493 = vector.shape_cast %490 : vector<3x32xf32> to vector<1x3x32xf32>
    tpu.vector_store %arg16[%c0_221, %c0_222, %c0_223], %493 {strides = array<i32>} : memref<1x3x32xf32, #tpu.memory_space<vmem>>, vector<1x3x32xf32>,
    return
  }
  func.func @transform_0(%arg0: i32) -> (i32, i32, i32) {
    %c0_i32 = arith.constant 0 : i32
    %c0_i32_0 = arith.constant 0 : i32
    %c0_i32_1 = arith.constant 0 : i32
    return %arg0, %c0_i32, %c0_i32_0 : i32, i32, i32
  }
  func.func @transform_1(%arg0: i32) -> (i32, i32, i32) {
    %c0_i32 = arith.constant 0 : i32
    %c0_i32_0 = arith.constant 0 : i32
    %c0_i32_1 = arith.constant 0 : i32
    %c0_i32_2 = arith.constant 0 : i32
    return %c0_i32, %c0_i32_0, %c0_i32_1 : i32, i32, i32
  }
  func.func @transform_2(%arg0: i32) -> (i32, i32) {
    %c0_i32 = arith.constant 0 : i32
    %c0_i32_0 = arith.constant 0 : i32
    %c0_i32_1 = arith.constant 0 : i32
    return %c0_i32, %c0_i32_0 : i32, i32
  }
  func.func @transform_3(%arg0: i32) -> (i32, i32, i32) {
    %c0_i32 = arith.constant 0 : i32
    %c0_i32_0 = arith.constant 0 : i32
    %c0_i32_1 = arith.constant 0 : i32
    %c0_i32_2 = arith.constant 0 : i32
    return %c0_i32, %c0_i32_0, %c0_i32_1 : i32, i32, i32
  }
  func.func @transform_4(%arg0: i32) -> (i32, i32) {
    %c0_i32 = arith.constant 0 : i32
    %c0_i32_0 = arith.constant 0 : i32
    %c0_i32_1 = arith.constant 0 : i32
    return %c0_i32, %c0_i32_0 : i32, i32
  }
  func.func @transform_5(%arg0: i32) -> (i32, i32, i32) {
    %c0_i32 = arith.constant 0 : i32
    %c0_i32_0 = arith.constant 0 : i32
    %c0_i32_1 = arith.constant 0 : i32
    %c0_i32_2 = arith.constant 0 : i32
    return %c0_i32, %c0_i32_0, %c0_i32_1 : i32, i32, i32
  }
  func.func @transform_6(%arg0: i32) -> (i32, i32) {
    %c0_i32 = arith.constant 0 : i32
    %c0_i32_0 = arith.constant 0 : i32
    %c0_i32_1 = arith.constant 0 : i32
    return %c0_i32, %c0_i32_0 : i32, i32
  }
  func.func @transform_7(%arg0: i32) -> (i32, i32, i32) {
    %c0_i32 = arith.constant 0 : i32
    %c0_i32_0 = arith.constant 0 : i32
    %c0_i32_1 = arith.constant 0 : i32
    %c0_i32_2 = arith.constant 0 : i32
    return %c0_i32, %c0_i32_0, %c0_i32_1 : i32, i32, i32
  }
  func.func @transform_8(%arg0: i32) -> (i32, i32) {
    %c0_i32 = arith.constant 0 : i32
    %c0_i32_0 = arith.constant 0 : i32
    %c0_i32_1 = arith.constant 0 : i32
    return %c0_i32, %c0_i32_0 : i32, i32
  }
  func.func @transform_9(%arg0: i32) -> (i32, i32, i32) {
    %c0_i32 = arith.constant 0 : i32
    %c0_i32_0 = arith.constant 0 : i32
    %c0_i32_1 = arith.constant 0 : i32
    %c0_i32_2 = arith.constant 0 : i32
    return %c0_i32, %c0_i32_0, %c0_i32_1 : i32, i32, i32
  }
  func.func @transform_10(%arg0: i32) -> (i32, i32) {
    %c0_i32 = arith.constant 0 : i32
    %c0_i32_0 = arith.constant 0 : i32
    %c0_i32_1 = arith.constant 0 : i32
    return %c0_i32, %c0_i32_0 : i32, i32
  }
  func.func @transform_11(%arg0: i32) -> (i32, i32, i32) {
    %c0_i32 = arith.constant 0 : i32
    %c0_i32_0 = arith.constant 0 : i32
    %c0_i32_1 = arith.constant 0 : i32
    return %arg0, %c0_i32, %c0_i32_0 : i32, i32, i32
  }
  func.func @transform_12(%arg0: i32) -> (i32, i32, i32) {
    %c0_i32 = arith.constant 0 : i32
    %c0_i32_0 = arith.constant 0 : i32
    %c0_i32_1 = arith.constant 0 : i32
    return %arg0, %c0_i32, %c0_i32_0 : i32, i32, i32
  }
  func.func @transform_13(%arg0: i32) -> (i32, i32, i32) {
    %c0_i32 = arith.constant 0 : i32
    %c0_i32_0 = arith.constant 0 : i32
    %c0_i32_1 = arith.constant 0 : i32
    return %arg0, %c0_i32, %c0_i32_0 : i32, i32, i32
  }
  func.func @transform_14(%arg0: i32) -> (i32, i32, i32) {
    %c0_i32 = arith.constant 0 : i32
    %c0_i32_0 = arith.constant 0 : i32
    %c0_i32_1 = arith.constant 0 : i32
    return %arg0, %c0_i32, %c0_i32_0 : i32, i32, i32
  }
  func.func @transform_15(%arg0: i32) -> (i32, i32, i32) {
    %c0_i32 = arith.constant 0 : i32
    %c0_i32_0 = arith.constant 0 : i32
    %c0_i32_1 = arith.constant 0 : i32
    return %arg0, %c0_i32, %c0_i32_0 : i32, i32, i32
  }
}

</mosaic_0001>

<llo_original>
// kernel: tile.24
$region0: #{tile.24}
  #allocation0 [shape = 's32[1]{0}', space=sflag, size = 0x4, scoped, tag = 'scoped memory for tile.24']
  %s0 = inlined_call_operand.vmem [shape: f32[8], index: 0, kind: input, shape index: {}]
  %s1 = inlined_call_operand.vmem [shape: f32[16,8], index: 1, kind: output, shape index: {}]
  // Predicated region
  $region2: #{tile.24} parent=0 // pred_check
    _
  $region3: #{tile.24} parent=0 // pred_check_branch
    %3 = sbr.rel (0) target = $region5
  $region4: #{tile.24} parent=0 // pred_region
    _
  $region5: #{tile.24} parent=0 // pred_fallthru
    _
  %v4 = vld [vmem:[%s0] ss:$0 sm:$0xff]
  %5 = vst [vmem:[%s1] sm:$0xff] %v4
  %s6 = scalar_lea.vmem %s1, 8
  %7 = vst [vmem:[%s6] sm:$0xff] %v4

// kernel: tile.25
$region0: #{tile.25}
  %s0 = inlined_call_operand.vmem [shape: f32[16,8], index: 0, kind: input, shape index: {}]
  %s1 = inlined_call_operand.vmem [shape: f32[1,128], index: 1, kind: output, shape index: {}]
  $region1: #{tile.25} parent=0
    #allocation0 [shape = 'u8[4096]{0}', space=vmem, size = 0x1000, scoped, tag = 'scoped mem for output reshape']
    %v2 = vld [vmem:[%s0] sm:$0x1]
    %vm3 = vcmask 64512
    %4 = vst.msk [vmem:[#allocation0] sm:$0x1] %vm3, %v2
    %s5 = scalar_lea.vmem %s0, 15
    %v6 = vld [vmem:[%s5] sm:$0x1]
    %7 = vrot.lane.b32.xlu0 %v6, 120
    %v8 = vpop.permute.xlu0 %7
    %vm9 = vcmask 1048512
    %10 = vst.msk [vmem:[#allocation0] sm:$0x1] %vm9, %v8
    %s11 = scalar_lea.vmem %s0, 14
    %v12 = vld [vmem:[%s11] sm:$0x1]
    %13 = vrot.lane.b32.xlu0 %v12, 112
    %v14 = vpop.permute.xlu0 %13
    %vm15 = vcmask 982912
    %16 = vst.msk [vmem:[#allocation0] sm:$0x1] %vm15, %v14
    %s17 = scalar_lea.vmem %s0, 13
    %v18 = vld [vmem:[%s17] sm:$0x1]
    %19 = vrot.lane.b32.xlu0 %v18, 104
    %v20 = vpop.permute.xlu0 %19
    %vm21 = vcmask 917312
    %22 = vst.msk [vmem:[#allocation0] sm:$0x1] %vm21, %v20
    %s23 = scalar_lea.vmem %s0, 12
    %v24 = vld [vmem:[%s23] sm:$0x1]
    %25 = vrot.lane.b32.xlu0 %v24, 96
    %v26 = vpop.permute.xlu0 %25
    %vm27 = vcmask 851712
    %28 = vst.msk [vmem:[#allocation0] sm:$0x1] %vm27, %v26
    %s29 = scalar_lea.vmem %s0, 11
    %v30 = vld [vmem:[%s29] sm:$0x1]
    %31 = vrot.lane.b32.xlu0 %v30, 88
    %v32 = vpop.permute.xlu0 %31
    %vm33 = vcmask 786112
    %34 = vst.msk [vmem:[#allocation0] sm:$0x1] %vm33, %v32
    %s35 = scalar_lea.vmem %s0, 10
    %v36 = vld [vmem:[%s35] sm:$0x1]
    %37 = vrot.lane.b32.xlu0 %v36, 80
    %v38 = vpop.permute.xlu0 %37
    %vm39 = vcmask 720512
    %40 = vst.msk [vmem:[#allocation0] sm:$0x1] %vm39, %v38
    %s41 = scalar_lea.vmem %s0, 9
    %v42 = vld [vmem:[%s41] sm:$0x1]
    %43 = vrot.lane.b32.xlu0 %v42, 72
    %v44 = vpop.permute.xlu0 %43
    %vm45 = vcmask 654912
    %46 = vst.msk [vmem:[#allocation0] sm:$0x1] %vm45, %v44
    %s47 = scalar_lea.vmem %s0, 8
    %v48 = vld [vmem:[%s47] sm:$0x1]
    %49 = vrot.lane.b32.xlu0 %v48, 64
    %v50 = vpop.permute.xlu0 %49
    %vm51 = vcmask 589312
    %52 = vst.msk [vmem:[#allocation0] sm:$0x1] %vm51, %v50
    %s53 = scalar_lea.vmem %s0, 7
    %v54 = vld [vmem:[%s53] sm:$0x1]
    %55 = vrot.lane.b32.xlu0 %v54, 56
    %v56 = vpop.permute.xlu0 %55
    %vm57 = vcmask 523712
    %58 = vst.msk [vmem:[#allocation0] sm:$0x1] %vm57, %v56
    %s59 = scalar_lea.vmem %s0, 6
    %v60 = vld [vmem:[%s59] sm:$0x1]
    %61 = vrot.lane.b32.xlu0 %v60, 48
    %v62 = vpop.permute.xlu0 %61
    %vm63 = vcmask 458112
    %64 = vst.msk [vmem:[#allocation0] sm:$0x1] %vm63, %v62
    %s65 = scalar_lea.vmem %s0, 5
    %v66 = vld [vmem:[%s65] sm:$0x1]
    %67 = vrot.lane.b32.xlu0 %v66, 40
    %v68 = vpop.permute.xlu0 %67
    %vm69 = vcmask 392512
    %70 = vst.msk [vmem:[#allocation0] sm:$0x1] %vm69, %v68
    %s71 = scalar_lea.vmem %s0, 4
    %v72 = vld [vmem:[%s71] sm:$0x1]
    %73 = vrot.lane.b32.xlu0 %v72, 32
    %v74 = vpop.permute.xlu0 %73
    %vm75 = vcmask 326912
    %76 = vst.msk [vmem:[#allocation0] sm:$0x1] %vm75, %v74
    %s77 = scalar_lea.vmem %s0, 3
    %v78 = vld [vmem:[%s77] sm:$0x1]
    %79 = vrot.lane.b32.xlu0 %v78, 24
    %v80 = vpop.permute.xlu0 %79
    %vm81 = vcmask 261312
    %82 = vst.msk [vmem:[#allocation0] sm:$0x1] %vm81, %v80
    %s83 = scalar_lea.vmem %s0, 2
    %v84 = vld [vmem:[%s83] sm:$0x1]
    %85 = vrot.lane.b32.xlu0 %v84, 16
    %v86 = vpop.permute.xlu0 %85
    %vm87 = vcmask 195712
    %88 = vst.msk [vmem:[#allocation0] sm:$0x1] %vm87, %v86
    %s89 = scalar_lea.vmem %s0, 1
    %v90 = vld [vmem:[%s89] sm:$0x1]
    %91 = vrot.lane.b32.xlu0 %v90, 8
    %v92 = vpop.permute.xlu0 %91
    %vm93 = vcmask 130112
    %94 = vst.msk [vmem:[#allocation0] sm:$0x1] %vm93, %v92
    %s96 = sshllo.u32 0, 1
    %v98 = vld [vmem:[#allocation0] sm:%s96]
    %s99 = sshllo.u32 0, 1
    %100 = vst [vmem:[%s1] sm:%s99] %v98

// kernel: tile.29
$region0: #{tile.29}
  #allocation0 [shape = 's32[1]{0}', space=sflag, size = 0x4, scoped, tag = 'scoped memory for tile.29']
  %s0 = inlined_call_operand.vmem [shape: f32[16], index: 0, kind: input, shape index: {}]
  %s1 = inlined_call_operand.vmem [shape: f32[8,16], index: 1, kind: output, shape index: {}]
  // Predicated region
  $region2: #{tile.29} parent=0 // pred_check
    _
  $region3: #{tile.29} parent=0 // pred_check_branch
    %3 = sbr.rel (0) target = $region5
  $region4: #{tile.29} parent=0 // pred_region
    _
  $region5: #{tile.29} parent=0 // pred_fallthru
    _
  %v4 = vld [vmem:[%s0] ss:$0 sm:$0xff]
  %5 = vst [vmem:[%s1] sm:$0xff] %v4

// kernel: tile.30
$region0: #{tile.30}
  %s0 = inlined_call_operand.vmem [shape: f32[8,16], index: 0, kind: input, shape index: {}]
  %s1 = inlined_call_operand.vmem [shape: f32[1,128], index: 1, kind: output, shape index: {}]
  $region1: #{tile.30} parent=0
    #allocation0 [shape = 'u8[4096]{0}', space=vmem, size = 0x1000, scoped, tag = 'scoped mem for output reshape']
    %v2 = vld [vmem:[%s0] sm:$0x1]
    %vm3 = vcmask 130048
    %4 = vst.msk [vmem:[#allocation0] sm:$0x1] %vm3, %v2
    %s5 = scalar_lea.vmem %s0, 7
    %v6 = vld [vmem:[%s5] sm:$0x1]
    %7 = vrot.lane.b32.xlu0 %v6, 112
    %v8 = vpop.permute.xlu0 %7
    %vm9 = vcmask 1048448
    %10 = vst.msk [vmem:[#allocation0] sm:$0x1] %vm9, %v8
    %s11 = scalar_lea.vmem %s0, 6
    %v12 = vld [vmem:[%s11] sm:$0x1]
    %13 = vrot.lane.b32.xlu0 %v12, 96
    %v14 = vpop.permute.xlu0 %13
    %vm15 = vcmask 917248
    %16 = vst.msk [vmem:[#allocation0] sm:$0x1] %vm15, %v14
    %s17 = scalar_lea.vmem %s0, 5
    %v18 = vld [vmem:[%s17] sm:$0x1]
    %19 = vrot.lane.b32.xlu0 %v18, 80
    %v20 = vpop.permute.xlu0 %19
    %vm21 = vcmask 786048
    %22 = vst.msk [vmem:[#allocation0] sm:$0x1] %vm21, %v20
    %s23 = scalar_lea.vmem %s0, 4
    %v24 = vld [vmem:[%s23] sm:$0x1]
    %25 = vrot.lane.b32.xlu0 %v24, 64
    %v26 = vpop.permute.xlu0 %25
    %vm27 = vcmask 654848
    %28 = vst.msk [vmem:[#allocation0] sm:$0x1] %vm27, %v26
    %s29 = scalar_lea.vmem %s0, 3
    %v30 = vld [vmem:[%s29] sm:$0x1]
    %31 = vrot.lane.b32.xlu0 %v30, 48
    %v32 = vpop.permute.xlu0 %31
    %vm33 = vcmask 523648
    %34 = vst.msk [vmem:[#allocation0] sm:$0x1] %vm33, %v32
    %s35 = scalar_lea.vmem %s0, 2
    %v36 = vld [vmem:[%s35] sm:$0x1]
    %37 = vrot.lane.b32.xlu0 %v36, 32
    %v38 = vpop.permute.xlu0 %37
    %vm39 = vcmask 392448
    %40 = vst.msk [vmem:[#allocation0] sm:$0x1] %vm39, %v38
    %s41 = scalar_lea.vmem %s0, 1
    %v42 = vld [vmem:[%s41] sm:$0x1]
    %43 = vrot.lane.b32.xlu0 %v42, 16
    %v44 = vpop.permute.xlu0 %43
    %vm45 = vcmask 261248
    %46 = vst.msk [vmem:[#allocation0] sm:$0x1] %vm45, %v44
    %s48 = sshllo.u32 0, 1
    %v50 = vld [vmem:[#allocation0] sm:%s48]
    %s51 = sshllo.u32 0, 1
    %52 = vst [vmem:[%s1] sm:%s51] %v50

// kernel: tile.34
$region0: #{tile.34}
  #allocation0 [shape = 's32[1]{0}', space=sflag, size = 0x4, scoped, tag = 'scoped memory for tile.34']
  %s0 = inlined_call_operand.vmem [shape: f32[32], index: 0, kind: input, shape index: {}]
  %s1 = inlined_call_operand.vmem [shape: f32[4,32], index: 1, kind: output, shape index: {}]
  // Predicated region
  $region2: #{tile.34} parent=0 // pred_check
    _
  $region3: #{tile.34} parent=0 // pred_check_branch
    %3 = sbr.rel (0) target = $region5
  $region4: #{tile.34} parent=0 // pred_region
    _
  $region5: #{tile.34} parent=0 // pred_fallthru
    _
  %v4 = vld [vmem:[%s0] ss:$0 sm:$0xff]
  %5 = vst [vmem:[%s1] sm:$0xf] %v4

// kernel: tile.35
$region0: #{tile.35}
  %s0 = inlined_call_operand.vmem [shape: f32[4,32], index: 0, kind: input, shape index: {}]
  %s1 = inlined_call_operand.vmem [shape: f32[1,128], index: 1, kind: output, shape index: {}]
  $region1: #{tile.35} parent=0
    #allocation0 [shape = 'u8[4096]{0}', space=vmem, size = 0x1000, scoped, tag = 'scoped mem for output reshape']
    #allocation1 [shape = 'u8[4096]{0}', space=vmem, size = 0x1000, scoped, tag = 'scoped mem for input reshape']
    %s3 = sshllo.u32 0, 4
    %v4 = vld [vmem:[%s0] sm:%s3]
    %5 = vst [vmem:[#allocation1] sm:%s3] %v4
    %v6 = vld [vmem:[#allocation1] sm:$0x1]
    %vm7 = vcmask 261120
    %8 = vst.msk [vmem:[#allocation0] sm:$0x1] %vm7, %v6
    %s9 = scalar_lea.vmem [#allocation1], 3
    %v10 = vld [vmem:[%s9] sm:$0x1]
    %11 = vrot.lane.b32.xlu0 %v10, 96
    %v12 = vpop.permute.xlu0 %11
    %vm13 = vcmask 1048320
    %14 = vst.msk [vmem:[#allocation0] sm:$0x1] %vm13, %v12
    %s15 = scalar_lea.vmem [#allocation1], 2
    %v16 = vld [vmem:[%s15] sm:$0x1]
    %17 = vrot.lane.b32.xlu0 %v16, 64
    %v18 = vpop.permute.xlu0 %17
    %vm19 = vcmask 785920
    %20 = vst.msk [vmem:[#allocation0] sm:$0x1] %vm19, %v18
    %s21 = scalar_lea.vmem [#allocation1], 1
    %v22 = vld [vmem:[%s21] sm:$0x1]
    %23 = vrot.lane.b32.xlu0 %v22, 32
    %v24 = vpop.permute.xlu0 %23
    %vm25 = vcmask 523520
    %26 = vst.msk [vmem:[#allocation0] sm:$0x1] %vm25, %v24
    %s28 = sshllo.u32 0, 1
    %v30 = vld [vmem:[#allocation0] sm:%s28]
    %s31 = sshllo.u32 0, 1
    %32 = vst [vmem:[%s1] sm:%s31] %v30

// kernel: tile.39
$region0: #{tile.39}
  #allocation0 [shape = 's32[1]{0}', space=sflag, size = 0x4, scoped, tag = 'scoped memory for tile.39']
  %s0 = inlined_call_operand.vmem [shape: f32[32], index: 0, kind: input, shape index: {}]
  %s1 = inlined_call_operand.vmem [shape: f32[2,32], index: 1, kind: output, shape index: {}]
  // Predicated region
  $region2: #{tile.39} parent=0 // pred_check
    _
  $region3: #{tile.39} parent=0 // pred_check_branch
    %3 = sbr.rel (0) target = $region5
  $region4: #{tile.39} parent=0 // pred_region
    _
  $region5: #{tile.39} parent=0 // pred_fallthru
    _
  %v4 = vld [vmem:[%s0] ss:$0 sm:$0xff]
  %5 = vst [vmem:[%s1] sm:$0x3] %v4

// kernel: tile.40
$region0: #{tile.40}
  %s0 = inlined_call_operand.vmem [shape: f32[2,32], index: 0, kind: input, shape index: {}]
  %s1 = inlined_call_operand.vmem [shape: f32[1,64], index: 1, kind: output, shape index: {}]
  $region1: #{tile.40} parent=0
    #allocation0 [shape = 'u8[4096]{0}', space=vmem, size = 0x1000, scoped, tag = 'scoped mem for output reshape']
    #allocation1 [shape = 'u8[4096]{0}', space=vmem, size = 0x1000, scoped, tag = 'scoped mem for input reshape']
    %s3 = sshllo.u32 0, 2
    %v4 = vld [vmem:[%s0] sm:%s3]
    %5 = vst [vmem:[#allocation1] sm:%s3] %v4
    %v6 = vld [vmem:[#allocation1] sm:$0x1]
    %vm7 = vcmask 261120
    %8 = vst.msk [vmem:[#allocation0] sm:$0x1] %vm7, %v6
    %s9 = scalar_lea.vmem [#allocation1], 1
    %v10 = vld [vmem:[%s9] sm:$0x1]
    %11 = vrot.lane.b32.xlu0 %v10, 32
    %v12 = vpop.permute.xlu0 %11
    %vm13 = vcmask 523520
    %14 = vst.msk [vmem:[#allocation0] sm:$0x1] %vm13, %v12
    %s16 = sshllo.u32 0, 1
    %v18 = vld [vmem:[#allocation0] sm:%s16]
    %s19 = sshllo.u32 0, 1
    %20 = vst [vmem:[%s1] sm:%s19] %v18

// kernel: time_distributed_down.1
$region0: #{time_distributed_down.1}
  #allocation0 [shape = 'u32[]', space=smem, size = 0x4, offset = 0x4, fixed_abs, tag = 'smem constant byte address 0x4 - core index']
  #allocation1 [shape = 'u32[144,128]{1,0:T(1,128)}', space=vmem, size = 0x12000, scoped, tag = 'internal scratch']
  %s0 = inlined_call_operand.vmem [shape: f32[2,48,64], index: 0, kind: input, shape index: {}]
  %s1 = inlined_call_operand.vmem [shape: bf16[3,64,128], index: 1, kind: input, shape index: {}]
  %s2 = inlined_call_operand.vmem [shape: f32[1,128], index: 2, kind: input, shape index: {}]
  %s3 = inlined_call_operand.vmem [shape: bf16[3,64,128], index: 3, kind: input, shape index: {}]
  %s4 = inlined_call_operand.vmem [shape: f32[1,128], index: 4, kind: input, shape index: {}]
  %s5 = inlined_call_operand.vmem [shape: bf16[3,64,128], index: 5, kind: input, shape index: {}]
  %s6 = inlined_call_operand.vmem [shape: f32[1,128], index: 6, kind: input, shape index: {}]
  %s7 = inlined_call_operand.vmem [shape: bf16[3,64,64], index: 7, kind: input, shape index: {}]
  %s8 = inlined_call_operand.vmem [shape: f32[1,64], index: 8, kind: input, shape index: {}]
  %s9 = inlined_call_operand.vmem [shape: bf16[3,32,32], index: 9, kind: input, shape index: {}]
  %s10 = inlined_call_operand.vmem [shape: f32[1,32], index: 10, kind: input, shape index: {}]
  %s11 = inlined_call_operand.vmem [shape: f32[2,48,128], index: 11, kind: output, shape index: {0}]
  %s12 = inlined_call_operand.vmem [shape: f32[2,24,128], index: 12, kind: output, shape index: {1}]
  %s13 = inlined_call_operand.vmem [shape: f32[2,12,128], index: 13, kind: output, shape index: {2}]
  %s14 = inlined_call_operand.vmem [shape: f32[2,6,64], index: 14, kind: output, shape index: {3}]
  %s15 = inlined_call_operand.vmem [shape: f32[2,3,32], index: 15, kind: output, shape index: {4}]
  %16 = xla_tuple %s11, %s12, %s13, %s14, %s15
  %s17 = sld [smem:[#allocation0]]
  $region109: #{time_distributed_down.1} parent=0
    _
  %s19 = ssub.s32 1, %s17
  %s20 = scalar_select 0, %s19, %s17
  loop: start=0, step=1, limit=4
  $region2: #{time_distributed_down.1} parent=0 // loop_pre_header
    _
  $region3: #{time_distributed_down.1} parent=0 // loop_header
    %s22 = sphi 0, %s26
    %p23 = scmp.ge.s32.totalorder %s22, 4
    %s32 = sphi 0, %s34
    %s35 = sphi 0, %s32
    %s36 = sphi 0, %s35
    %s52 = sphi 0, %s36
    %s56 = sphi 0, %s56
    %s58 = sphi 0, %s56
    %s59 = sphi 0, %s58
    %s73 = sphi 0, %s59
    %s77 = sphi 0, %s77
    %s79 = sphi 0, %s77
    %s80 = sphi 0, %s79
    %s94 = sphi 0, %s80
    %s98 = sphi 0, %s98
    %s100 = sphi 0, %s98
    %s101 = sphi 0, %s100
    %s115 = sphi 0, %s101
    %s119 = sphi 0, %s119
    %s121 = sphi 0, %s119
    %s122 = sphi 0, %s121
    %s136 = sphi 0, %s122
    %s140 = sphi 0, %s140
    %s142 = sphi 0, %s140
    %s143 = sphi 0, %s142
    %s157 = sphi 0, %s143
    %s161 = sphi 0, %s161
    %s163 = sphi 0, %s161
    %s164 = sphi 0, %s163
    %s178 = sphi 0, %s164
    %s182 = sphi 0, %s182
    %s184 = sphi 0, %s182
    %s185 = sphi 0, %s184
    %s199 = sphi 0, %s185
    %s203 = sphi 0, %s203
    %s205 = sphi 0, %s203
    %s206 = sphi 0, %s205
    %s220 = sphi 0, %s206
    %s224 = sphi 0, %s224
    %s226 = sphi 0, %s224
    %s227 = sphi 0, %s226
    %s241 = sphi 0, %s227
    %s245 = sphi 0, %s245
    %s247 = sphi 0, %s245
    %s248 = sphi 0, %s247
    %s262 = sphi 0, %s248
    %s268 = sphi 0, %s270
    %s271 = sphi 0, %s268
    %s272 = sphi 0, %s271
    %s288 = sphi 0, %s272
    %s294 = sphi 0, %s296
    %s297 = sphi 0, %s294
    %s298 = sphi 0, %s297
    %s314 = sphi 0, %s298
    %s320 = sphi 0, %s322
    %s323 = sphi 0, %s320
    %s324 = sphi 0, %s323
    %s340 = sphi 0, %s324
    %s346 = sphi 0, %s348
    %s349 = sphi 0, %s346
    %s350 = sphi 0, %s349
    %s366 = sphi 0, %s350
    %s372 = sphi 0, %s374
    %s375 = sphi 0, %s372
    %s376 = sphi 0, %s375
    %s392 = sphi 0, %s376
  $region4: #{time_distributed_down.1} parent=0 // loop_header_branch
    %25 = sbr.rel (%p23) target = $region8
  $region5: #{time_distributed_down.1} parent=0 // loop_body
    %s27 = ssub.s32 %s22, 1
    %s28 = ssub.s32 %s22, 2
    %s29 = sadd.s32 %s22, 1
    %s30 = ssub.s32 %s22, %s29
    %p31 = scmp.eq.s32.totalorder %s30, 0
    %s33 = sadd.s32 %s32, 1
    %s34 = scalar_select %p31, %s32, %s33
    %p37 = pneg %p31
    %p38 = scmp.eq.s32.totalorder %s22, 1
    %p39 = por %p37, %p38
    %p40 = scmp.ne.s32.totalorder %s32, %s35
    %p41 = scmp.eq.s32.totalorder %s22, 0
    %p42 = por %p40, %p41
    %p43 = scmp.ne.s32.totalorder %s32, %s35
    %p44 = scmp.eq.s32.totalorder %s27, 1
    %p45 = por %p43, %p44
    %p46 = scmp.ne.s32.totalorder %s35, %s36
    %p47 = scmp.eq.s32.totalorder %s27, 0
    %p48 = por %p46, %p47
    %p49 = scmp.ne.s32.totalorder %s35, %s36
    %p50 = scmp.eq.s32.totalorder %s28, 1
    %p51 = por %p49, %p50
    %p53 = scmp.ne.s32.totalorder %s36, %s52
    %p54 = scmp.eq.s32.totalorder %s28, 0
    %p55 = por %p53, %p54
    %s57 = sadd.s32 %s56, 1
    %p60 = scmp.eq.s32.totalorder %s22, 1
    %p61 = scmp.ne.s32.totalorder %s56, %s58
    %p62 = scmp.eq.s32.totalorder %s22, 0
    %p63 = por %p61, %p62
    %p64 = scmp.ne.s32.totalorder %s56, %s58
    %p65 = scmp.eq.s32.totalorder %s27, 1
    %p66 = por %p64, %p65
    %p67 = scmp.ne.s32.totalorder %s58, %s59
    %p68 = scmp.eq.s32.totalorder %s27, 0
    %p69 = por %p67, %p68
    %p70 = scmp.ne.s32.totalorder %s58, %s59
    %p71 = scmp.eq.s32.totalorder %s28, 1
    %p72 = por %p70, %p71
    %p74 = scmp.ne.s32.totalorder %s59, %s73
    %p75 = scmp.eq.s32.totalorder %s28, 0
    %p76 = por %p74, %p75
    %s78 = sadd.s32 %s77, 1
    %p81 = scmp.eq.s32.totalorder %s22, 1
    %p82 = scmp.ne.s32.totalorder %s77, %s79
    %p83 = scmp.eq.s32.totalorder %s22, 0
    %p84 = por %p82, %p83
    %p85 = scmp.ne.s32.totalorder %s77, %s79
    %p86 = scmp.eq.s32.totalorder %s27, 1
    %p87 = por %p85, %p86
    %p88 = scmp.ne.s32.totalorder %s79, %s80
    %p89 = scmp.eq.s32.totalorder %s27, 0
    %p90 = por %p88, %p89
    %p91 = scmp.ne.s32.totalorder %s79, %s80
    %p92 = scmp.eq.s32.totalorder %s28, 1
    %p93 = por %p91, %p92
    %p95 = scmp.ne.s32.totalorder %s80, %s94
    %p96 = scmp.eq.s32.totalorder %s28, 0
    %p97 = por %p95, %p96
    %s99 = sadd.s32 %s98, 1
    %p102 = scmp.eq.s32.totalorder %s22, 1
    %p103 = scmp.ne.s32.totalorder %s98, %s100
    %p104 = scmp.eq.s32.totalorder %s22, 0
    %p105 = por %p103, %p104
    %p106 = scmp.ne.s32.totalorder %s98, %s100
    %p107 = scmp.eq.s32.totalorder %s27, 1
    %p108 = por %p106, %p107
    %p109 = scmp.ne.s32.totalorder %s100, %s101
    %p110 = scmp.eq.s32.totalorder %s27, 0
    %p111 = por %p109, %p110
    %p112 = scmp.ne.s32.totalorder %s100, %s101
    %p113 = scmp.eq.s32.totalorder %s28, 1
    %p114 = por %p112, %p113
    %p116 = scmp.ne.s32.totalorder %s101, %s115
    %p117 = scmp.eq.s32.totalorder %s28, 0
    %p118 = por %p116, %p117
    %s120 = sadd.s32 %s119, 1
    %p123 = scmp.eq.s32.totalorder %s22, 1
    %p124 = scmp.ne.s32.totalorder %s119, %s121
    %p125 = scmp.eq.s32.totalorder %s22, 0
    %p126 = por %p124, %p125
    %p127 = scmp.ne.s32.totalorder %s119, %s121
    %p128 = scmp.eq.s32.totalorder %s27, 1
    %p129 = por %p127, %p128
    %p130 = scmp.ne.s32.totalorder %s121, %s122
    %p131 = scmp.eq.s32.totalorder %s27, 0
    %p132 = por %p130, %p131
    %p133 = scmp.ne.s32.totalorder %s121, %s122
    %p134 = scmp.eq.s32.totalorder %s28, 1
    %p135 = por %p133, %p134
    %p137 = scmp.ne.s32.totalorder %s122, %s136
    %p138 = scmp.eq.s32.totalorder %s28, 0
    %p139 = por %p137, %p138
    %s141 = sadd.s32 %s140, 1
    %p144 = scmp.eq.s32.totalorder %s22, 1
    %p145 = scmp.ne.s32.totalorder %s140, %s142
    %p146 = scmp.eq.s32.totalorder %s22, 0
    %p147 = por %p145, %p146
    %p148 = scmp.ne.s32.totalorder %s140, %s142
    %p149 = scmp.eq.s32.totalorder %s27, 1
    %p150 = por %p148, %p149
    %p151 = scmp.ne.s32.totalorder %s142, %s143
    %p152 = scmp.eq.s32.totalorder %s27, 0
    %p153 = por %p151, %p152
    %p154 = scmp.ne.s32.totalorder %s142, %s143
    %p155 = scmp.eq.s32.totalorder %s28, 1
    %p156 = por %p154, %p155
    %p158 = scmp.ne.s32.totalorder %s143, %s157
    %p159 = scmp.eq.s32.totalorder %s28, 0
    %p160 = por %p158, %p159
    %s162 = sadd.s32 %s161, 1
    %p165 = scmp.eq.s32.totalorder %s22, 1
    %p166 = scmp.ne.s32.totalorder %s161, %s163
    %p167 = scmp.eq.s32.totalorder %s22, 0
    %p168 = por %p166, %p167
    %p169 = scmp.ne.s32.totalorder %s161, %s163
    %p170 = scmp.eq.s32.totalorder %s27, 1
    %p171 = por %p169, %p170
    %p172 = scmp.ne.s32.totalorder %s163, %s164
    %p173 = scmp.eq.s32.totalorder %s27, 0
    %p174 = por %p172, %p173
    %p175 = scmp.ne.s32.totalorder %s163, %s164
    %p176 = scmp.eq.s32.totalorder %s28, 1
    %p177 = por %p175, %p176
    %p179 = scmp.ne.s32.totalorder %s164, %s178
    %p180 = scmp.eq.s32.totalorder %s28, 0
    %p181 = por %p179, %p180
    %s183 = sadd.s32 %s182, 1
    %p186 = scmp.eq.s32.totalorder %s22, 1
    %p187 = scmp.ne.s32.totalorder %s182, %s184
    %p188 = scmp.eq.s32.totalorder %s22, 0
    %p189 = por %p187, %p188
    %p190 = scmp.ne.s32.totalorder %s182, %s184
    %p191 = scmp.eq.s32.totalorder %s27, 1
    %p192 = por %p190, %p191
    %p193 = scmp.ne.s32.totalorder %s184, %s185
    %p194 = scmp.eq.s32.totalorder %s27, 0
    %p195 = por %p193, %p194
    %p196 = scmp.ne.s32.totalorder %s184, %s185
    %p197 = scmp.eq.s32.totalorder %s28, 1
    %p198 = por %p196, %p197
    %p200 = scmp.ne.s32.totalorder %s185, %s199
    %p201 = scmp.eq.s32.totalorder %s28, 0
    %p202 = por %p200, %p201
    %s204 = sadd.s32 %s203, 1
    %p207 = scmp.eq.s32.totalorder %s22, 1
    %p208 = scmp.ne.s32.totalorder %s203, %s205
    %p209 = scmp.eq.s32.totalorder %s22, 0
    %p210 = por %p208, %p209
    %p211 = scmp.ne.s32.totalorder %s203, %s205
    %p212 = scmp.eq.s32.totalorder %s27, 1
    %p213 = por %p211, %p212
    %p214 = scmp.ne.s32.totalorder %s205, %s206
    %p215 = scmp.eq.s32.totalorder %s27, 0
    %p216 = por %p214, %p215
    %p217 = scmp.ne.s32.totalorder %s205, %s206
    %p218 = scmp.eq.s32.totalorder %s28, 1
    %p219 = por %p217, %p218
    %p221 = scmp.ne.s32.totalorder %s206, %s220
    %p222 = scmp.eq.s32.totalorder %s28, 0
    %p223 = por %p221, %p222
    %s225 = sadd.s32 %s224, 1
    %p228 = scmp.eq.s32.totalorder %s22, 1
    %p229 = scmp.ne.s32.totalorder %s224, %s226
    %p230 = scmp.eq.s32.totalorder %s22, 0
    %p231 = por %p229, %p230
    %p232 = scmp.ne.s32.totalorder %s224, %s226
    %p233 = scmp.eq.s32.totalorder %s27, 1
    %p234 = por %p232, %p233
    %p235 = scmp.ne.s32.totalorder %s226, %s227
    %p236 = scmp.eq.s32.totalorder %s27, 0
    %p237 = por %p235, %p236
    %p238 = scmp.ne.s32.totalorder %s226, %s227
    %p239 = scmp.eq.s32.totalorder %s28, 1
    %p240 = por %p238, %p239
    %p242 = scmp.ne.s32.totalorder %s227, %s241
    %p243 = scmp.eq.s32.totalorder %s28, 0
    %p244 = por %p242, %p243
    %s246 = sadd.s32 %s245, 1
    %p249 = scmp.eq.s32.totalorder %s22, 1
    %p250 = scmp.ne.s32.totalorder %s245, %s247
    %p251 = scmp.eq.s32.totalorder %s22, 0
    %p252 = por %p250, %p251
    %p253 = scmp.ne.s32.totalorder %s245, %s247
    %p254 = scmp.eq.s32.totalorder %s27, 1
    %p255 = por %p253, %p254
    %p256 = scmp.ne.s32.totalorder %s247, %s248
    %p257 = scmp.eq.s32.totalorder %s27, 0
    %p258 = por %p256, %p257
    %p259 = scmp.ne.s32.totalorder %s247, %s248
    %p260 = scmp.eq.s32.totalorder %s28, 1
    %p261 = por %p259, %p260
    %p263 = scmp.ne.s32.totalorder %s248, %s262
    %p264 = scmp.eq.s32.totalorder %s28, 0
    %p265 = por %p263, %p264
    %s266 = ssub.s32 %s22, %s29
    %p267 = scmp.eq.s32.totalorder %s266, 0
    %s269 = sadd.s32 %s268, 1
    %s270 = scalar_select %p267, %s268, %s269
    %p273 = pneg %p267
    %p274 = scmp.eq.s32.totalorder %s22, 1
    %p275 = por %p273, %p274
    %p276 = scmp.ne.s32.totalorder %s268, %s271
    %p277 = scmp.eq.s32.totalorder %s22, 0
    %p278 = por %p276, %p277
    %p279 = scmp.ne.s32.totalorder %s268, %s271
    %p280 = scmp.eq.s32.totalorder %s27, 1
    %p281 = por %p279, %p280
    %p282 = scmp.ne.s32.totalorder %s271, %s272
    %p283 = scmp.eq.s32.totalorder %s27, 0
    %p284 = por %p282, %p283
    %p285 = scmp.ne.s32.totalorder %s271, %s272
    %p286 = scmp.eq.s32.totalorder %s28, 1
    %p287 = por %p285, %p286
    %p289 = scmp.ne.s32.totalorder %s272, %s288
    %p290 = scmp.eq.s32.totalorder %s28, 0
    %p291 = por %p289, %p290
    %s292 = ssub.s32 %s22, %s29
    %p293 = scmp.eq.s32.totalorder %s292, 0
    %s295 = sadd.s32 %s294, 1
    %s296 = scalar_select %p293, %s294, %s295
    %p299 = pneg %p293
    %p300 = scmp.eq.s32.totalorder %s22, 1
    %p301 = por %p299, %p300
    %p302 = scmp.ne.s32.totalorder %s294, %s297
    %p303 = scmp.eq.s32.totalorder %s22, 0
    %p304 = por %p302, %p303
    %p305 = scmp.ne.s32.totalorder %s294, %s297
    %p306 = scmp.eq.s32.totalorder %s27, 1
    %p307 = por %p305, %p306
    %p308 = scmp.ne.s32.totalorder %s297, %s298
    %p309 = scmp.eq.s32.totalorder %s27, 0
    %p310 = por %p308, %p309
    %p311 = scmp.ne.s32.totalorder %s297, %s298
    %p312 = scmp.eq.s32.totalorder %s28, 1
    %p313 = por %p311, %p312
    %p315 = scmp.ne.s32.totalorder %s298, %s314
    %p316 = scmp.eq.s32.totalorder %s28, 0
    %p317 = por %p315, %p316
    %s318 = ssub.s32 %s22, %s29
    %p319 = scmp.eq.s32.totalorder %s318, 0
    %s321 = sadd.s32 %s320, 1
    %s322 = scalar_select %p319, %s320, %s321
    %p325 = pneg %p319
    %p326 = scmp.eq.s32.totalorder %s22, 1
    %p327 = por %p325, %p326
    %p328 = scmp.ne.s32.totalorder %s320, %s323
    %p329 = scmp.eq.s32.totalorder %s22, 0
    %p330 = por %p328, %p329
    %p331 = scmp.ne.s32.totalorder %s320, %s323
    %p332 = scmp.eq.s32.totalorder %s27, 1
    %p333 = por %p331, %p332
    %p334 = scmp.ne.s32.totalorder %s323, %s324
    %p335 = scmp.eq.s32.totalorder %s27, 0
    %p336 = por %p334, %p335
    %p337 = scmp.ne.s32.totalorder %s323, %s324
    %p338 = scmp.eq.s32.totalorder %s28, 1
    %p339 = por %p337, %p338
    %p341 = scmp.ne.s32.totalorder %s324, %s340
    %p342 = scmp.eq.s32.totalorder %s28, 0
    %p343 = por %p341, %p342
    %s344 = ssub.s32 %s22, %s29
    %p345 = scmp.eq.s32.totalorder %s344, 0
    %s347 = sadd.s32 %s346, 1
    %s348 = scalar_select %p345, %s346, %s347
    %p351 = pneg %p345
    %p352 = scmp.eq.s32.totalorder %s22, 1
    %p353 = por %p351, %p352
    %p354 = scmp.ne.s32.totalorder %s346, %s349
    %p355 = scmp.eq.s32.totalorder %s22, 0
    %p356 = por %p354, %p355
    %p357 = scmp.ne.s32.totalorder %s346, %s349
    %p358 = scmp.eq.s32.totalorder %s27, 1
    %p359 = por %p357, %p358
    %p360 = scmp.ne.s32.totalorder %s349, %s350
    %p361 = scmp.eq.s32.totalorder %s27, 0
    %p362 = por %p360, %p361
    %p363 = scmp.ne.s32.totalorder %s349, %s350
    %p364 = scmp.eq.s32.totalorder %s28, 1
    %p365 = por %p363, %p364
    %p367 = scmp.ne.s32.totalorder %s350, %s366
    %p368 = scmp.eq.s32.totalorder %s28, 0
    %p369 = por %p367, %p368
    %s370 = ssub.s32 %s22, %s29
    %p371 = scmp.eq.s32.totalorder %s370, 0
    %s373 = sadd.s32 %s372, 1
    %s374 = scalar_select %p371, %s372, %s373
    %p377 = pneg %p371
    %p378 = scmp.eq.s32.totalorder %s22, 1
    %p379 = por %p377, %p378
    %p380 = scmp.ne.s32.totalorder %s372, %s375
    %p381 = scmp.eq.s32.totalorder %s22, 0
    %p382 = por %p380, %p381
    %p383 = scmp.ne.s32.totalorder %s372, %s375
    %p384 = scmp.eq.s32.totalorder %s27, 1
    %p385 = por %p383, %p384
    %p386 = scmp.ne.s32.totalorder %s375, %s376
    %p387 = scmp.eq.s32.totalorder %s27, 0
    %p388 = por %p386, %p387
    %p389 = scmp.ne.s32.totalorder %s375, %s376
    %p390 = scmp.eq.s32.totalorder %s28, 1
    %p391 = por %p389, %p390
    %p393 = scmp.ne.s32.totalorder %s376, %s392
    %p394 = scmp.eq.s32.totalorder %s28, 0
    %p395 = por %p393, %p394
    %p396 = scmp.le.s32.totalorder 1, %s22
    %p397 = scmp.lt.s32.totalorder %s22, 3
    %p398 = pnand %p396, %p397
    %p399 = pneg %p398
    // Predicated region
    $region9: #{time_distributed_down.1} parent=5 // pred_check
      _
    $region10: #{time_distributed_down.1} parent=5 // pred_check_branch
      %401 = sbr.rel (%p398) target = $region12
    $region11: #{time_distributed_down.1} parent=5 // pred_region
      %s402 = ssub.s32 %s22, 1
      // Predicated region
      $region13: #{time_distributed_down.1} parent=11 // pred_check
        %p403 = pneg %p69
      $region14: #{time_distributed_down.1} parent=11 // pred_check_branch
        %405 = sbr.rel (%p403) target = $region16
      $region15: #{time_distributed_down.1} parent=11 // pred_region
        _
      $region16: #{time_distributed_down.1} parent=11 // pred_fallthru
        _
      // Predicated region
      $region17: #{time_distributed_down.1} parent=11 // pred_check
        %p406 = pneg %p90
      $region18: #{time_distributed_down.1} parent=11 // pred_check_branch
        %408 = sbr.rel (%p406) target = $region20
      $region19: #{time_distributed_down.1} parent=11 // pred_region
        _
      $region20: #{time_distributed_down.1} parent=11 // pred_fallthru
        _
      // Predicated region
      $region21: #{time_distributed_down.1} parent=11 // pred_check
        %p409 = pneg %p111
      $region22: #{time_distributed_down.1} parent=11 // pred_check_branch
        %411 = sbr.rel (%p409) target = $region24
      $region23: #{time_distributed_down.1} parent=11 // pred_region
        _
      $region24: #{time_distributed_down.1} parent=11 // pred_fallthru
        _
      // Predicated region
      $region25: #{time_distributed_down.1} parent=11 // pred_check
        %p412 = pneg %p132
      $region26: #{time_distributed_down.1} parent=11 // pred_check_branch
        %414 = sbr.rel (%p412) target = $region28
      $region27: #{time_distributed_down.1} parent=11 // pred_region
        _
      $region28: #{time_distributed_down.1} parent=11 // pred_fallthru
        _
      // Predicated region
      $region29: #{time_distributed_down.1} parent=11 // pred_check
        %p415 = pneg %p153
      $region30: #{time_distributed_down.1} parent=11 // pred_check_branch
        %417 = sbr.rel (%p415) target = $region32
      $region31: #{time_distributed_down.1} parent=11 // pred_region
        _
      $region32: #{time_distributed_down.1} parent=11 // pred_fallthru
        _
      // Predicated region
      $region33: #{time_distributed_down.1} parent=11 // pred_check
        %p418 = pneg %p174
      $region34: #{time_distributed_down.1} parent=11 // pred_check_branch
        %420 = sbr.rel (%p418) target = $region36
      $region35: #{time_distributed_down.1} parent=11 // pred_region
        _
      $region36: #{time_distributed_down.1} parent=11 // pred_fallthru
        _
      // Predicated region
      $region37: #{time_distributed_down.1} parent=11 // pred_check
        %p421 = pneg %p195
      $region38: #{time_distributed_down.1} parent=11 // pred_check_branch
        %423 = sbr.rel (%p421) target = $region40
      $region39: #{time_distributed_down.1} parent=11 // pred_region
        _
      $region40: #{time_distributed_down.1} parent=11 // pred_fallthru
        _
      // Predicated region
      $region41: #{time_distributed_down.1} parent=11 // pred_check
        %p424 = pneg %p216
      $region42: #{time_distributed_down.1} parent=11 // pred_check_branch
        %426 = sbr.rel (%p424) target = $region44
      $region43: #{time_distributed_down.1} parent=11 // pred_region
        _
      $region44: #{time_distributed_down.1} parent=11 // pred_fallthru
        _
      // Predicated region
      $region45: #{time_distributed_down.1} parent=11 // pred_check
        %p427 = pneg %p237
      $region46: #{time_distributed_down.1} parent=11 // pred_check_branch
        %429 = sbr.rel (%p427) target = $region48
      $region47: #{time_distributed_down.1} parent=11 // pred_region
        _
      $region48: #{time_distributed_down.1} parent=11 // pred_fallthru
        _
      // Predicated region
      $region49: #{time_distributed_down.1} parent=11 // pred_check
        %p430 = pneg %p258
      $region50: #{time_distributed_down.1} parent=11 // pred_check_branch
        %432 = sbr.rel (%p430) target = $region52
      $region51: #{time_distributed_down.1} parent=11 // pred_region
        _
      $region52: #{time_distributed_down.1} parent=11 // pred_fallthru
        _
    $region12: #{time_distributed_down.1} parent=5 // pred_fallthru
      _
    %p433 = scmp.lt.s32.totalorder %s22, 2
    // Predicated region
    $region53: #{time_distributed_down.1} parent=5 // pred_check
      %p434 = pneg %p433
    $region54: #{time_distributed_down.1} parent=5 // pred_check_branch
      %436 = sbr.rel (%p434) target = $region56
    $region55: #{time_distributed_down.1} parent=5 // pred_region
      // Predicated region
      $region57: #{time_distributed_down.1} parent=55 // pred_check
        %p437 = pneg %p42
      $region58: #{time_distributed_down.1} parent=55 // pred_check_branch
        %439 = sbr.rel (%p437) target = $region60
      $region59: #{time_distributed_down.1} parent=55 // pred_region
        %p440 = scmp.lt.s32.totalorder %s22, 1
        %s441 = scalar_select %p440, %s22, 1
        %s442 = smul.addr %s441, 6
        %s443 = smul.addr %s442, 8
        %s444 = scalar_lea.vmem %s0, %s443
      $region60: #{time_distributed_down.1} parent=55 // pred_fallthru
        _
    $region56: #{time_distributed_down.1} parent=5 // pred_fallthru
      _
    %p445 = scmp.le.s32.totalorder 1, %s22
    %p446 = scmp.lt.s32.totalorder %s22, 3
    %p447 = pnand %p445, %p446
    %p448 = pneg %p447
    // Predicated region
    $region61: #{time_distributed_down.1} parent=5 // pred_check
      _
    $region62: #{time_distributed_down.1} parent=5 // pred_check_branch
      %450 = sbr.rel (%p447) target = $region64
    $region63: #{time_distributed_down.1} parent=5 // pred_region
      %s451 = ssub.s32 %s22, 1
      %p452 = scmp.lt.s32.totalorder %s27, 1
      %s453 = scalar_select %p452, %s27, 1
      %s454 = smul.addr %s453, 6
      %s455 = smul.addr %s454, 8
      %s456 = scalar_lea.vmem %s0, %s455
      %p457 = pneg %p48
      %p458 = pneg %p45
      %p459 = pneg %p69
      %p460 = pneg %p66
      %p461 = pneg %p90
      %p462 = pneg %p87
      %p463 = pneg %p111
      %p464 = pneg %p108
      %p465 = pneg %p132
      %p466 = pneg %p129
      %p467 = pneg %p153
      %p468 = pneg %p150
      %p469 = pneg %p174
      %p470 = pneg %p171
      %p471 = pneg %p195
      %p472 = pneg %p192
      %p473 = pneg %p216
      %p474 = pneg %p213
      %p475 = pneg %p237
      %p476 = pneg %p234
      %p477 = pneg %p258
      %p478 = pneg %p255
      %p479 = pneg %p284
      %p480 = pneg %p281
      %p481 = scmp.lt.s32.totalorder %s27, 1
      %s482 = scalar_select %p481, %s27, 1
      %s483 = smul.addr %s482, 6
      %s484 = smul.addr %s483, 8
      %s485 = scalar_lea.vmem %s11, %s484
      %p486 = pneg %p310
      %p487 = pneg %p307
      %p488 = scmp.lt.s32.totalorder %s27, 1
      %s489 = scalar_select %p488, %s27, 1
      %s490 = smul.addr %s489, 3
      %s491 = smul.addr %s490, 8
      %s492 = scalar_lea.vmem %s12, %s491
      %p493 = pneg %p336
      %p494 = pneg %p333
      %p495 = scmp.lt.s32.totalorder %s27, 1
      %s496 = scalar_select %p495, %s27, 1
      %s497 = smul.addr %s496, 2
      %s498 = smul.addr %s497, 8
      %s499 = scalar_lea.vmem %s13, %s498
      %p500 = pneg %p362
      %p501 = pneg %p359
      %p502 = scmp.lt.s32.totalorder %s27, 1
      %s503 = scalar_select %p502, %s27, 1
      %s504 = smul.addr %s503, 8
      %s505 = scalar_lea.vmem %s14, %s504
      %p506 = pneg %p388
      %p507 = pneg %p385
      %p508 = scmp.lt.s32.totalorder %s27, 1
      %s509 = scalar_select %p508, %s27, 1
      %s510 = smul.addr %s509, 4
      %s511 = scalar_lea.vmem %s15, %s510
      %p512 = scmp.lt.s32.totalorder %s27, 1
      %s513 = scalar_select %p512, %s27, 1
      %s514 = smul.addr %s513, 6
      %s515 = smul.addr %s514, 8
      %s516 = scalar_lea.vmem %s0, %s515
      %p517 = scmp.lt.s32.totalorder %s27, 1
      %s518 = scalar_select %p517, %s27, 1
      %s519 = smul.addr %s518, 6
      %s520 = smul.addr %s519, 8
      %s521 = scalar_lea.vmem %s11, %s520
      %p522 = scmp.lt.s32.totalorder %s27, 1
      %s523 = scalar_select %p522, %s27, 1
      %s524 = smul.addr %s523, 3
      %s525 = smul.addr %s524, 8
      %s526 = scalar_lea.vmem %s12, %s525
      %p527 = scmp.lt.s32.totalorder %s27, 1
      %s528 = scalar_select %p527, %s27, 1
      %s529 = smul.addr %s528, 2
      %s530 = smul.addr %s529, 8
      %s531 = scalar_lea.vmem %s13, %s530
      %p532 = scmp.lt.s32.totalorder %s27, 1
      %s533 = scalar_select %p532, %s27, 1
      %s534 = smul.addr %s533, 8
      %s535 = scalar_lea.vmem %s14, %s534
      %p536 = scmp.lt.s32.totalorder %s27, 1
      %s537 = scalar_select %p536, %s27, 1
      %s538 = smul.addr %s537, 4
      %s539 = scalar_lea.vmem %s15, %s538
      %v541 = vld [vmem:[%s516] sm:$0xff]
      %v542 = vld [vmem:[%s516 + $0x8] sm:$0xff]
      %v543 = vld [vmem:[%s516 + $0x10] sm:$0xff]
      %v544 = vld [vmem:[%s516 + $0x18] sm:$0xff]
      %v545 = vld [vmem:[%s516 + $0x20] sm:$0xff]
      %v546 = vld [vmem:[%s516 + $0x28] sm:$0xff]
      %v547 = vpack.c.bf16 %v542, %v541
      %v548 = vpack.c.bf16 %v544, %v543
      %v549 = vpack.c.bf16 %v546, %v545
      %s550 = scalar_lea.vmem %s1, 32
      %v551 = vld [vmem:[%s550] sm:$0xf]
      %v552 = vld [vmem:[%s550 + $0x4] sm:$0xf]
      %v553 = vld [vmem:[%s550 + $0x8] sm:$0xf]
      %v554 = vld [vmem:[%s550 + $0xc] sm:$0xf]
      %v555 = vld [vmem:[%s550 + $0x10] sm:$0xf]
      %v556 = vld [vmem:[%s550 + $0x14] sm:$0xf]
      %v557 = vld [vmem:[%s550 + $0x18] sm:$0xf]
      %v558 = vld [vmem:[%s550 + $0x1c] sm:$0xf]
      %v559 = vlaneseq
      %v560 = vshrl.u32 %v559, 7
      %v561 = vadd.s32 %v560, 8
      %v562 = vadd.s32 %v560, 16
      %v563 = vadd.s32 %v560, 24
      %v564 = vadd.s32 %v560, 32
      %v565 = vadd.s32 %v560, 40
      %v566 = vlaneseq
      %v567 = vand.u32 %v566, 127
      %v568 = vsub.s32 %v560, 1
      %v569 = vsub.s32 %v561, 1
      %v570 = vsub.s32 %v562, 1
      %v571 = vsub.s32 %v563, 1
      %v572 = vsub.s32 %v564, 1
      %v573 = vsub.s32 %v565, 1
      %vm574 = vcmp.eq.s32.totalorder %v567, %v568
      %vm575 = vcmp.eq.s32.totalorder %v567, %v569
      %vm576 = vcmp.eq.s32.totalorder %v567, %v570
      %vm577 = vcmp.eq.s32.totalorder %v567, %v571
      %vm578 = vcmp.eq.s32.totalorder %v567, %v572
      %vm579 = vcmp.eq.s32.totalorder %v567, %v573
      %v580 = vand.u32 %v560, 15
      %v581 = vand.u32 %v561, 15
      %v582 = vand.u32 %v562, 15
      %v583 = vand.u32 %v563, 15
      %v584 = vand.u32 %v564, 15
      %v585 = vand.u32 %v565, 15
      %vm586 = vcmp.ne.s32.totalorder %v580, 0
      %vm587 = vcmp.ne.s32.totalorder %v581, 0
      %vm588 = vcmp.ne.s32.totalorder %v582, 0
      %vm589 = vcmp.ne.s32.totalorder %v583, 0
      %vm590 = vcmp.ne.s32.totalorder %v584, 0
      %vm591 = vcmp.ne.s32.totalorder %v585, 0
      %vm592 = vmand %vm574, %vm586
      %vm593 = vmand %vm575, %vm587
      %vm594 = vmand %vm576, %vm588
      %vm595 = vmand %vm577, %vm589
      %vm596 = vmand %vm578, %vm590
      %vm597 = vmand %vm579, %vm591
      %v598 = vsel %vm592, 1.0, 0.0
      %v599 = vsel %vm593, 1.0, 0.0
      %v600 = vsel %vm594, 1.0, 0.0
      %v601 = vsel %vm595, 1.0, 0.0
      %v602 = vsel %vm596, 1.0, 0.0
      %v603 = vsel %vm597, 1.0, 0.0
      %v604 = vpack.c.bf16 %v599, %v598
      %v605 = vpack.c.bf16 %v601, %v600
      %v606 = vpack.c.bf16 %v603, %v602
      %v607 = vadd.s32 %v560, 1
      %v608 = vadd.s32 %v561, 1
      %v609 = vadd.s32 %v562, 1
      %v610 = vadd.s32 %v563, 1
      %v611 = vadd.s32 %v564, 1
      %v612 = vadd.s32 %v565, 1
      %vm613 = vcmp.eq.s32.totalorder %v567, %v607
      %vm614 = vcmp.eq.s32.totalorder %v567, %v608
      %vm615 = vcmp.eq.s32.totalorder %v567, %v609
      %vm616 = vcmp.eq.s32.totalorder %v567, %v610
      %vm617 = vcmp.eq.s32.totalorder %v567, %v611
      %vm618 = vcmp.eq.s32.totalorder %v567, %v612
      %vm619 = vcmp.ne.s32.totalorder %v580, 15
      %vm620 = vcmp.ne.s32.totalorder %v581, 15
      %vm621 = vcmp.ne.s32.totalorder %v582, 15
      %vm622 = vcmp.ne.s32.totalorder %v583, 15
      %vm623 = vcmp.ne.s32.totalorder %v584, 15
      %vm624 = vcmp.ne.s32.totalorder %v585, 15
      %vm625 = vmand %vm613, %vm619
      %vm626 = vmand %vm614, %vm620
      %vm627 = vmand %vm615, %vm621
      %vm628 = vmand %vm616, %vm622
      %vm629 = vmand %vm617, %vm623
      %vm630 = vmand %vm618, %vm624
      %v631 = vsel %vm625, 1.0, 0.0
      %v632 = vsel %vm626, 1.0, 0.0
      %v633 = vsel %vm627, 1.0, 0.0
      %v634 = vsel %vm628, 1.0, 0.0
      %v635 = vsel %vm629, 1.0, 0.0
      %v636 = vsel %vm630, 1.0, 0.0
      %v637 = vpack.c.bf16 %v632, %v631
      %v638 = vpack.c.bf16 %v634, %v633
      %v639 = vpack.c.bf16 %v636, %v635
      %vm640 = vcmask 392192
      %v642 = vsel %vm640, %v604, 0
      %v645 = vsel %vm640, %v605, 0
      %v648 = vsel %vm640, %v606, 0
      %650 = vmatprep.subr.bf16.mxu0 0
      %651 = vmatpush1.bf16.msra.mxu0 %v547
      %652 = vmatprep.subr.bf16.mxu0 0
      %653 = vmatpush1.bf16.msra.mxu0 %v548
      %654 = vmatprep.subr.bf16.mxu0 0
      %655 = vmatpush1.bf16.msra.mxu0 %v549
      %656 = vmatprep.subr.bf16.mxu0 0
      %657 = vmatpush1.bf16.msra.mxu0 0
      %658 = vmatprep.subr.bf16.mxu0 0
      %659 = vmatpush1.bf16.msra.mxu0 0
      %660 = vmatprep.subr.bf16.mxu0 0
      %661 = vmatpush1.bf16.msra.mxu0 0
      %662 = vmatprep.subr.bf16.mxu0 0
      %663 = vmatpush1.bf16.msra.mxu0 0
      %664 = vmatprep.subr.bf16.mxu0 0
      %665 = vmatpush1.bf16.msra.mxu0 0
      %666 = vmatprep.subr.bf16.mxu0 0
      %667 = vmatpush1.bf16.msra.mxu0 0
      %668 = vmatprep.subr.bf16.mxu0 0
      %669 = vmatpush1.bf16.msra.mxu0 0
      %670 = vmatprep.subr.bf16.mxu0 0
      %671 = vmatpush1.bf16.msra.mxu0 0
      %672 = vmatprep.subr.bf16.mxu0 0
      %673 = vmatpush1.bf16.msra.mxu0 0
      %674 = vmatprep.subr.bf16.mxu0 0
      %675 = vmatpush1.bf16.msra.mxu0 0
      %676 = vmatprep.subr.bf16.mxu0 0
      %677 = vmatpush1.bf16.msra.mxu0 0
      %678 = vmatprep.subr.bf16.mxu0 0
      %679 = vmatpush1.bf16.msra.mxu0 0
      %680 = vmatprep.subr.bf16.mxu0 0
      %681 = vmatpush1.bf16.msra.mxu0 0
      %682 = vmatprep.mubr.bf16.mxu0 0
      %683 = vmatmul.mubr.bf16.gmra.mrb[0].mxu0 %v642
      %v684 = vpop.f32.mrb[0].mxu0
      %v685 = vadd.f32 0.0, %v684
      %v686 = vpop.f32.mrb[0].mxu0
      %v687 = vpop.f32.mrb[0].mxu0
      %v688 = vadd.f32 0.0, %v687
      %v689 = vpop.f32.mrb[0].mxu0
      %690 = vmatprep.mubr.bf16.mxu0 0
      %691 = vmatmul.mubr.bf16.gmra.mrb[0].mxu0 %v645
      %v692 = vpop.f32.mrb[0].mxu0
      %v693 = vadd.f32 0.0, %v692
      %v694 = vpop.f32.mrb[0].mxu0
      %v695 = vpop.f32.mrb[0].mxu0
      %v696 = vadd.f32 0.0, %v695
      %v697 = vpop.f32.mrb[0].mxu0
      %698 = vmatprep.mubr.bf16.mxu0 0
      %699 = vmatmul.mubr.bf16.gmra.mrb[0].mxu0 %v648
      %v700 = vpop.f32.mrb[0].mxu0
      %v701 = vadd.f32 0.0, %v700
      %v702 = vpop.f32.mrb[0].mxu0
      %v703 = vpop.f32.mrb[0].mxu0
      %v704 = vadd.f32 0.0, %v703
      %v705 = vpop.f32.mrb[0].mxu0
      %706 = vdwg.mxu0
      %v707 = vpack.c.bf16 %v688, %v685
      %v708 = vpack.c.bf16 %v696, %v693
      %v709 = vpack.c.bf16 %v704, %v701
      %v711 = vsel %vm640, %v637, 0
      %v714 = vsel %vm640, %v638, 0
      %v717 = vsel %vm640, %v639, 0
      %719 = vmatprep.subr.bf16.mxu0 0
      %720 = vmatpush1.bf16.msra.mxu0 %v547
      %721 = vmatprep.subr.bf16.mxu0 0
      %722 = vmatpush1.bf16.msra.mxu0 %v548
      %723 = vmatprep.subr.bf16.mxu0 0
      %724 = vmatpush1.bf16.msra.mxu0 %v549
      %725 = vmatprep.subr.bf16.mxu0 0
      %726 = vmatpush1.bf16.msra.mxu0 0
      %727 = vmatprep.subr.bf16.mxu0 0
      %728 = vmatpush1.bf16.msra.mxu0 0
      %729 = vmatprep.subr.bf16.mxu0 0
      %730 = vmatpush1.bf16.msra.mxu0 0
      %731 = vmatprep.subr.bf16.mxu0 0
      %732 = vmatpush1.bf16.msra.mxu0 0
      %733 = vmatprep.subr.bf16.mxu0 0
      %734 = vmatpush1.bf16.msra.mxu0 0
      %735 = vmatprep.subr.bf16.mxu0 0
      %736 = vmatpush1.bf16.msra.mxu0 0
      %737 = vmatprep.subr.bf16.mxu0 0
      %738 = vmatpush1.bf16.msra.mxu0 0
      %739 = vmatprep.subr.bf16.mxu0 0
      %740 = vmatpush1.bf16.msra.mxu0 0
      %741 = vmatprep.subr.bf16.mxu0 0
      %742 = vmatpush1.bf16.msra.mxu0 0
      %743 = vmatprep.subr.bf16.mxu0 0
      %744 = vmatpush1.bf16.msra.mxu0 0
      %745 = vmatprep.subr.bf16.mxu0 0
      %746 = vmatpush1.bf16.msra.mxu0 0
      %747 = vmatprep.subr.bf16.mxu0 0
      %748 = vmatpush1.bf16.msra.mxu0 0
      %749 = vmatprep.subr.bf16.mxu0 0
      %750 = vmatpush1.bf16.msra.mxu0 0
      %751 = vmatprep.mubr.bf16.mxu0 0
      %752 = vmatmul.mubr.bf16.gmra.mrb[0].mxu0 %v711
      %v753 = vpop.f32.mrb[0].mxu0
      %v754 = vadd.f32 0.0, %v753
      %v755 = vpop.f32.mrb[0].mxu0
      %v756 = vpop.f32.mrb[0].mxu0
      %v757 = vadd.f32 0.0, %v756
      %v758 = vpop.f32.mrb[0].mxu0
      %759 = vmatprep.mubr.bf16.mxu0 0
      %760 = vmatmul.mubr.bf16.gmra.mrb[0].mxu0 %v714
      %v761 = vpop.f32.mrb[0].mxu0
      %v762 = vadd.f32 0.0, %v761
      %v763 = vpop.f32.mrb[0].mxu0
      %v764 = vpop.f32.mrb[0].mxu0
      %v765 = vadd.f32 0.0, %v764
      %v766 = vpop.f32.mrb[0].mxu0
      %767 = vmatprep.mubr.bf16.mxu0 0
      %768 = vmatmul.mubr.bf16.gmra.mrb[0].mxu0 %v717
      %v769 = vpop.f32.mrb[0].mxu0
      %v770 = vadd.f32 0.0, %v769
      %v771 = vpop.f32.mrb[0].mxu0
      %v772 = vpop.f32.mrb[0].mxu0
      %v773 = vadd.f32 0.0, %v772
      %v774 = vpop.f32.mrb[0].mxu0
      %775 = vdwg.mxu0
      %v776 = vpack.c.bf16 %v757, %v754
      %v777 = vpack.c.bf16 %v765, %v762
      %v778 = vpack.c.bf16 %v773, %v770
      %v779 = vld [vmem:[%s1] sm:$0xf]
      %v780 = vld [vmem:[%s1 + $0x4] sm:$0xf]
      %v781 = vld [vmem:[%s1 + $0x8] sm:$0xf]
      %v782 = vld [vmem:[%s1 + $0xc] sm:$0xf]
      %v783 = vld [vmem:[%s1 + $0x10] sm:$0xf]
      %v784 = vld [vmem:[%s1 + $0x14] sm:$0xf]
      %v785 = vld [vmem:[%s1 + $0x18] sm:$0xf]
      %v786 = vld [vmem:[%s1 + $0x1c] sm:$0xf]
      %v795 = vunpack.c.l.b16 %v779
      %v796 = vunpack.c.l.b16 %v780
      %v797 = vunpack.c.l.b16 %v781
      %v798 = vunpack.c.l.b16 %v782
      %v799 = vunpack.c.l.b16 %v783
      %v800 = vunpack.c.l.b16 %v784
      %v801 = vunpack.c.l.b16 %v785
      %v802 = vunpack.c.l.b16 %v786
      %v803 = vpack.c.b16 %v796, %v795
      %v804 = vpack.c.b16 %v798, %v797
      %v805 = vpack.c.b16 %v800, %v799
      %v806 = vpack.c.b16 %v802, %v801
      %vm811 = vcmask 523264
      %v813 = vsel %vm811, %v707, 0
      %v816 = vsel %vm811, %v708, 0
      %v819 = vsel %vm811, %v709, 0
      %821 = vmatprep.subr.bf16.mxu0 0
      %822 = vmatpush1.bf16.msra.mxu0 %v803
      %823 = vmatprep.subr.bf16.mxu0 0
      %824 = vmatpush1.bf16.msra.mxu0 %v804
      %825 = vmatprep.subr.bf16.mxu0 0
      %826 = vmatpush1.bf16.msra.mxu0 %v805
      %827 = vmatprep.subr.bf16.mxu0 0
      %828 = vmatpush1.bf16.msra.mxu0 %v806
      %829 = vmatprep.subr.bf16.mxu0 0
      %830 = vmatpush1.bf16.msra.mxu0 0
      %831 = vmatprep.subr.bf16.mxu0 0
      %832 = vmatpush1.bf16.msra.mxu0 0
      %833 = vmatprep.subr.bf16.mxu0 0
      %834 = vmatpush1.bf16.msra.mxu0 0
      %835 = vmatprep.subr.bf16.mxu0 0
      %836 = vmatpush1.bf16.msra.mxu0 0
      %837 = vmatprep.subr.bf16.mxu0 0
      %838 = vmatpush1.bf16.msra.mxu0 0
      %839 = vmatprep.subr.bf16.mxu0 0
      %840 = vmatpush1.bf16.msra.mxu0 0
      %841 = vmatprep.subr.bf16.mxu0 0
      %842 = vmatpush1.bf16.msra.mxu0 0
      %843 = vmatprep.subr.bf16.mxu0 0
      %844 = vmatpush1.bf16.msra.mxu0 0
      %845 = vmatprep.subr.bf16.mxu0 0
      %846 = vmatpush1.bf16.msra.mxu0 0
      %847 = vmatprep.subr.bf16.mxu0 0
      %848 = vmatpush1.bf16.msra.mxu0 0
      %849 = vmatprep.subr.bf16.mxu0 0
      %850 = vmatpush1.bf16.msra.mxu0 0
      %851 = vmatprep.subr.bf16.mxu0 0
      %852 = vmatpush1.bf16.msra.mxu0 0
      %853 = vmatprep.mubr.bf16.mxu0 0
      %854 = vmatmul.mubr.bf16.gmra.mrb[0].mxu0 %v813
      %v855 = vpop.f32.mrb[0].mxu0
      %v856 = vadd.f32 0.0, %v855
      %v857 = vpop.f32.mrb[0].mxu0
      %v858 = vpop.f32.mrb[0].mxu0
      %v859 = vadd.f32 0.0, %v858
      %v860 = vpop.f32.mrb[0].mxu0
      %861 = vmatprep.mubr.bf16.mxu0 0
      %862 = vmatmul.mubr.bf16.gmra.mrb[0].mxu0 %v816
      %v863 = vpop.f32.mrb[0].mxu0
      %v864 = vadd.f32 0.0, %v863
      %v865 = vpop.f32.mrb[0].mxu0
      %v866 = vpop.f32.mrb[0].mxu0
      %v867 = vadd.f32 0.0, %v866
      %v868 = vpop.f32.mrb[0].mxu0
      %869 = vmatprep.mubr.bf16.mxu0 0
      %870 = vmatmul.mubr.bf16.gmra.mrb[0].mxu0 %v819
      %v871 = vpop.f32.mrb[0].mxu0
      %v872 = vadd.f32 0.0, %v871
      %v873 = vpop.f32.mrb[0].mxu0
      %v874 = vpop.f32.mrb[0].mxu0
      %v875 = vadd.f32 0.0, %v874
      %v876 = vpop.f32.mrb[0].mxu0
      %877 = vdwg.mxu0
      %v886 = vunpack.c.l.b16 %v551
      %v887 = vunpack.c.l.b16 %v552
      %v888 = vunpack.c.l.b16 %v553
      %v889 = vunpack.c.l.b16 %v554
      %v890 = vunpack.c.l.b16 %v555
      %v891 = vunpack.c.l.b16 %v556
      %v892 = vunpack.c.l.b16 %v557
      %v893 = vunpack.c.l.b16 %v558
      %v894 = vpack.c.b16 %v887, %v886
      %v895 = vpack.c.b16 %v889, %v888
      %v896 = vpack.c.b16 %v891, %v890
      %v897 = vpack.c.b16 %v893, %v892
      %v903 = vsel %vm811, %v547, 0
      %v906 = vsel %vm811, %v548, 0
      %v909 = vsel %vm811, %v549, 0
      %911 = vmatprep.subr.bf16.mxu0 0
      %912 = vmatpush1.bf16.msra.mxu0 %v894
      %913 = vmatprep.subr.bf16.mxu0 0
      %914 = vmatpush1.bf16.msra.mxu0 %v895
      %915 = vmatprep.subr.bf16.mxu0 0
      %916 = vmatpush1.bf16.msra.mxu0 %v896
      %917 = vmatprep.subr.bf16.mxu0 0
      %918 = vmatpush1.bf16.msra.mxu0 %v897
      %919 = vmatprep.subr.bf16.mxu0 0
      %920 = vmatpush1.bf16.msra.mxu0 0
      %921 = vmatprep.subr.bf16.mxu0 0
      %922 = vmatpush1.bf16.msra.mxu0 0
      %923 = vmatprep.subr.bf16.mxu0 0
      %924 = vmatpush1.bf16.msra.mxu0 0
      %925 = vmatprep.subr.bf16.mxu0 0
      %926 = vmatpush1.bf16.msra.mxu0 0
      %927 = vmatprep.subr.bf16.mxu0 0
      %928 = vmatpush1.bf16.msra.mxu0 0
      %929 = vmatprep.subr.bf16.mxu0 0
      %930 = vmatpush1.bf16.msra.mxu0 0
      %931 = vmatprep.subr.bf16.mxu0 0
      %932 = vmatpush1.bf16.msra.mxu0 0
      %933 = vmatprep.subr.bf16.mxu0 0
      %934 = vmatpush1.bf16.msra.mxu0 0
      %935 = vmatprep.subr.bf16.mxu0 0
      %936 = vmatpush1.bf16.msra.mxu0 0
      %937 = vmatprep.subr.bf16.mxu0 0
      %938 = vmatpush1.bf16.msra.mxu0 0
      %939 = vmatprep.subr.bf16.mxu0 0
      %940 = vmatpush1.bf16.msra.mxu0 0
      %941 = vmatprep.subr.bf16.mxu0 0
      %942 = vmatpush1.bf16.msra.mxu0 0
      %943 = vmatprep.mubr.bf16.mxu0 0
      %944 = vmatmul.mubr.bf16.gmra.mrb[0].mxu0 %v903
      %v945 = vpop.f32.mrb[0].mxu0
      %v946 = vadd.f32 %v856, %v945
      %v947 = vpop.f32.mrb[0].mxu0
      %v948 = vpop.f32.mrb[0].mxu0
      %v949 = vadd.f32 %v859, %v948
      %v950 = vpop.f32.mrb[0].mxu0
      %951 = vmatprep.mubr.bf16.mxu0 0
      %952 = vmatmul.mubr.bf16.gmra.mrb[0].mxu0 %v906
      %v953 = vpop.f32.mrb[0].mxu0
      %v954 = vadd.f32 %v864, %v953
      %v955 = vpop.f32.mrb[0].mxu0
      %v956 = vpop.f32.mrb[0].mxu0
      %v957 = vadd.f32 %v867, %v956
      %v958 = vpop.f32.mrb[0].mxu0
      %959 = vmatprep.mubr.bf16.mxu0 0
      %960 = vmatmul.mubr.bf16.gmra.mrb[0].mxu0 %v909
      %v961 = vpop.f32.mrb[0].mxu0
      %v962 = vadd.f32 %v872, %v961
      %v963 = vpop.f32.mrb[0].mxu0
      %v964 = vpop.f32.mrb[0].mxu0
      %v965 = vadd.f32 %v875, %v964
      %v966 = vpop.f32.mrb[0].mxu0
      %967 = vdwg.mxu0
      %s968 = scalar_lea.vmem %s1, 64
      %v969 = vld [vmem:[%s968] sm:$0xf]
      %v970 = vld [vmem:[%s968 + $0x4] sm:$0xf]
      %v971 = vld [vmem:[%s968 + $0x8] sm:$0xf]
      %v972 = vld [vmem:[%s968 + $0xc] sm:$0xf]
      %v973 = vld [vmem:[%s968 + $0x10] sm:$0xf]
      %v974 = vld [vmem:[%s968 + $0x14] sm:$0xf]
      %v975 = vld [vmem:[%s968 + $0x18] sm:$0xf]
      %v976 = vld [vmem:[%s968 + $0x1c] sm:$0xf]
      %v985 = vunpack.c.l.b16 %v969
      %v986 = vunpack.c.l.b16 %v970
      %v987 = vunpack.c.l.b16 %v971
      %v988 = vunpack.c.l.b16 %v972
      %v989 = vunpack.c.l.b16 %v973
      %v990 = vunpack.c.l.b16 %v974
      %v991 = vunpack.c.l.b16 %v975
      %v992 = vunpack.c.l.b16 %v976
      %v993 = vpack.c.b16 %v986, %v985
      %v994 = vpack.c.b16 %v988, %v987
      %v995 = vpack.c.b16 %v990, %v989
      %v996 = vpack.c.b16 %v992, %v991
      %v1002 = vsel %vm811, %v776, 0
      %v1005 = vsel %vm811, %v777, 0
      %v1008 = vsel %vm811, %v778, 0
      %1010 = vmatprep.subr.bf16.mxu0 0
      %1011 = vmatpush1.bf16.msra.mxu0 %v993
      %1012 = vmatprep.subr.bf16.mxu0 0
      %1013 = vmatpush1.bf16.msra.mxu0 %v994
      %1014 = vmatprep.subr.bf16.mxu0 0
      %1015 = vmatpush1.bf16.msra.mxu0 %v995
      %1016 = vmatprep.subr.bf16.mxu0 0
      %1017 = vmatpush1.bf16.msra.mxu0 %v996
      %1018 = vmatprep.subr.bf16.mxu0 0
      %1019 = vmatpush1.bf16.msra.mxu0 0
      %1020 = vmatprep.subr.bf16.mxu0 0
      %1021 = vmatpush1.bf16.msra.mxu0 0
      %1022 = vmatprep.subr.bf16.mxu0 0
      %1023 = vmatpush1.bf16.msra.mxu0 0
      %1024 = vmatprep.subr.bf16.mxu0 0
      %1025 = vmatpush1.bf16.msra.mxu0 0
      %1026 = vmatprep.subr.bf16.mxu0 0
      %1027 = vmatpush1.bf16.msra.mxu0 0
      %1028 = vmatprep.subr.bf16.mxu0 0
      %1029 = vmatpush1.bf16.msra.mxu0 0
      %1030 = vmatprep.subr.bf16.mxu0 0
      %1031 = vmatpush1.bf16.msra.mxu0 0
      %1032 = vmatprep.subr.bf16.mxu0 0
      %1033 = vmatpush1.bf16.msra.mxu0 0
      %1034 = vmatprep.subr.bf16.mxu0 0
      %1035 = vmatpush1.bf16.msra.mxu0 0
      %1036 = vmatprep.subr.bf16.mxu0 0
      %1037 = vmatpush1.bf16.msra.mxu0 0
      %1038 = vmatprep.subr.bf16.mxu0 0
      %1039 = vmatpush1.bf16.msra.mxu0 0
      %1040 = vmatprep.subr.bf16.mxu0 0
      %1041 = vmatpush1.bf16.msra.mxu0 0
      %1042 = vmatprep.mubr.bf16.mxu0 0
      %1043 = vmatmul.mubr.bf16.gmra.mrb[0].mxu0 %v1002
      %v1044 = vpop.f32.mrb[0].mxu0
      %v1045 = vadd.f32 0.0, %v1044
      %v1046 = vpop.f32.mrb[0].mxu0
      %v1047 = vpop.f32.mrb[0].mxu0
      %v1048 = vadd.f32 0.0, %v1047
      %v1049 = vpop.f32.mrb[0].mxu0
      %1050 = vmatprep.mubr.bf16.mxu0 0
      %1051 = vmatmul.mubr.bf16.gmra.mrb[0].mxu0 %v1005
      %v1052 = vpop.f32.mrb[0].mxu0
      %v1053 = vadd.f32 0.0, %v1052
      %v1054 = vpop.f32.mrb[0].mxu0
      %v1055 = vpop.f32.mrb[0].mxu0
      %v1056 = vadd.f32 0.0, %v1055
      %v1057 = vpop.f32.mrb[0].mxu0
      %1058 = vmatprep.mubr.bf16.mxu0 0
      %1059 = vmatmul.mubr.bf16.gmra.mrb[0].mxu0 %v1008
      %v1060 = vpop.f32.mrb[0].mxu0
      %v1061 = vadd.f32 0.0, %v1060
      %v1062 = vpop.f32.mrb[0].mxu0
      %v1063 = vpop.f32.mrb[0].mxu0
      %v1064 = vadd.f32 0.0, %v1063
      %v1065 = vpop.f32.mrb[0].mxu0
      %1066 = vdwg.mxu0
      %v1067 = vadd.f32 %v946, %v1045
      %v1068 = vadd.f32 %v949, %v1048
      %v1069 = vadd.f32 %v954, %v1053
      %v1070 = vadd.f32 %v957, %v1056
      %v1071 = vadd.f32 %v962, %v1061
      %v1072 = vadd.f32 %v965, %v1064
      %v1073 = vld [vmem:[%s2] sm:$0x1]
      %v1075 = vlaneseq
      %v1076 = vshrl.u32 %v1075, 7
      %v1077 = vsub.s32 0, %v1076
      %v1078 = vrot.slane %v1073, %v1077
      %v1080 = vadd.f32 %v1067, %v1078
      %v1081 = vadd.f32 %v1068, %v1078
      %v1082 = vadd.f32 %v1069, %v1078
      %v1083 = vadd.f32 %v1070, %v1078
      %v1084 = vadd.f32 %v1071, %v1078
      %v1085 = vadd.f32 %v1072, %v1078
      %v1086 = vmax.f32 %v1080, 0.0
      %v1087 = vmax.f32 %v1081, 0.0
      %v1088 = vmax.f32 %v1082, 0.0
      %v1089 = vmax.f32 %v1083, 0.0
      %v1090 = vmax.f32 %v1084, 0.0
      %v1091 = vmax.f32 %v1085, 0.0
      %1092 = vst [vmem:[%s521] sm:$0xff] %v1086
      %1093 = vst [vmem:[%s521 + $0x8] sm:$0xff] %v1087
      %1094 = vst [vmem:[%s521 + $0x10] sm:$0xff] %v1088
      %1095 = vst [vmem:[%s521 + $0x18] sm:$0xff] %v1089
      %1096 = vst [vmem:[%s521 + $0x20] sm:$0xff] %v1090
      %1097 = vst [vmem:[%s521 + $0x28] sm:$0xff] %v1091
      %v1098 = vpack.c.bf16 %v1087, %v1086
      %v1099 = vpack.c.bf16 %v1089, %v1088
      %v1100 = vpack.c.bf16 %v1091, %v1090
      %v1101 = vmul.u32 %v560, 2
      %v1102 = vmul.u32 %v561, 2
      %v1103 = vmul.u32 %v562, 2
      %vm1104 = vcmp.eq.s32.totalorder %v567, %v1101
      %vm1105 = vcmp.eq.s32.totalorder %v567, %v1102
      %vm1106 = vcmp.eq.s32.totalorder %v567, %v1103
      %v1107 = vsel %vm1104, 1.0, 0.0
      %v1108 = vsel %vm1105, 1.0, 0.0
      %v1109 = vsel %vm1106, 1.0, 0.0
      %v1110 = vpack.c.bf16 %v1108, %v1107
      %v1111 = vpack.c.bf16 %v1109, %v1109
      %v1112 = vadd.s32 %v1101, 1
      %v1113 = vadd.s32 %v1102, 1
      %v1114 = vadd.s32 %v1103, 1
      %vm1115 = vcmp.eq.s32.totalorder %v567, %v1112
      %vm1116 = vcmp.eq.s32.totalorder %v567, %v1113
      %vm1117 = vcmp.eq.s32.totalorder %v567, %v1114
      %v1118 = vsel %vm1115, 1.0, 0.0
      %v1119 = vsel %vm1116, 1.0, 0.0
      %v1120 = vsel %vm1117, 1.0, 0.0
      %v1121 = vpack.c.bf16 %v1119, %v1118
      %v1122 = vpack.c.bf16 %v1120, %v1120
      %v1124 = vsel %vm640, %v1110, 0
      %v1127 = vsel %vm640, %v1111, 0
      %1129 = vmatprep.subr.bf16.mxu0 0
      %1130 = vmatpush1.bf16.msra.mxu0 %v1098
      %1131 = vmatprep.subr.bf16.mxu0 0
      %1132 = vmatpush1.bf16.msra.mxu0 %v1099
      %1133 = vmatprep.subr.bf16.mxu0 0
      %1134 = vmatpush1.bf16.msra.mxu0 %v1100
      %1135 = vmatprep.subr.bf16.mxu0 0
      %1136 = vmatpush1.bf16.msra.mxu0 0
      %1137 = vmatprep.subr.bf16.mxu0 0
      %1138 = vmatpush1.bf16.msra.mxu0 0
      %1139 = vmatprep.subr.bf16.mxu0 0
      %1140 = vmatpush1.bf16.msra.mxu0 0
      %1141 = vmatprep.subr.bf16.mxu0 0
      %1142 = vmatpush1.bf16.msra.mxu0 0
      %1143 = vmatprep.subr.bf16.mxu0 0
      %1144 = vmatpush1.bf16.msra.mxu0 0
      %1145 = vmatprep.subr.bf16.mxu0 0
      %1146 = vmatpush1.bf16.msra.mxu0 0
      %1147 = vmatprep.subr.bf16.mxu0 0
      %1148 = vmatpush1.bf16.msra.mxu0 0
      %1149 = vmatprep.subr.bf16.mxu0 0
      %1150 = vmatpush1.bf16.msra.mxu0 0
      %1151 = vmatprep.subr.bf16.mxu0 0
      %1152 = vmatpush1.bf16.msra.mxu0 0
      %1153 = vmatprep.subr.bf16.mxu0 0
      %1154 = vmatpush1.bf16.msra.mxu0 0
      %1155 = vmatprep.subr.bf16.mxu0 0
      %1156 = vmatpush1.bf16.msra.mxu0 0
      %1157 = vmatprep.subr.bf16.mxu0 0
      %1158 = vmatpush1.bf16.msra.mxu0 0
      %1159 = vmatprep.subr.bf16.mxu0 0
      %1160 = vmatpush1.bf16.msra.mxu0 0
      %1161 = vmatprep.mubr.bf16.mxu0 0
      %1162 = vmatmul.mubr.bf16.gmra.mrb[0].mxu0 %v1124
      %v1163 = vpop.f32.mrb[0].mxu0
      %v1164 = vadd.f32 0.0, %v1163
      %v1165 = vpop.f32.mrb[0].mxu0
      %v1166 = vpop.f32.mrb[0].mxu0
      %v1167 = vadd.f32 0.0, %v1166
      %v1168 = vpop.f32.mrb[0].mxu0
      %1169 = vmatprep.mubr.bf16.mxu0 0
      %1170 = vmatmul.mubr.bf16.gmra.mrb[0].mxu0 %v1127
      %v1171 = vpop.f32.mrb[0].mxu0
      %v1172 = vadd.f32 0.0, %v1171
      %v1173 = vpop.f32.mrb[0].mxu0
      %v1174 = vpop.f32.mrb[0].mxu0
      %v1175 = vpop.f32.mrb[0].mxu0
      %1176 = vdwg.mxu0
      %v1178 = vsel %vm640, %v1121, 0
      %v1181 = vsel %vm640, %v1122, 0
      %1183 = vmatprep.subr.bf16.mxu0 0
      %1184 = vmatpush1.bf16.msra.mxu0 %v1098
      %1185 = vmatprep.subr.bf16.mxu0 0
      %1186 = vmatpush1.bf16.msra.mxu0 %v1099
      %1187 = vmatprep.subr.bf16.mxu0 0
      %1188 = vmatpush1.bf16.msra.mxu0 %v1100
      %1189 = vmatprep.subr.bf16.mxu0 0
      %1190 = vmatpush1.bf16.msra.mxu0 0
      %1191 = vmatprep.subr.bf16.mxu0 0
      %1192 = vmatpush1.bf16.msra.mxu0 0
      %1193 = vmatprep.subr.bf16.mxu0 0
      %1194 = vmatpush1.bf16.msra.mxu0 0
      %1195 = vmatprep.subr.bf16.mxu0 0
      %1196 = vmatpush1.bf16.msra.mxu0 0
      %1197 = vmatprep.subr.bf16.mxu0 0
      %1198 = vmatpush1.bf16.msra.mxu0 0
      %1199 = vmatprep.subr.bf16.mxu0 0
      %1200 = vmatpush1.bf16.msra.mxu0 0
      %1201 = vmatprep.subr.bf16.mxu0 0
      %1202 = vmatpush1.bf16.msra.mxu0 0
      %1203 = vmatprep.subr.bf16.mxu0 0
      %1204 = vmatpush1.bf16.msra.mxu0 0
      %1205 = vmatprep.subr.bf16.mxu0 0
      %1206 = vmatpush1.bf16.msra.mxu0 0
      %1207 = vmatprep.subr.bf16.mxu0 0
      %1208 = vmatpush1.bf16.msra.mxu0 0
      %1209 = vmatprep.subr.bf16.mxu0 0
      %1210 = vmatpush1.bf16.msra.mxu0 0
      %1211 = vmatprep.subr.bf16.mxu0 0
      %1212 = vmatpush1.bf16.msra.mxu0 0
      %1213 = vmatprep.subr.bf16.mxu0 0
      %1214 = vmatpush1.bf16.msra.mxu0 0
      %1215 = vmatprep.mubr.bf16.mxu0 0
      %1216 = vmatmul.mubr.bf16.gmra.mrb[0].mxu0 %v1178
      %v1217 = vpop.f32.mrb[0].mxu0
      %v1218 = vadd.f32 0.0, %v1217
      %v1219 = vpop.f32.mrb[0].mxu0
      %v1220 = vpop.f32.mrb[0].mxu0
      %v1221 = vadd.f32 0.0, %v1220
      %v1222 = vpop.f32.mrb[0].mxu0
      %1223 = vmatprep.mubr.bf16.mxu0 0
      %1224 = vmatmul.mubr.bf16.gmra.mrb[0].mxu0 %v1181
      %v1225 = vpop.f32.mrb[0].mxu0
      %v1226 = vadd.f32 0.0, %v1225
      %v1227 = vpop.f32.mrb[0].mxu0
      %v1228 = vpop.f32.mrb[0].mxu0
      %v1229 = vpop.f32.mrb[0].mxu0
      %1230 = vdwg.mxu0
      %v1231 = vmax.f32 %v1164, %v1218
      %v1232 = vmax.f32 %v1167, %v1221
      %v1233 = vmax.f32 %v1172, %v1226
      %v1234 = vpack.c.bf16 %v1232, %v1231
      %v1235 = vpack.c.bf16 %v1233, %v1233
      %v1236 = vadd.s32 %v560, 48
      %v1237 = vadd.s32 %v560, 56
      %v1238 = vadd.s32 %v560, 64
      %v1239 = vadd.s32 %v560, 72
      %v1240 = vadd.s32 %v560, 80
      %v1241 = vadd.s32 %v560, 88
      %v1242 = vadd.s32 %v560, 96
      %v1243 = vadd.s32 %v560, 104
      %v1244 = vadd.s32 %v560, 112
      %v1245 = vadd.s32 %v560, 120
      %v1246 = vshra.s32 %v560, 3
      %v1247 = vshra.s32 %v561, 3
      %v1248 = vshra.s32 %v562, 3
      %v1249 = vshra.s32 %v563, 3
      %v1250 = vshra.s32 %v564, 3
      %v1251 = vshra.s32 %v565, 3
      %v1252 = vshra.s32 %v1236, 3
      %v1253 = vshra.s32 %v1237, 3
      %v1254 = vshra.s32 %v1238, 3
      %v1255 = vshra.s32 %v1239, 3
      %v1256 = vshra.s32 %v1240, 3
      %v1257 = vshra.s32 %v1241, 3
      %v1258 = vshra.s32 %v1242, 3
      %v1259 = vshra.s32 %v1243, 3
      %v1260 = vshra.s32 %v1244, 3
      %v1261 = vshra.s32 %v1245, 3
      %v1262 = vshra.s32 %v567, 3
      %v1263 = vmul.u32 %v1262, 2
      %vm1264 = vcmp.eq.s32.totalorder %v1246, %v1263
      %vm1265 = vcmp.eq.s32.totalorder %v1247, %v1263
      %vm1266 = vcmp.eq.s32.totalorder %v1248, %v1263
      %vm1267 = vcmp.eq.s32.totalorder %v1249, %v1263
      %vm1268 = vcmp.eq.s32.totalorder %v1250, %v1263
      %vm1269 = vcmp.eq.s32.totalorder %v1251, %v1263
      %vm1270 = vcmp.eq.s32.totalorder %v1252, %v1263
      %vm1271 = vcmp.eq.s32.totalorder %v1253, %v1263
      %vm1272 = vcmp.eq.s32.totalorder %v1254, %v1263
      %vm1273 = vcmp.eq.s32.totalorder %v1255, %v1263
      %vm1274 = vcmp.eq.s32.totalorder %v1256, %v1263
      %vm1275 = vcmp.eq.s32.totalorder %v1257, %v1263
      %vm1276 = vcmp.eq.s32.totalorder %v1258, %v1263
      %vm1277 = vcmp.eq.s32.totalorder %v1259, %v1263
      %vm1278 = vcmp.eq.s32.totalorder %v1260, %v1263
      %vm1279 = vcmp.eq.s32.totalorder %v1261, %v1263
      %v1280 = vand.u32 %v560, 7
      %v1281 = vand.u32 %v561, 7
      %v1282 = vand.u32 %v562, 7
      %v1283 = vand.u32 %v563, 7
      %v1284 = vand.u32 %v564, 7
      %v1285 = vand.u32 %v565, 7
      %v1286 = vand.u32 %v1236, 7
      %v1287 = vand.u32 %v1237, 7
      %v1288 = vand.u32 %v1238, 7
      %v1289 = vand.u32 %v1239, 7
      %v1290 = vand.u32 %v1240, 7
      %v1291 = vand.u32 %v1241, 7
      %v1292 = vand.u32 %v1242, 7
      %v1293 = vand.u32 %v1243, 7
      %v1294 = vand.u32 %v1244, 7
      %v1295 = vand.u32 %v1245, 7
      %v1296 = vand.u32 %v567, 7
      %vm1297 = vcmp.eq.s32.totalorder %v1280, %v1296
      %vm1298 = vcmp.eq.s32.totalorder %v1281, %v1296
      %vm1299 = vcmp.eq.s32.totalorder %v1282, %v1296
      %vm1300 = vcmp.eq.s32.totalorder %v1283, %v1296
      %vm1301 = vcmp.eq.s32.totalorder %v1284, %v1296
      %vm1302 = vcmp.eq.s32.totalorder %v1285, %v1296
      %vm1303 = vcmp.eq.s32.totalorder %v1286, %v1296
      %vm1304 = vcmp.eq.s32.totalorder %v1287, %v1296
      %vm1305 = vcmp.eq.s32.totalorder %v1288, %v1296
      %vm1306 = vcmp.eq.s32.totalorder %v1289, %v1296
      %vm1307 = vcmp.eq.s32.totalorder %v1290, %v1296
      %vm1308 = vcmp.eq.s32.totalorder %v1291, %v1296
      %vm1309 = vcmp.eq.s32.totalorder %v1292, %v1296
      %vm1310 = vcmp.eq.s32.totalorder %v1293, %v1296
      %vm1311 = vcmp.eq.s32.totalorder %v1294, %v1296
      %vm1312 = vcmp.eq.s32.totalorder %v1295, %v1296
      %vm1313 = vmand %vm1264, %vm1297
      %vm1314 = vmand %vm1265, %vm1298
      %vm1315 = vmand %vm1266, %vm1299
      %vm1316 = vmand %vm1267, %vm1300
      %vm1317 = vmand %vm1268, %vm1301
      %vm1318 = vmand %vm1269, %vm1302
      %vm1319 = vmand %vm1270, %vm1303
      %vm1320 = vmand %vm1271, %vm1304
      %vm1321 = vmand %vm1272, %vm1305
      %vm1322 = vmand %vm1273, %vm1306
      %vm1323 = vmand %vm1274, %vm1307
      %vm1324 = vmand %vm1275, %vm1308
      %vm1325 = vmand %vm1276, %vm1309
      %vm1326 = vmand %vm1277, %vm1310
      %vm1327 = vmand %vm1278, %vm1311
      %vm1328 = vmand %vm1279, %vm1312
      %v1329 = vsel %vm1313, 1.0, 0.0
      %v1330 = vsel %vm1314, 1.0, 0.0
      %v1331 = vsel %vm1315, 1.0, 0.0
      %v1332 = vsel %vm1316, 1.0, 0.0
      %v1333 = vsel %vm1317, 1.0, 0.0
      %v1334 = vsel %vm1318, 1.0, 0.0
      %v1335 = vsel %vm1319, 1.0, 0.0
      %v1336 = vsel %vm1320, 1.0, 0.0
      %v1337 = vsel %vm1321, 1.0, 0.0
      %v1338 = vsel %vm1322, 1.0, 0.0
      %v1339 = vsel %vm1323, 1.0, 0.0
      %v1340 = vsel %vm1324, 1.0, 0.0
      %v1341 = vsel %vm1325, 1.0, 0.0
      %v1342 = vsel %vm1326, 1.0, 0.0
      %v1343 = vsel %vm1327, 1.0, 0.0
      %v1344 = vsel %vm1328, 1.0, 0.0
      %v1345 = vpack.c.bf16 %v1330, %v1329
      %v1346 = vpack.c.bf16 %v1332, %v1331
      %v1347 = vpack.c.bf16 %v1334, %v1333
      %v1348 = vpack.c.bf16 %v1336, %v1335
      %v1349 = vpack.c.bf16 %v1338, %v1337
      %v1350 = vpack.c.bf16 %v1340, %v1339
      %v1351 = vpack.c.bf16 %v1342, %v1341
      %v1352 = vpack.c.bf16 %v1344, %v1343
      %v1353 = vadd.s32 %v1263, 1
      %vm1354 = vcmp.eq.s32.totalorder %v1246, %v1353
      %vm1355 = vcmp.eq.s32.totalorder %v1247, %v1353
      %vm1356 = vcmp.eq.s32.totalorder %v1248, %v1353
      %vm1357 = vcmp.eq.s32.totalorder %v1249, %v1353
      %vm1358 = vcmp.eq.s32.totalorder %v1250, %v1353
      %vm1359 = vcmp.eq.s32.totalorder %v1251, %v1353
      %vm1360 = vcmp.eq.s32.totalorder %v1252, %v1353
      %vm1361 = vcmp.eq.s32.totalorder %v1253, %v1353
      %vm1362 = vcmp.eq.s32.totalorder %v1254, %v1353
      %vm1363 = vcmp.eq.s32.totalorder %v1255, %v1353
      %vm1364 = vcmp.eq.s32.totalorder %v1256, %v1353
      %vm1365 = vcmp.eq.s32.totalorder %v1257, %v1353
      %vm1366 = vcmp.eq.s32.totalorder %v1258, %v1353
      %vm1367 = vcmp.eq.s32.totalorder %v1259, %v1353
      %vm1368 = vcmp.eq.s32.totalorder %v1260, %v1353
      %vm1369 = vcmp.eq.s32.totalorder %v1261, %v1353
      %vm1370 = vmand %vm1354, %vm1297
      %vm1371 = vmand %vm1355, %vm1298
      %vm1372 = vmand %vm1356, %vm1299
      %vm1373 = vmand %vm1357, %vm1300
      %vm1374 = vmand %vm1358, %vm1301
      %vm1375 = vmand %vm1359, %vm1302
      %vm1376 = vmand %vm1360, %vm1303
      %vm1377 = vmand %vm1361, %vm1304
      %vm1378 = vmand %vm1362, %vm1305
      %vm1379 = vmand %vm1363, %vm1306
      %vm1380 = vmand %vm1364, %vm1307
      %vm1381 = vmand %vm1365, %vm1308
      %vm1382 = vmand %vm1366, %vm1309
      %vm1383 = vmand %vm1367, %vm1310
      %vm1384 = vmand %vm1368, %vm1311
      %vm1385 = vmand %vm1369, %vm1312
      %v1386 = vsel %vm1370, 1.0, 0.0
      %v1387 = vsel %vm1371, 1.0, 0.0
      %v1388 = vsel %vm1372, 1.0, 0.0
      %v1389 = vsel %vm1373, 1.0, 0.0
      %v1390 = vsel %vm1374, 1.0, 0.0
      %v1391 = vsel %vm1375, 1.0, 0.0
      %v1392 = vsel %vm1376, 1.0, 0.0
      %v1393 = vsel %vm1377, 1.0, 0.0
      %v1394 = vsel %vm1378, 1.0, 0.0
      %v1395 = vsel %vm1379, 1.0, 0.0
      %v1396 = vsel %vm1380, 1.0, 0.0
      %v1397 = vsel %vm1381, 1.0, 0.0
      %v1398 = vsel %vm1382, 1.0, 0.0
      %v1399 = vsel %vm1383, 1.0, 0.0
      %v1400 = vsel %vm1384, 1.0, 0.0
      %v1401 = vsel %vm1385, 1.0, 0.0
      %v1402 = vpack.c.bf16 %v1387, %v1386
      %v1403 = vpack.c.bf16 %v1389, %v1388
      %v1404 = vpack.c.bf16 %v1391, %v1390
      %v1405 = vpack.c.bf16 %v1393, %v1392
      %v1406 = vpack.c.bf16 %v1395, %v1394
      %v1407 = vpack.c.bf16 %v1397, %v1396
      %v1408 = vpack.c.bf16 %v1399, %v1398
      %v1409 = vpack.c.bf16 %v1401, %v1400
      %1410 = vmatprep.subr.bf16.mxu0 0
      %1411 = vmatpush1.bf16.msra.mxu0 %v1345
      %1412 = vmatprep.subr.bf16.mxu0 0
      %1413 = vmatpush1.bf16.msra.mxu0 %v1346
      %1414 = vmatprep.subr.bf16.mxu0 0
      %1415 = vmatpush1.bf16.msra.mxu0 %v1347
      %1416 = vmatprep.subr.bf16.mxu0 0
      %1417 = vmatpush1.bf16.msra.mxu0 %v1348
      %1418 = vmatprep.subr.bf16.mxu0 0
      %1419 = vmatpush1.bf16.msra.mxu0 %v1349
      %1420 = vmatprep.subr.bf16.mxu0 0
      %1421 = vmatpush1.bf16.msra.mxu0 %v1350
      %1422 = vmatprep.subr.bf16.mxu0 0
      %1423 = vmatpush1.bf16.msra.mxu0 %v1351
      %1424 = vmatprep.subr.bf16.mxu0 0
      %1425 = vmatpush1.bf16.msra.mxu0 %v1352
      %1426 = vmatprep.subr.bf16.mxu0 0
      %1427 = vmatpush1.bf16.msra.mxu0 0
      %1428 = vmatprep.subr.bf16.mxu0 0
      %1429 = vmatpush1.bf16.msra.mxu0 0
      %1430 = vmatprep.subr.bf16.mxu0 0
      %1431 = vmatpush1.bf16.msra.mxu0 0
      %1432 = vmatprep.subr.bf16.mxu0 0
      %1433 = vmatpush1.bf16.msra.mxu0 0
      %1434 = vmatprep.subr.bf16.mxu0 0
      %1435 = vmatpush1.bf16.msra.mxu0 0
      %1436 = vmatprep.subr.bf16.mxu0 0
      %1437 = vmatpush1.bf16.msra.mxu0 0
      %1438 = vmatprep.subr.bf16.mxu0 0
      %1439 = vmatpush1.bf16.msra.mxu0 0
      %1440 = vmatprep.subr.bf16.mxu0 0
      %1441 = vmatpush1.bf16.msra.mxu0 0
      %1442 = vmatprep.mubr.bf16.mxu0 0
      %1443 = vmatmul.mubr.bf16.gmra.mrb[0].mxu0 %v1234
      %v1444 = vpop.f32.mrb[0].mxu0
      %v1445 = vadd.f32 0.0, %v1444
      %v1446 = vpop.f32.mrb[0].mxu0
      %v1447 = vpop.f32.mrb[0].mxu0
      %v1448 = vadd.f32 0.0, %v1447
      %v1449 = vpop.f32.mrb[0].mxu0
      %1450 = vmatprep.mubr.bf16.mxu0 0
      %1451 = vmatmul.mubr.bf16.gmra.mrb[0].mxu0 %v1235
      %v1452 = vpop.f32.mrb[0].mxu0
      %v1453 = vadd.f32 0.0, %v1452
      %v1454 = vpop.f32.mrb[0].mxu0
      %v1455 = vpop.f32.mrb[0].mxu0
      %v1456 = vpop.f32.mrb[0].mxu0
      %1457 = vdwg.mxu0
      %1458 = vmatprep.subr.bf16.mxu0 0
      %1459 = vmatpush1.bf16.msra.mxu0 %v1402
      %1460 = vmatprep.subr.bf16.mxu0 0
      %1461 = vmatpush1.bf16.msra.mxu0 %v1403
      %1462 = vmatprep.subr.bf16.mxu0 0
      %1463 = vmatpush1.bf16.msra.mxu0 %v1404
      %1464 = vmatprep.subr.bf16.mxu0 0
      %1465 = vmatpush1.bf16.msra.mxu0 %v1405
      %1466 = vmatprep.subr.bf16.mxu0 0
      %1467 = vmatpush1.bf16.msra.mxu0 %v1406
      %1468 = vmatprep.subr.bf16.mxu0 0
      %1469 = vmatpush1.bf16.msra.mxu0 %v1407
      %1470 = vmatprep.subr.bf16.mxu0 0
      %1471 = vmatpush1.bf16.msra.mxu0 %v1408
      %1472 = vmatprep.subr.bf16.mxu0 0
      %1473 = vmatpush1.bf16.msra.mxu0 %v1409
      %1474 = vmatprep.subr.bf16.mxu0 0
      %1475 = vmatpush1.bf16.msra.mxu0 0
      %1476 = vmatprep.subr.bf16.mxu0 0
      %1477 = vmatpush1.bf16.msra.mxu0 0
      %1478 = vmatprep.subr.bf16.mxu0 0
      %1479 = vmatpush1.bf16.msra.mxu0 0
      %1480 = vmatprep.subr.bf16.mxu0 0
      %1481 = vmatpush1.bf16.msra.mxu0 0
      %1482 = vmatprep.subr.bf16.mxu0 0
      %1483 = vmatpush1.bf16.msra.mxu0 0
      %1484 = vmatprep.subr.bf16.mxu0 0
      %1485 = vmatpush1.bf16.msra.mxu0 0
      %1486 = vmatprep.subr.bf16.mxu0 0
      %1487 = vmatpush1.bf16.msra.mxu0 0
      %1488 = vmatprep.subr.bf16.mxu0 0
      %1489 = vmatpush1.bf16.msra.mxu0 0
      %1490 = vmatprep.mubr.bf16.mxu0 0
      %1491 = vmatmul.mubr.bf16.gmra.mrb[0].mxu0 %v1234
      %v1492 = vpop.f32.mrb[0].mxu0
      %v1493 = vadd.f32 0.0, %v1492
      %v1494 = vpop.f32.mrb[0].mxu0
      %v1495 = vpop.f32.mrb[0].mxu0
      %v1496 = vadd.f32 0.0, %v1495
      %v1497 = vpop.f32.mrb[0].mxu0
      %1498 = vmatprep.mubr.bf16.mxu0 0
      %1499 = vmatmul.mubr.bf16.gmra.mrb[0].mxu0 %v1235
      %v1500 = vpop.f32.mrb[0].mxu0
      %v1501 = vadd.f32 0.0, %v1500
      %v1502 = vpop.f32.mrb[0].mxu0
      %v1503 = vpop.f32.mrb[0].mxu0
      %v1504 = vpop.f32.mrb[0].mxu0
      %1505 = vdwg.mxu0
      %v1506 = vmax.f32 %v1445, %v1493
      %v1507 = vmax.f32 %v1448, %v1496
      %v1508 = vmax.f32 %v1453, %v1501
      %v1509 = vpack.c.bf16 %v1507, %v1506
      %v1510 = vpack.c.bf16 %v1508, %v1508
      %s1511 = scalar_lea.vmem %s3, 32
      %v1512 = vld [vmem:[%s1511] sm:$0xf]
      %v1513 = vld [vmem:[%s1511 + $0x4] sm:$0xf]
      %v1514 = vld [vmem:[%s1511 + $0x8] sm:$0xf]
      %v1515 = vld [vmem:[%s1511 + $0xc] sm:$0xf]
      %v1516 = vld [vmem:[%s1511 + $0x10] sm:$0xf]
      %v1517 = vld [vmem:[%s1511 + $0x14] sm:$0xf]
      %v1518 = vld [vmem:[%s1511 + $0x18] sm:$0xf]
      %v1519 = vld [vmem:[%s1511 + $0x1c] sm:$0xf]
      %vm1520 = vcmp.ne.s32.totalorder %v1280, 0
      %vm1521 = vcmp.ne.s32.totalorder %v1281, 0
      %vm1522 = vcmp.ne.s32.totalorder %v1282, 0
      %vm1523 = vmand %vm574, %vm1520
      %vm1524 = vmand %vm575, %vm1521
      %vm1525 = vmand %vm576, %vm1522
      %v1526 = vsel %vm1523, 1.0, 0.0
      %v1527 = vsel %vm1524, 1.0, 0.0
      %v1528 = vsel %vm1525, 1.0, 0.0
      %v1529 = vpack.c.bf16 %v1527, %v1526
      %v1530 = vpack.c.bf16 %v1528, %v1528
      %vm1531 = vcmp.ne.s32.totalorder %v1280, 7
      %vm1532 = vcmp.ne.s32.totalorder %v1281, 7
      %vm1533 = vcmp.ne.s32.totalorder %v1282, 7
      %vm1534 = vmand %vm613, %vm1531
      %vm1535 = vmand %vm614, %vm1532
      %vm1536 = vmand %vm615, %vm1533
      %v1537 = vsel %vm1534, 1.0, 0.0
      %v1538 = vsel %vm1535, 1.0, 0.0
      %v1539 = vsel %vm1536, 1.0, 0.0
      %v1540 = vpack.c.bf16 %v1538, %v1537
      %v1541 = vpack.c.bf16 %v1539, %v1539
      %vm1542 = vcmask 195584
      %v1544 = vsel %vm1542, %v1529, 0
      %v1547 = vsel %vm1542, %v1530, 0
      %vm1549 = vcmask 1043456
      %v1551 = vsel %vm1549, %v1510, 0
      %1553 = vmatprep.subr.bf16.mxu0 0
      %1554 = vmatpush1.bf16.msra.mxu0 %v1509
      %1555 = vmatprep.subr.bf16.mxu0 0
      %1556 = vmatpush1.bf16.msra.mxu0 %v1551
      %1557 = vmatprep.subr.bf16.mxu0 0
      %1558 = vmatpush1.bf16.msra.mxu0 0
      %1559 = vmatprep.subr.bf16.mxu0 0
      %1560 = vmatpush1.bf16.msra.mxu0 0
      %1561 = vmatprep.subr.bf16.mxu0 0
      %1562 = vmatpush1.bf16.msra.mxu0 0
      %1563 = vmatprep.subr.bf16.mxu0 0
      %1564 = vmatpush1.bf16.msra.mxu0 0
      %1565 = vmatprep.subr.bf16.mxu0 0
      %1566 = vmatpush1.bf16.msra.mxu0 0
      %1567 = vmatprep.subr.bf16.mxu0 0
      %1568 = vmatpush1.bf16.msra.mxu0 0
      %1569 = vmatprep.subr.bf16.mxu0 0
      %1570 = vmatpush1.bf16.msra.mxu0 0
      %1571 = vmatprep.subr.bf16.mxu0 0
      %1572 = vmatpush1.bf16.msra.mxu0 0
      %1573 = vmatprep.subr.bf16.mxu0 0
      %1574 = vmatpush1.bf16.msra.mxu0 0
      %1575 = vmatprep.subr.bf16.mxu0 0
      %1576 = vmatpush1.bf16.msra.mxu0 0
      %1577 = vmatprep.subr.bf16.mxu0 0
      %1578 = vmatpush1.bf16.msra.mxu0 0
      %1579 = vmatprep.subr.bf16.mxu0 0
      %1580 = vmatpush1.bf16.msra.mxu0 0
      %1581 = vmatprep.subr.bf16.mxu0 0
      %1582 = vmatpush1.bf16.msra.mxu0 0
      %1583 = vmatprep.subr.bf16.mxu0 0
      %1584 = vmatpush1.bf16.msra.mxu0 0
      %1585 = vmatprep.mubr.bf16.mxu0 0
      %1586 = vmatmul.mubr.bf16.gmra.mrb[0].mxu0 %v1544
      %v1587 = vpop.f32.mrb[0].mxu0
      %v1588 = vadd.f32 0.0, %v1587
      %v1589 = vpop.f32.mrb[0].mxu0
      %v1590 = vpop.f32.mrb[0].mxu0
      %v1591 = vadd.f32 0.0, %v1590
      %v1592 = vpop.f32.mrb[0].mxu0
      %1593 = vmatprep.mubr.bf16.mxu0 0
      %1594 = vmatmul.mubr.bf16.gmra.mrb[0].mxu0 %v1547
      %v1595 = vpop.f32.mrb[0].mxu0
      %v1596 = vadd.f32 0.0, %v1595
      %v1597 = vpop.f32.mrb[0].mxu0
      %v1598 = vpop.f32.mrb[0].mxu0
      %v1599 = vpop.f32.mrb[0].mxu0
      %1600 = vdwg.mxu0
      %v1601 = vpack.c.bf16 %v1591, %v1588
      %v1602 = vpack.c.bf16 %v1596, %v1596
      %v1604 = vsel %vm1542, %v1540, 0
      %v1607 = vsel %vm1542, %v1541, 0
      %1609 = vmatprep.subr.bf16.mxu0 0
      %1610 = vmatpush1.bf16.msra.mxu0 %v1509
      %1611 = vmatprep.subr.bf16.mxu0 0
      %1612 = vmatpush1.bf16.msra.mxu0 %v1551
      %1613 = vmatprep.subr.bf16.mxu0 0
      %1614 = vmatpush1.bf16.msra.mxu0 0
      %1615 = vmatprep.subr.bf16.mxu0 0
      %1616 = vmatpush1.bf16.msra.mxu0 0
      %1617 = vmatprep.subr.bf16.mxu0 0
      %1618 = vmatpush1.bf16.msra.mxu0 0
      %1619 = vmatprep.subr.bf16.mxu0 0
      %1620 = vmatpush1.bf16.msra.mxu0 0
      %1621 = vmatprep.subr.bf16.mxu0 0
      %1622 = vmatpush1.bf16.msra.mxu0 0
      %1623 = vmatprep.subr.bf16.mxu0 0
      %1624 = vmatpush1.bf16.msra.mxu0 0
      %1625 = vmatprep.subr.bf16.mxu0 0
      %1626 = vmatpush1.bf16.msra.mxu0 0
      %1627 = vmatprep.subr.bf16.mxu0 0
      %1628 = vmatpush1.bf16.msra.mxu0 0
      %1629 = vmatprep.subr.bf16.mxu0 0
      %1630 = vmatpush1.bf16.msra.mxu0 0
      %1631 = vmatprep.subr.bf16.mxu0 0
      %1632 = vmatpush1.bf16.msra.mxu0 0
      %1633 = vmatprep.subr.bf16.mxu0 0
      %1634 = vmatpush1.bf16.msra.mxu0 0
      %1635 = vmatprep.subr.bf16.mxu0 0
      %1636 = vmatpush1.bf16.msra.mxu0 0
      %1637 = vmatprep.subr.bf16.mxu0 0
      %1638 = vmatpush1.bf16.msra.mxu0 0
      %1639 = vmatprep.subr.bf16.mxu0 0
      %1640 = vmatpush1.bf16.msra.mxu0 0
      %1641 = vmatprep.mubr.bf16.mxu0 0
      %1642 = vmatmul.mubr.bf16.gmra.mrb[0].mxu0 %v1604
      %v1643 = vpop.f32.mrb[0].mxu0
      %v1644 = vadd.f32 0.0, %v1643
      %v1645 = vpop.f32.mrb[0].mxu0
      %v1646 = vpop.f32.mrb[0].mxu0
      %v1647 = vadd.f32 0.0, %v1646
      %v1648 = vpop.f32.mrb[0].mxu0
      %1649 = vmatprep.mubr.bf16.mxu0 0
      %1650 = vmatmul.mubr.bf16.gmra.mrb[0].mxu0 %v1607
      %v1651 = vpop.f32.mrb[0].mxu0
      %v1652 = vadd.f32 0.0, %v1651
      %v1653 = vpop.f32.mrb[0].mxu0
      %v1654 = vpop.f32.mrb[0].mxu0
      %v1655 = vpop.f32.mrb[0].mxu0
      %1656 = vdwg.mxu0
      %v1657 = vpack.c.bf16 %v1647, %v1644
      %v1658 = vpack.c.bf16 %v1652, %v1652
      %v1659 = vld [vmem:[%s3] sm:$0xf]
      %v1660 = vld [vmem:[%s3 + $0x4] sm:$0xf]
      %v1661 = vld [vmem:[%s3 + $0x8] sm:$0xf]
      %v1662 = vld [vmem:[%s3 + $0xc] sm:$0xf]
      %v1663 = vld [vmem:[%s3 + $0x10] sm:$0xf]
      %v1664 = vld [vmem:[%s3 + $0x14] sm:$0xf]
      %v1665 = vld [vmem:[%s3 + $0x18] sm:$0xf]
      %v1666 = vld [vmem:[%s3 + $0x1c] sm:$0xf]
      %v1675 = vunpack.c.l.b16 %v1659
      %v1676 = vunpack.c.l.b16 %v1660
      %v1677 = vunpack.c.l.b16 %v1661
      %v1678 = vunpack.c.l.b16 %v1662
      %v1679 = vunpack.c.l.b16 %v1663
      %v1680 = vunpack.c.l.b16 %v1664
      %v1681 = vunpack.c.l.b16 %v1665
      %v1682 = vunpack.c.l.b16 %v1666
      %v1683 = vpack.c.b16 %v1676, %v1675
      %v1684 = vpack.c.b16 %v1678, %v1677
      %v1685 = vpack.c.b16 %v1680, %v1679
      %v1686 = vpack.c.b16 %v1682, %v1681
      %v1692 = vsel %vm811, %v1601, 0
      %v1695 = vsel %vm811, %v1602, 0
      %1697 = vmatprep.subr.bf16.mxu0 0
      %1698 = vmatpush1.bf16.msra.mxu0 %v1683
      %1699 = vmatprep.subr.bf16.mxu0 0
      %1700 = vmatpush1.bf16.msra.mxu0 %v1684
      %1701 = vmatprep.subr.bf16.mxu0 0
      %1702 = vmatpush1.bf16.msra.mxu0 %v1685
      %1703 = vmatprep.subr.bf16.mxu0 0
      %1704 = vmatpush1.bf16.msra.mxu0 %v1686
      %1705 = vmatprep.subr.bf16.mxu0 0
      %1706 = vmatpush1.bf16.msra.mxu0 0
      %1707 = vmatprep.subr.bf16.mxu0 0
      %1708 = vmatpush1.bf16.msra.mxu0 0
      %1709 = vmatprep.subr.bf16.mxu0 0
      %1710 = vmatpush1.bf16.msra.mxu0 0
      %1711 = vmatprep.subr.bf16.mxu0 0
      %1712 = vmatpush1.bf16.msra.mxu0 0
      %1713 = vmatprep.subr.bf16.mxu0 0
      %1714 = vmatpush1.bf16.msra.mxu0 0
      %1715 = vmatprep.subr.bf16.mxu0 0
      %1716 = vmatpush1.bf16.msra.mxu0 0
      %1717 = vmatprep.subr.bf16.mxu0 0
      %1718 = vmatpush1.bf16.msra.mxu0 0
      %1719 = vmatprep.subr.bf16.mxu0 0
      %1720 = vmatpush1.bf16.msra.mxu0 0
      %1721 = vmatprep.subr.bf16.mxu0 0
      %1722 = vmatpush1.bf16.msra.mxu0 0
      %1723 = vmatprep.subr.bf16.mxu0 0
      %1724 = vmatpush1.bf16.msra.mxu0 0
      %1725 = vmatprep.subr.bf16.mxu0 0
      %1726 = vmatpush1.bf16.msra.mxu0 0
      %1727 = vmatprep.subr.bf16.mxu0 0
      %1728 = vmatpush1.bf16.msra.mxu0 0
      %1729 = vmatprep.mubr.bf16.mxu0 0
      %1730 = vmatmul.mubr.bf16.gmra.mrb[0].mxu0 %v1692
      %v1731 = vpop.f32.mrb[0].mxu0
      %v1732 = vadd.f32 0.0, %v1731
      %v1733 = vpop.f32.mrb[0].mxu0
      %v1734 = vpop.f32.mrb[0].mxu0
      %v1735 = vadd.f32 0.0, %v1734
      %v1736 = vpop.f32.mrb[0].mxu0
      %1737 = vmatprep.mubr.bf16.mxu0 0
      %1738 = vmatmul.mubr.bf16.gmra.mrb[0].mxu0 %v1695
      %v1739 = vpop.f32.mrb[0].mxu0
      %v1740 = vadd.f32 0.0, %v1739
      %v1741 = vpop.f32.mrb[0].mxu0
      %v1742 = vpop.f32.mrb[0].mxu0
      %v1743 = vpop.f32.mrb[0].mxu0
      %1744 = vdwg.mxu0
      %v1753 = vunpack.c.l.b16 %v1512
      %v1754 = vunpack.c.l.b16 %v1513
      %v1755 = vunpack.c.l.b16 %v1514
      %v1756 = vunpack.c.l.b16 %v1515
      %v1757 = vunpack.c.l.b16 %v1516
      %v1758 = vunpack.c.l.b16 %v1517
      %v1759 = vunpack.c.l.b16 %v1518
      %v1760 = vunpack.c.l.b16 %v1519
      %v1761 = vpack.c.b16 %v1754, %v1753
      %v1762 = vpack.c.b16 %v1756, %v1755
      %v1763 = vpack.c.b16 %v1758, %v1757
      %v1764 = vpack.c.b16 %v1760, %v1759
      %v1770 = vsel %vm811, %v1509, 0
      %v1772 = vsel %vm811, %v1510, 0
      %1774 = vmatprep.subr.bf16.mxu0 0
      %1775 = vmatpush1.bf16.msra.mxu0 %v1761
      %1776 = vmatprep.subr.bf16.mxu0 0
      %1777 = vmatpush1.bf16.msra.mxu0 %v1762
      %1778 = vmatprep.subr.bf16.mxu0 0
      %1779 = vmatpush1.bf16.msra.mxu0 %v1763
      %1780 = vmatprep.subr.bf16.mxu0 0
      %1781 = vmatpush1.bf16.msra.mxu0 %v1764
      %1782 = vmatprep.subr.bf16.mxu0 0
      %1783 = vmatpush1.bf16.msra.mxu0 0
      %1784 = vmatprep.subr.bf16.mxu0 0
      %1785 = vmatpush1.bf16.msra.mxu0 0
      %1786 = vmatprep.subr.bf16.mxu0 0
      %1787 = vmatpush1.bf16.msra.mxu0 0
      %1788 = vmatprep.subr.bf16.mxu0 0
      %1789 = vmatpush1.bf16.msra.mxu0 0
      %1790 = vmatprep.subr.bf16.mxu0 0
      %1791 = vmatpush1.bf16.msra.mxu0 0
      %1792 = vmatprep.subr.bf16.mxu0 0
      %1793 = vmatpush1.bf16.msra.mxu0 0
      %1794 = vmatprep.subr.bf16.mxu0 0
      %1795 = vmatpush1.bf16.msra.mxu0 0
      %1796 = vmatprep.subr.bf16.mxu0 0
      %1797 = vmatpush1.bf16.msra.mxu0 0
      %1798 = vmatprep.subr.bf16.mxu0 0
      %1799 = vmatpush1.bf16.msra.mxu0 0
      %1800 = vmatprep.subr.bf16.mxu0 0
      %1801 = vmatpush1.bf16.msra.mxu0 0
      %1802 = vmatprep.subr.bf16.mxu0 0
      %1803 = vmatpush1.bf16.msra.mxu0 0
      %1804 = vmatprep.subr.bf16.mxu0 0
      %1805 = vmatpush1.bf16.msra.mxu0 0
      %1806 = vmatprep.mubr.bf16.mxu0 0
      %1807 = vmatmul.mubr.bf16.gmra.mrb[0].mxu0 %v1770
      %v1808 = vpop.f32.mrb[0].mxu0
      %v1809 = vadd.f32 %v1732, %v1808
      %v1810 = vpop.f32.mrb[0].mxu0
      %v1811 = vpop.f32.mrb[0].mxu0
      %v1812 = vadd.f32 %v1735, %v1811
      %v1813 = vpop.f32.mrb[0].mxu0
      %1814 = vmatprep.mubr.bf16.mxu0 0
      %1815 = vmatmul.mubr.bf16.gmra.mrb[0].mxu0 %v1772
      %v1816 = vpop.f32.mrb[0].mxu0
      %v1817 = vadd.f32 %v1740, %v1816
      %v1818 = vpop.f32.mrb[0].mxu0
      %v1819 = vpop.f32.mrb[0].mxu0
      %v1820 = vpop.f32.mrb[0].mxu0
      %1821 = vdwg.mxu0
      %s1822 = scalar_lea.vmem %s3, 64
      %v1823 = vld [vmem:[%s1822] sm:$0xf]
      %v1824 = vld [vmem:[%s1822 + $0x4] sm:$0xf]
      %v1825 = vld [vmem:[%s1822 + $0x8] sm:$0xf]
      %v1826 = vld [vmem:[%s1822 + $0xc] sm:$0xf]
      %v1827 = vld [vmem:[%s1822 + $0x10] sm:$0xf]
      %v1828 = vld [vmem:[%s1822 + $0x14] sm:$0xf]
      %v1829 = vld [vmem:[%s1822 + $0x18] sm:$0xf]
      %v1830 = vld [vmem:[%s1822 + $0x1c] sm:$0xf]
      %v1839 = vunpack.c.l.b16 %v1823
      %v1840 = vunpack.c.l.b16 %v1824
      %v1841 = vunpack.c.l.b16 %v1825
      %v1842 = vunpack.c.l.b16 %v1826
      %v1843 = vunpack.c.l.b16 %v1827
      %v1844 = vunpack.c.l.b16 %v1828
      %v1845 = vunpack.c.l.b16 %v1829
      %v1846 = vunpack.c.l.b16 %v1830
      %v1847 = vpack.c.b16 %v1840, %v1839
      %v1848 = vpack.c.b16 %v1842, %v1841
      %v1849 = vpack.c.b16 %v1844, %v1843
      %v1850 = vpack.c.b16 %v1846, %v1845
      %v1856 = vsel %vm811, %v1657, 0
      %v1859 = vsel %vm811, %v1658, 0
      %1861 = vmatprep.subr.bf16.mxu0 0
      %1862 = vmatpush1.bf16.msra.mxu0 %v1847
      %1863 = vmatprep.subr.bf16.mxu0 0
      %1864 = vmatpush1.bf16.msra.mxu0 %v1848
      %1865 = vmatprep.subr.bf16.mxu0 0
      %1866 = vmatpush1.bf16.msra.mxu0 %v1849
      %1867 = vmatprep.subr.bf16.mxu0 0
      %1868 = vmatpush1.bf16.msra.mxu0 %v1850
      %1869 = vmatprep.subr.bf16.mxu0 0
      %1870 = vmatpush1.bf16.msra.mxu0 0
      %1871 = vmatprep.subr.bf16.mxu0 0
      %1872 = vmatpush1.bf16.msra.mxu0 0
      %1873 = vmatprep.subr.bf16.mxu0 0
      %1874 = vmatpush1.bf16.msra.mxu0 0
      %1875 = vmatprep.subr.bf16.mxu0 0
      %1876 = vmatpush1.bf16.msra.mxu0 0
      %1877 = vmatprep.subr.bf16.mxu0 0
      %1878 = vmatpush1.bf16.msra.mxu0 0
      %1879 = vmatprep.subr.bf16.mxu0 0
      %1880 = vmatpush1.bf16.msra.mxu0 0
      %1881 = vmatprep.subr.bf16.mxu0 0
      %1882 = vmatpush1.bf16.msra.mxu0 0
      %1883 = vmatprep.subr.bf16.mxu0 0
      %1884 = vmatpush1.bf16.msra.mxu0 0
      %1885 = vmatprep.subr.bf16.mxu0 0
      %1886 = vmatpush1.bf16.msra.mxu0 0
      %1887 = vmatprep.subr.bf16.mxu0 0
      %1888 = vmatpush1.bf16.msra.mxu0 0
      %1889 = vmatprep.subr.bf16.mxu0 0
      %1890 = vmatpush1.bf16.msra.mxu0 0
      %1891 = vmatprep.subr.bf16.mxu0 0
      %1892 = vmatpush1.bf16.msra.mxu0 0
      %1893 = vmatprep.mubr.bf16.mxu0 0
      %1894 = vmatmul.mubr.bf16.gmra.mrb[0].mxu0 %v1856
      %v1895 = vpop.f32.mrb[0].mxu0
      %v1896 = vadd.f32 0.0, %v1895
      %v1897 = vpop.f32.mrb[0].mxu0
      %v1898 = vpop.f32.mrb[0].mxu0
      %v1899 = vadd.f32 0.0, %v1898
      %v1900 = vpop.f32.mrb[0].mxu0
      %1901 = vmatprep.mubr.bf16.mxu0 0
      %1902 = vmatmul.mubr.bf16.gmra.mrb[0].mxu0 %v1859
      %v1903 = vpop.f32.mrb[0].mxu0
      %v1904 = vadd.f32 0.0, %v1903
      %v1905 = vpop.f32.mrb[0].mxu0
      %v1906 = vpop.f32.mrb[0].mxu0
      %v1907 = vpop.f32.mrb[0].mxu0
      %1908 = vdwg.mxu0
      %v1909 = vadd.f32 %v1809, %v1896
      %v1910 = vadd.f32 %v1812, %v1899
      %v1911 = vadd.f32 %v1817, %v1904
      %v1912 = vld [vmem:[%s4] sm:$0x1]
      %v1914 = vlaneseq
      %v1915 = vshrl.u32 %v1914, 7
      %v1916 = vsub.s32 0, %v1915
      %v1917 = vrot.slane %v1912, %v1916
      %v1919 = vadd.f32 %v1909, %v1917
      %v1920 = vadd.f32 %v1910, %v1917
      %v1921 = vadd.f32 %v1911, %v1917
      %v1922 = vmax.f32 %v1919, 0.0
      %v1923 = vmax.f32 %v1920, 0.0
      %v1924 = vmax.f32 %v1921, 0.0
      %1925 = vst [vmem:[%s526] sm:$0xff] %v1922
      %1926 = vst [vmem:[%s526 + $0x8] sm:$0xff] %v1923
      %1927 = vst [vmem:[%s526 + $0x10] sm:$0xff] %v1924
      %v1928 = vpack.c.bf16 %v1923, %v1922
      %v1929 = vpack.c.bf16 %v1924, %v1924
      %v1930 = vsel %vm1542, %v1110, 0
      %v1933 = vsel %vm1549, %v1929, 0
      %1935 = vmatprep.subr.bf16.mxu0 0
      %1936 = vmatpush1.bf16.msra.mxu0 %v1928
      %1937 = vmatprep.subr.bf16.mxu0 0
      %1938 = vmatpush1.bf16.msra.mxu0 %v1933
      %1939 = vmatprep.subr.bf16.mxu0 0
      %1940 = vmatpush1.bf16.msra.mxu0 0
      %1941 = vmatprep.subr.bf16.mxu0 0
      %1942 = vmatpush1.bf16.msra.mxu0 0
      %1943 = vmatprep.subr.bf16.mxu0 0
      %1944 = vmatpush1.bf16.msra.mxu0 0
      %1945 = vmatprep.subr.bf16.mxu0 0
      %1946 = vmatpush1.bf16.msra.mxu0 0
      %1947 = vmatprep.subr.bf16.mxu0 0
      %1948 = vmatpush1.bf16.msra.mxu0 0
      %1949 = vmatprep.subr.bf16.mxu0 0
      %1950 = vmatpush1.bf16.msra.mxu0 0
      %1951 = vmatprep.subr.bf16.mxu0 0
      %1952 = vmatpush1.bf16.msra.mxu0 0
      %1953 = vmatprep.subr.bf16.mxu0 0
      %1954 = vmatpush1.bf16.msra.mxu0 0
      %1955 = vmatprep.subr.bf16.mxu0 0
      %1956 = vmatpush1.bf16.msra.mxu0 0
      %1957 = vmatprep.subr.bf16.mxu0 0
      %1958 = vmatpush1.bf16.msra.mxu0 0
      %1959 = vmatprep.subr.bf16.mxu0 0
      %1960 = vmatpush1.bf16.msra.mxu0 0
      %1961 = vmatprep.subr.bf16.mxu0 0
      %1962 = vmatpush1.bf16.msra.mxu0 0
      %1963 = vmatprep.subr.bf16.mxu0 0
      %1964 = vmatpush1.bf16.msra.mxu0 0
      %1965 = vmatprep.subr.bf16.mxu0 0
      %1966 = vmatpush1.bf16.msra.mxu0 0
      %1967 = vmatprep.mubr.bf16.mxu0 0
      %1968 = vmatmul.mubr.bf16.gmra.mrb[0].mxu0 %v1930
      %v1969 = vpop.f32.mrb[0].mxu0
      %v1970 = vadd.f32 0.0, %v1969
      %v1971 = vpop.f32.mrb[0].mxu0
      %v1972 = vpop.f32.mrb[0].mxu0
      %v1973 = vadd.f32 0.0, %v1972
      %v1974 = vpop.f32.mrb[0].mxu0
      %1975 = vdwg.mxu0
      %v1976 = vsel %vm1542, %v1121, 0
      %1978 = vmatprep.subr.bf16.mxu0 0
      %1979 = vmatpush1.bf16.msra.mxu0 %v1928
      %1980 = vmatprep.subr.bf16.mxu0 0
      %1981 = vmatpush1.bf16.msra.mxu0 %v1933
      %1982 = vmatprep.subr.bf16.mxu0 0
      %1983 = vmatpush1.bf16.msra.mxu0 0
      %1984 = vmatprep.subr.bf16.mxu0 0
      %1985 = vmatpush1.bf16.msra.mxu0 0
      %1986 = vmatprep.subr.bf16.mxu0 0
      %1987 = vmatpush1.bf16.msra.mxu0 0
      %1988 = vmatprep.subr.bf16.mxu0 0
      %1989 = vmatpush1.bf16.msra.mxu0 0
      %1990 = vmatprep.subr.bf16.mxu0 0
      %1991 = vmatpush1.bf16.msra.mxu0 0
      %1992 = vmatprep.subr.bf16.mxu0 0
      %1993 = vmatpush1.bf16.msra.mxu0 0
      %1994 = vmatprep.subr.bf16.mxu0 0
      %1995 = vmatpush1.bf16.msra.mxu0 0
      %1996 = vmatprep.subr.bf16.mxu0 0
      %1997 = vmatpush1.bf16.msra.mxu0 0
      %1998 = vmatprep.subr.bf16.mxu0 0
      %1999 = vmatpush1.bf16.msra.mxu0 0
      %2000 = vmatprep.subr.bf16.mxu0 0
      %2001 = vmatpush1.bf16.msra.mxu0 0
      %2002 = vmatprep.subr.bf16.mxu0 0
      %2003 = vmatpush1.bf16.msra.mxu0 0
      %2004 = vmatprep.subr.bf16.mxu0 0
      %2005 = vmatpush1.bf16.msra.mxu0 0
      %2006 = vmatprep.subr.bf16.mxu0 0
      %2007 = vmatpush1.bf16.msra.mxu0 0
      %2008 = vmatprep.subr.bf16.mxu0 0
      %2009 = vmatpush1.bf16.msra.mxu0 0
      %2010 = vmatprep.mubr.bf16.mxu0 0
      %2011 = vmatmul.mubr.bf16.gmra.mrb[0].mxu0 %v1976
      %v2012 = vpop.f32.mrb[0].mxu0
      %v2013 = vadd.f32 0.0, %v2012
      %v2014 = vpop.f32.mrb[0].mxu0
      %v2015 = vpop.f32.mrb[0].mxu0
      %v2016 = vadd.f32 0.0, %v2015
      %v2017 = vpop.f32.mrb[0].mxu0
      %2018 = vdwg.mxu0
      %v2019 = vmax.f32 %v1970, %v2013
      %v2020 = vmax.f32 %v1973, %v2016
      %v2021 = vpack.c.bf16 %v2020, %v2019
      %v2022 = vshra.s32 %v560, 4
      %v2023 = vshra.s32 %v561, 4
      %v2024 = vshra.s32 %v562, 4
      %v2025 = vshra.s32 %v563, 4
      %v2026 = vshra.s32 %v564, 4
      %v2027 = vshra.s32 %v565, 4
      %v2028 = vshra.s32 %v1236, 4
      %v2029 = vshra.s32 %v1237, 4
      %v2030 = vshra.s32 %v1238, 4
      %v2031 = vshra.s32 %v1239, 4
      %v2032 = vshra.s32 %v1240, 4
      %v2033 = vshra.s32 %v1241, 4
      %v2034 = vshra.s32 %v1242, 4
      %v2035 = vshra.s32 %v1243, 4
      %v2036 = vshra.s32 %v1244, 4
      %v2037 = vshra.s32 %v1245, 4
      %v2038 = vshra.s32 %v567, 4
      %v2039 = vmul.u32 %v2038, 2
      %vm2040 = vcmp.eq.s32.totalorder %v2022, %v2039
      %vm2041 = vcmp.eq.s32.totalorder %v2023, %v2039
      %vm2042 = vcmp.eq.s32.totalorder %v2024, %v2039
      %vm2043 = vcmp.eq.s32.totalorder %v2025, %v2039
      %vm2044 = vcmp.eq.s32.totalorder %v2026, %v2039
      %vm2045 = vcmp.eq.s32.totalorder %v2027, %v2039
      %vm2046 = vcmp.eq.s32.totalorder %v2028, %v2039
      %vm2047 = vcmp.eq.s32.totalorder %v2029, %v2039
      %vm2048 = vcmp.eq.s32.totalorder %v2030, %v2039
      %vm2049 = vcmp.eq.s32.totalorder %v2031, %v2039
      %vm2050 = vcmp.eq.s32.totalorder %v2032, %v2039
      %vm2051 = vcmp.eq.s32.totalorder %v2033, %v2039
      %vm2052 = vcmp.eq.s32.totalorder %v2034, %v2039
      %vm2053 = vcmp.eq.s32.totalorder %v2035, %v2039
      %vm2054 = vcmp.eq.s32.totalorder %v2036, %v2039
      %vm2055 = vcmp.eq.s32.totalorder %v2037, %v2039
      %v2056 = vand.u32 %v1236, 15
      %v2057 = vand.u32 %v1237, 15
      %v2058 = vand.u32 %v1238, 15
      %v2059 = vand.u32 %v1239, 15
      %v2060 = vand.u32 %v1240, 15
      %v2061 = vand.u32 %v1241, 15
      %v2062 = vand.u32 %v1242, 15
      %v2063 = vand.u32 %v1243, 15
      %v2064 = vand.u32 %v1244, 15
      %v2065 = vand.u32 %v1245, 15
      %v2066 = vand.u32 %v567, 15
      %vm2067 = vcmp.eq.s32.totalorder %v580, %v2066
      %vm2068 = vcmp.eq.s32.totalorder %v581, %v2066
      %vm2069 = vcmp.eq.s32.totalorder %v582, %v2066
      %vm2070 = vcmp.eq.s32.totalorder %v583, %v2066
      %vm2071 = vcmp.eq.s32.totalorder %v584, %v2066
      %vm2072 = vcmp.eq.s32.totalorder %v585, %v2066
      %vm2073 = vcmp.eq.s32.totalorder %v2056, %v2066
      %vm2074 = vcmp.eq.s32.totalorder %v2057, %v2066
      %vm2075 = vcmp.eq.s32.totalorder %v2058, %v2066
      %vm2076 = vcmp.eq.s32.totalorder %v2059, %v2066
      %vm2077 = vcmp.eq.s32.totalorder %v2060, %v2066
      %vm2078 = vcmp.eq.s32.totalorder %v2061, %v2066
      %vm2079 = vcmp.eq.s32.totalorder %v2062, %v2066
      %vm2080 = vcmp.eq.s32.totalorder %v2063, %v2066
      %vm2081 = vcmp.eq.s32.totalorder %v2064, %v2066
      %vm2082 = vcmp.eq.s32.totalorder %v2065, %v2066
      %vm2083 = vmand %vm2040, %vm2067
      %vm2084 = vmand %vm2041, %vm2068
      %vm2085 = vmand %vm2042, %vm2069
      %vm2086 = vmand %vm2043, %vm2070
      %vm2087 = vmand %vm2044, %vm2071
      %vm2088 = vmand %vm2045, %vm2072
      %vm2089 = vmand %vm2046, %vm2073
      %vm2090 = vmand %vm2047, %vm2074
      %vm2091 = vmand %vm2048, %vm2075
      %vm2092 = vmand %vm2049, %vm2076
      %vm2093 = vmand %vm2050, %vm2077
      %vm2094 = vmand %vm2051, %vm2078
      %vm2095 = vmand %vm2052, %vm2079
      %vm2096 = vmand %vm2053, %vm2080
      %vm2097 = vmand %vm2054, %vm2081
      %vm2098 = vmand %vm2055, %vm2082
      %v2099 = vsel %vm2083, 1.0, 0.0
      %v2100 = vsel %vm2084, 1.0, 0.0
      %v2101 = vsel %vm2085, 1.0, 0.0
      %v2102 = vsel %vm2086, 1.0, 0.0
      %v2103 = vsel %vm2087, 1.0, 0.0
      %v2104 = vsel %vm2088, 1.0, 0.0
      %v2105 = vsel %vm2089, 1.0, 0.0
      %v2106 = vsel %vm2090, 1.0, 0.0
      %v2107 = vsel %vm2091, 1.0, 0.0
      %v2108 = vsel %vm2092, 1.0, 0.0
      %v2109 = vsel %vm2093, 1.0, 0.0
      %v2110 = vsel %vm2094, 1.0, 0.0
      %v2111 = vsel %vm2095, 1.0, 0.0
      %v2112 = vsel %vm2096, 1.0, 0.0
      %v2113 = vsel %vm2097, 1.0, 0.0
      %v2114 = vsel %vm2098, 1.0, 0.0
      %v2115 = vpack.c.bf16 %v2100, %v2099
      %v2116 = vpack.c.bf16 %v2102, %v2101
      %v2117 = vpack.c.bf16 %v2104, %v2103
      %v2118 = vpack.c.bf16 %v2106, %v2105
      %v2119 = vpack.c.bf16 %v2108, %v2107
      %v2120 = vpack.c.bf16 %v2110, %v2109
      %v2121 = vpack.c.bf16 %v2112, %v2111
      %v2122 = vpack.c.bf16 %v2114, %v2113
      %v2123 = vadd.s32 %v2039, 1
      %vm2124 = vcmp.eq.s32.totalorder %v2022, %v2123
      %vm2125 = vcmp.eq.s32.totalorder %v2023, %v2123
      %vm2126 = vcmp.eq.s32.totalorder %v2024, %v2123
      %vm2127 = vcmp.eq.s32.totalorder %v2025, %v2123
      %vm2128 = vcmp.eq.s32.totalorder %v2026, %v2123
      %vm2129 = vcmp.eq.s32.totalorder %v2027, %v2123
      %vm2130 = vcmp.eq.s32.totalorder %v2028, %v2123
      %vm2131 = vcmp.eq.s32.totalorder %v2029, %v2123
      %vm2132 = vcmp.eq.s32.totalorder %v2030, %v2123
      %vm2133 = vcmp.eq.s32.totalorder %v2031, %v2123
      %vm2134 = vcmp.eq.s32.totalorder %v2032, %v2123
      %vm2135 = vcmp.eq.s32.totalorder %v2033, %v2123
      %vm2136 = vcmp.eq.s32.totalorder %v2034, %v2123
      %vm2137 = vcmp.eq.s32.totalorder %v2035, %v2123
      %vm2138 = vcmp.eq.s32.totalorder %v2036, %v2123
      %vm2139 = vcmp.eq.s32.totalorder %v2037, %v2123
      %vm2140 = vmand %vm2124, %vm2067
      %vm2141 = vmand %vm2125, %vm2068
      %vm2142 = vmand %vm2126, %vm2069
      %vm2143 = vmand %vm2127, %vm2070
      %vm2144 = vmand %vm2128, %vm2071
      %vm2145 = vmand %vm2129, %vm2072
      %vm2146 = vmand %vm2130, %vm2073
      %vm2147 = vmand %vm2131, %vm2074
      %vm2148 = vmand %vm2132, %vm2075
      %vm2149 = vmand %vm2133, %vm2076
      %vm2150 = vmand %vm2134, %vm2077
      %vm2151 = vmand %vm2135, %vm2078
      %vm2152 = vmand %vm2136, %vm2079
      %vm2153 = vmand %vm2137, %vm2080
      %vm2154 = vmand %vm2138, %vm2081
      %vm2155 = vmand %vm2139, %vm2082
      %v2156 = vsel %vm2140, 1.0, 0.0
      %v2157 = vsel %vm2141, 1.0, 0.0
      %v2158 = vsel %vm2142, 1.0, 0.0
      %v2159 = vsel %vm2143, 1.0, 0.0
      %v2160 = vsel %vm2144, 1.0, 0.0
      %v2161 = vsel %vm2145, 1.0, 0.0
      %v2162 = vsel %vm2146, 1.0, 0.0
      %v2163 = vsel %vm2147, 1.0, 0.0
      %v2164 = vsel %vm2148, 1.0, 0.0
      %v2165 = vsel %vm2149, 1.0, 0.0
      %v2166 = vsel %vm2150, 1.0, 0.0
      %v2167 = vsel %vm2151, 1.0, 0.0
      %v2168 = vsel %vm2152, 1.0, 0.0
      %v2169 = vsel %vm2153, 1.0, 0.0
      %v2170 = vsel %vm2154, 1.0, 0.0
      %v2171 = vsel %vm2155, 1.0, 0.0
      %v2172 = vpack.c.bf16 %v2157, %v2156
      %v2173 = vpack.c.bf16 %v2159, %v2158
      %v2174 = vpack.c.bf16 %v2161, %v2160
      %v2175 = vpack.c.bf16 %v2163, %v2162
      %v2176 = vpack.c.bf16 %v2165, %v2164
      %v2177 = vpack.c.bf16 %v2167, %v2166
      %v2178 = vpack.c.bf16 %v2169, %v2168
      %v2179 = vpack.c.bf16 %v2171, %v2170
      %2180 = vmatprep.subr.bf16.mxu0 0
      %2181 = vmatpush1.bf16.msra.mxu0 %v2115
      %2182 = vmatprep.subr.bf16.mxu0 0
      %2183 = vmatpush1.bf16.msra.mxu0 %v2116
      %2184 = vmatprep.subr.bf16.mxu0 0
      %2185 = vmatpush1.bf16.msra.mxu0 %v2117
      %2186 = vmatprep.subr.bf16.mxu0 0
      %2187 = vmatpush1.bf16.msra.mxu0 %v2118
      %2188 = vmatprep.subr.bf16.mxu0 0
      %2189 = vmatpush1.bf16.msra.mxu0 %v2119
      %2190 = vmatprep.subr.bf16.mxu0 0
      %2191 = vmatpush1.bf16.msra.mxu0 %v2120
      %2192 = vmatprep.subr.bf16.mxu0 0
      %2193 = vmatpush1.bf16.msra.mxu0 %v2121
      %2194 = vmatprep.subr.bf16.mxu0 0
      %2195 = vmatpush1.bf16.msra.mxu0 %v2122
      %2196 = vmatprep.subr.bf16.mxu0 0
      %2197 = vmatpush1.bf16.msra.mxu0 0
      %2198 = vmatprep.subr.bf16.mxu0 0
      %2199 = vmatpush1.bf16.msra.mxu0 0
      %2200 = vmatprep.subr.bf16.mxu0 0
      %2201 = vmatpush1.bf16.msra.mxu0 0
      %2202 = vmatprep.subr.bf16.mxu0 0
      %2203 = vmatpush1.bf16.msra.mxu0 0
      %2204 = vmatprep.subr.bf16.mxu0 0
      %2205 = vmatpush1.bf16.msra.mxu0 0
      %2206 = vmatprep.subr.bf16.mxu0 0
      %2207 = vmatpush1.bf16.msra.mxu0 0
      %2208 = vmatprep.subr.bf16.mxu0 0
      %2209 = vmatpush1.bf16.msra.mxu0 0
      %2210 = vmatprep.subr.bf16.mxu0 0
      %2211 = vmatpush1.bf16.msra.mxu0 0
      %2212 = vmatprep.mubr.bf16.mxu0 0
      %2213 = vmatmul.mubr.bf16.gmra.mrb[0].mxu0 %v2021
      %v2214 = vpop.f32.mrb[0].mxu0
      %v2215 = vadd.f32 0.0, %v2214
      %v2216 = vpop.f32.mrb[0].mxu0
      %v2217 = vpop.f32.mrb[0].mxu0
      %v2218 = vadd.f32 0.0, %v2217
      %v2219 = vpop.f32.mrb[0].mxu0
      %2220 = vdwg.mxu0
      %2221 = vmatprep.subr.bf16.mxu0 0
      %2222 = vmatpush1.bf16.msra.mxu0 %v2172
      %2223 = vmatprep.subr.bf16.mxu0 0
      %2224 = vmatpush1.bf16.msra.mxu0 %v2173
      %2225 = vmatprep.subr.bf16.mxu0 0
      %2226 = vmatpush1.bf16.msra.mxu0 %v2174
      %2227 = vmatprep.subr.bf16.mxu0 0
      %2228 = vmatpush1.bf16.msra.mxu0 %v2175
      %2229 = vmatprep.subr.bf16.mxu0 0
      %2230 = vmatpush1.bf16.msra.mxu0 %v2176
      %2231 = vmatprep.subr.bf16.mxu0 0
      %2232 = vmatpush1.bf16.msra.mxu0 %v2177
      %2233 = vmatprep.subr.bf16.mxu0 0
      %2234 = vmatpush1.bf16.msra.mxu0 %v2178
      %2235 = vmatprep.subr.bf16.mxu0 0
      %2236 = vmatpush1.bf16.msra.mxu0 %v2179
      %2237 = vmatprep.subr.bf16.mxu0 0
      %2238 = vmatpush1.bf16.msra.mxu0 0
      %2239 = vmatprep.subr.bf16.mxu0 0
      %2240 = vmatpush1.bf16.msra.mxu0 0
      %2241 = vmatprep.subr.bf16.mxu0 0
      %2242 = vmatpush1.bf16.msra.mxu0 0
      %2243 = vmatprep.subr.bf16.mxu0 0
      %2244 = vmatpush1.bf16.msra.mxu0 0
      %2245 = vmatprep.subr.bf16.mxu0 0
      %2246 = vmatpush1.bf16.msra.mxu0 0
      %2247 = vmatprep.subr.bf16.mxu0 0
      %2248 = vmatpush1.bf16.msra.mxu0 0
      %2249 = vmatprep.subr.bf16.mxu0 0
      %2250 = vmatpush1.bf16.msra.mxu0 0
      %2251 = vmatprep.subr.bf16.mxu0 0
      %2252 = vmatpush1.bf16.msra.mxu0 0
      %2253 = vmatprep.mubr.bf16.mxu0 0
      %2254 = vmatmul.mubr.bf16.gmra.mrb[0].mxu0 %v2021
      %v2255 = vpop.f32.mrb[0].mxu0
      %v2256 = vadd.f32 0.0, %v2255
      %v2257 = vpop.f32.mrb[0].mxu0
      %v2258 = vpop.f32.mrb[0].mxu0
      %v2259 = vadd.f32 0.0, %v2258
      %v2260 = vpop.f32.mrb[0].mxu0
      %2261 = vdwg.mxu0
      %v2262 = vmax.f32 %v2215, %v2256
      %v2263 = vmax.f32 %v2218, %v2259
      %v2264 = vpack.c.bf16 %v2263, %v2262
      %s2265 = scalar_lea.vmem %s5, 32
      %v2266 = vld [vmem:[%s2265] sm:$0xf]
      %v2267 = vld [vmem:[%s2265 + $0x4] sm:$0xf]
      %v2268 = vld [vmem:[%s2265 + $0x8] sm:$0xf]
      %v2269 = vld [vmem:[%s2265 + $0xc] sm:$0xf]
      %v2270 = vld [vmem:[%s2265 + $0x10] sm:$0xf]
      %v2271 = vld [vmem:[%s2265 + $0x14] sm:$0xf]
      %v2272 = vld [vmem:[%s2265 + $0x18] sm:$0xf]
      %v2273 = vld [vmem:[%s2265 + $0x1c] sm:$0xf]
      %v2274 = vand.u32 %v560, 3
      %v2275 = vand.u32 %v561, 3
      %vm2276 = vcmp.ne.s32.totalorder %v2274, 0
      %vm2277 = vcmp.ne.s32.totalorder %v2275, 0
      %vm2278 = vmand %vm574, %vm2276
      %vm2279 = vmand %vm575, %vm2277
      %v2280 = vsel %vm2278, 1.0, 0.0
      %v2281 = vsel %vm2279, 1.0, 0.0
      %v2282 = vpack.c.bf16 %v2281, %v2280
      %vm2283 = vcmp.ne.s32.totalorder %v2274, 3
      %vm2284 = vcmp.ne.s32.totalorder %v2275, 3
      %vm2285 = vmand %vm613, %vm2283
      %vm2286 = vmand %vm614, %vm2284
      %v2287 = vsel %vm2285, 1.0, 0.0
      %v2288 = vsel %vm2286, 1.0, 0.0
      %v2289 = vpack.c.bf16 %v2288, %v2287
      %vm2290 = vcmask 97280
      %v2292 = vsel %vm2290, %v2282, 0
      %vm2294 = vcmask 1045504
      %v2296 = vsel %vm2294, %v2264, 0
      %2298 = vmatprep.subr.bf16.mxu0 0
      %2299 = vmatpush1.bf16.msra.mxu0 %v2296
      %2300 = vmatprep.subr.bf16.mxu0 0
      %2301 = vmatpush1.bf16.msra.mxu0 0
      %2302 = vmatprep.subr.bf16.mxu0 0
      %2303 = vmatpush1.bf16.msra.mxu0 0
      %2304 = vmatprep.subr.bf16.mxu0 0
      %2305 = vmatpush1.bf16.msra.mxu0 0
      %2306 = vmatprep.subr.bf16.mxu0 0
      %2307 = vmatpush1.bf16.msra.mxu0 0
      %2308 = vmatprep.subr.bf16.mxu0 0
      %2309 = vmatpush1.bf16.msra.mxu0 0
      %2310 = vmatprep.subr.bf16.mxu0 0
      %2311 = vmatpush1.bf16.msra.mxu0 0
      %2312 = vmatprep.subr.bf16.mxu0 0
      %2313 = vmatpush1.bf16.msra.mxu0 0
      %2314 = vmatprep.subr.bf16.mxu0 0
      %2315 = vmatpush1.bf16.msra.mxu0 0
      %2316 = vmatprep.subr.bf16.mxu0 0
      %2317 = vmatpush1.bf16.msra.mxu0 0
      %2318 = vmatprep.subr.bf16.mxu0 0
      %2319 = vmatpush1.bf16.msra.mxu0 0
      %2320 = vmatprep.subr.bf16.mxu0 0
      %2321 = vmatpush1.bf16.msra.mxu0 0
      %2322 = vmatprep.subr.bf16.mxu0 0
      %2323 = vmatpush1.bf16.msra.mxu0 0
      %2324 = vmatprep.subr.bf16.mxu0 0
      %2325 = vmatpush1.bf16.msra.mxu0 0
      %2326 = vmatprep.subr.bf16.mxu0 0
      %2327 = vmatpush1.bf16.msra.mxu0 0
      %2328 = vmatprep.subr.bf16.mxu0 0
      %2329 = vmatpush1.bf16.msra.mxu0 0
      %2330 = vmatprep.mubr.bf16.mxu0 0
      %2331 = vmatmul.mubr.bf16.gmra.mrb[0].mxu0 %v2292
      %v2332 = vpop.f32.mrb[0].mxu0
      %v2333 = vadd.f32 0.0, %v2332
      %v2334 = vpop.f32.mrb[0].mxu0
      %v2335 = vpop.f32.mrb[0].mxu0
      %v2336 = vadd.f32 0.0, %v2335
      %v2337 = vpop.f32.mrb[0].mxu0
      %2338 = vdwg.mxu0
      %v2339 = vpack.c.bf16 %v2336, %v2333
      %v2341 = vsel %vm2290, %v2289, 0
      %2343 = vmatprep.subr.bf16.mxu0 0
      %2344 = vmatpush1.bf16.msra.mxu0 %v2296
      %2345 = vmatprep.subr.bf16.mxu0 0
      %2346 = vmatpush1.bf16.msra.mxu0 0
      %2347 = vmatprep.subr.bf16.mxu0 0
      %2348 = vmatpush1.bf16.msra.mxu0 0
      %2349 = vmatprep.subr.bf16.mxu0 0
      %2350 = vmatpush1.bf16.msra.mxu0 0
      %2351 = vmatprep.subr.bf16.mxu0 0
      %2352 = vmatpush1.bf16.msra.mxu0 0
      %2353 = vmatprep.subr.bf16.mxu0 0
      %2354 = vmatpush1.bf16.msra.mxu0 0
      %2355 = vmatprep.subr.bf16.mxu0 0
      %2356 = vmatpush1.bf16.msra.mxu0 0
      %2357 = vmatprep.subr.bf16.mxu0 0
      %2358 = vmatpush1.bf16.msra.mxu0 0
      %2359 = vmatprep.subr.bf16.mxu0 0
      %2360 = vmatpush1.bf16.msra.mxu0 0
      %2361 = vmatprep.subr.bf16.mxu0 0
      %2362 = vmatpush1.bf16.msra.mxu0 0
      %2363 = vmatprep.subr.bf16.mxu0 0
      %2364 = vmatpush1.bf16.msra.mxu0 0
      %2365 = vmatprep.subr.bf16.mxu0 0
      %2366 = vmatpush1.bf16.msra.mxu0 0
      %2367 = vmatprep.subr.bf16.mxu0 0
      %2368 = vmatpush1.bf16.msra.mxu0 0
      %2369 = vmatprep.subr.bf16.mxu0 0
      %2370 = vmatpush1.bf16.msra.mxu0 0
      %2371 = vmatprep.subr.bf16.mxu0 0
      %2372 = vmatpush1.bf16.msra.mxu0 0
      %2373 = vmatprep.subr.bf16.mxu0 0
      %2374 = vmatpush1.bf16.msra.mxu0 0
      %2375 = vmatprep.mubr.bf16.mxu0 0
      %2376 = vmatmul.mubr.bf16.gmra.mrb[0].mxu0 %v2341
      %v2377 = vpop.f32.mrb[0].mxu0
      %v2378 = vadd.f32 0.0, %v2377
      %v2379 = vpop.f32.mrb[0].mxu0
      %v2380 = vpop.f32.mrb[0].mxu0
      %v2381 = vadd.f32 0.0, %v2380
      %v2382 = vpop.f32.mrb[0].mxu0
      %2383 = vdwg.mxu0
      %v2384 = vpack.c.bf16 %v2381, %v2378
      %v2385 = vld [vmem:[%s5] sm:$0xf]
      %v2386 = vld [vmem:[%s5 + $0x4] sm:$0xf]
      %v2387 = vld [vmem:[%s5 + $0x8] sm:$0xf]
      %v2388 = vld [vmem:[%s5 + $0xc] sm:$0xf]
      %v2389 = vld [vmem:[%s5 + $0x10] sm:$0xf]
      %v2390 = vld [vmem:[%s5 + $0x14] sm:$0xf]
      %v2391 = vld [vmem:[%s5 + $0x18] sm:$0xf]
      %v2392 = vld [vmem:[%s5 + $0x1c] sm:$0xf]
      %v2401 = vunpack.c.l.b16 %v2385
      %v2402 = vunpack.c.l.b16 %v2386
      %v2403 = vunpack.c.l.b16 %v2387
      %v2404 = vunpack.c.l.b16 %v2388
      %v2405 = vunpack.c.l.b16 %v2389
      %v2406 = vunpack.c.l.b16 %v2390
      %v2407 = vunpack.c.l.b16 %v2391
      %v2408 = vunpack.c.l.b16 %v2392
      %v2409 = vpack.c.b16 %v2402, %v2401
      %v2410 = vpack.c.b16 %v2404, %v2403
      %v2411 = vpack.c.b16 %v2406, %v2405
      %v2412 = vpack.c.b16 %v2408, %v2407
      %v2418 = vsel %vm811, %v2339, 0
      %2420 = vmatprep.subr.bf16.mxu0 0
      %2421 = vmatpush1.bf16.msra.mxu0 %v2409
      %2422 = vmatprep.subr.bf16.mxu0 0
      %2423 = vmatpush1.bf16.msra.mxu0 %v2410
      %2424 = vmatprep.subr.bf16.mxu0 0
      %2425 = vmatpush1.bf16.msra.mxu0 %v2411
      %2426 = vmatprep.subr.bf16.mxu0 0
      %2427 = vmatpush1.bf16.msra.mxu0 %v2412
      %2428 = vmatprep.subr.bf16.mxu0 0
      %2429 = vmatpush1.bf16.msra.mxu0 0
      %2430 = vmatprep.subr.bf16.mxu0 0
      %2431 = vmatpush1.bf16.msra.mxu0 0
      %2432 = vmatprep.subr.bf16.mxu0 0
      %2433 = vmatpush1.bf16.msra.mxu0 0
      %2434 = vmatprep.subr.bf16.mxu0 0
      %2435 = vmatpush1.bf16.msra.mxu0 0
      %2436 = vmatprep.subr.bf16.mxu0 0
      %2437 = vmatpush1.bf16.msra.mxu0 0
      %2438 = vmatprep.subr.bf16.mxu0 0
      %2439 = vmatpush1.bf16.msra.mxu0 0
      %2440 = vmatprep.subr.bf16.mxu0 0
      %2441 = vmatpush1.bf16.msra.mxu0 0
      %2442 = vmatprep.subr.bf16.mxu0 0
      %2443 = vmatpush1.bf16.msra.mxu0 0
      %2444 = vmatprep.subr.bf16.mxu0 0
      %2445 = vmatpush1.bf16.msra.mxu0 0
      %2446 = vmatprep.subr.bf16.mxu0 0
      %2447 = vmatpush1.bf16.msra.mxu0 0
      %2448 = vmatprep.subr.bf16.mxu0 0
      %2449 = vmatpush1.bf16.msra.mxu0 0
      %2450 = vmatprep.subr.bf16.mxu0 0
      %2451 = vmatpush1.bf16.msra.mxu0 0
      %2452 = vmatprep.mubr.bf16.mxu0 0
      %2453 = vmatmul.mubr.bf16.gmra.mrb[0].mxu0 %v2418
      %v2454 = vpop.f32.mrb[0].mxu0
      %v2455 = vadd.f32 0.0, %v2454
      %v2456 = vpop.f32.mrb[0].mxu0
      %v2457 = vpop.f32.mrb[0].mxu0
      %v2458 = vadd.f32 0.0, %v2457
      %v2459 = vpop.f32.mrb[0].mxu0
      %2460 = vdwg.mxu0
      %v2469 = vunpack.c.l.b16 %v2266
      %v2470 = vunpack.c.l.b16 %v2267
      %v2471 = vunpack.c.l.b16 %v2268
      %v2472 = vunpack.c.l.b16 %v2269
      %v2473 = vunpack.c.l.b16 %v2270
      %v2474 = vunpack.c.l.b16 %v2271
      %v2475 = vunpack.c.l.b16 %v2272
      %v2476 = vunpack.c.l.b16 %v2273
      %v2477 = vpack.c.b16 %v2470, %v2469
      %v2478 = vpack.c.b16 %v2472, %v2471
      %v2479 = vpack.c.b16 %v2474, %v2473
      %v2480 = vpack.c.b16 %v2476, %v2475
      %v2485 = vsel %vm811, %v2264, 0
      %2487 = vmatprep.subr.bf16.mxu0 0
      %2488 = vmatpush1.bf16.msra.mxu0 %v2477
      %2489 = vmatprep.subr.bf16.mxu0 0
      %2490 = vmatpush1.bf16.msra.mxu0 %v2478
      %2491 = vmatprep.subr.bf16.mxu0 0
      %2492 = vmatpush1.bf16.msra.mxu0 %v2479
      %2493 = vmatprep.subr.bf16.mxu0 0
      %2494 = vmatpush1.bf16.msra.mxu0 %v2480
      %2495 = vmatprep.subr.bf16.mxu0 0
      %2496 = vmatpush1.bf16.msra.mxu0 0
      %2497 = vmatprep.subr.bf16.mxu0 0
      %2498 = vmatpush1.bf16.msra.mxu0 0
      %2499 = vmatprep.subr.bf16.mxu0 0
      %2500 = vmatpush1.bf16.msra.mxu0 0
      %2501 = vmatprep.subr.bf16.mxu0 0
      %2502 = vmatpush1.bf16.msra.mxu0 0
      %2503 = vmatprep.subr.bf16.mxu0 0
      %2504 = vmatpush1.bf16.msra.mxu0 0
      %2505 = vmatprep.subr.bf16.mxu0 0
      %2506 = vmatpush1.bf16.msra.mxu0 0
      %2507 = vmatprep.subr.bf16.mxu0 0
      %2508 = vmatpush1.bf16.msra.mxu0 0
      %2509 = vmatprep.subr.bf16.mxu0 0
      %2510 = vmatpush1.bf16.msra.mxu0 0
      %2511 = vmatprep.subr.bf16.mxu0 0
      %2512 = vmatpush1.bf16.msra.mxu0 0
      %2513 = vmatprep.subr.bf16.mxu0 0
      %2514 = vmatpush1.bf16.msra.mxu0 0
      %2515 = vmatprep.subr.bf16.mxu0 0
      %2516 = vmatpush1.bf16.msra.mxu0 0
      %2517 = vmatprep.subr.bf16.mxu0 0
      %2518 = vmatpush1.bf16.msra.mxu0 0
      %2519 = vmatprep.mubr.bf16.mxu0 0
      %2520 = vmatmul.mubr.bf16.gmra.mrb[0].mxu0 %v2485
      %v2521 = vpop.f32.mrb[0].mxu0
      %v2522 = vadd.f32 %v2455, %v2521
      %v2523 = vpop.f32.mrb[0].mxu0
      %v2524 = vpop.f32.mrb[0].mxu0
      %v2525 = vadd.f32 %v2458, %v2524
      %v2526 = vpop.f32.mrb[0].mxu0
      %2527 = vdwg.mxu0
      %s2528 = scalar_lea.vmem %s5, 64
      %v2529 = vld [vmem:[%s2528] sm:$0xf]
      %v2530 = vld [vmem:[%s2528 + $0x4] sm:$0xf]
      %v2531 = vld [vmem:[%s2528 + $0x8] sm:$0xf]
      %v2532 = vld [vmem:[%s2528 + $0xc] sm:$0xf]
      %v2533 = vld [vmem:[%s2528 + $0x10] sm:$0xf]
      %v2534 = vld [vmem:[%s2528 + $0x14] sm:$0xf]
      %v2535 = vld [vmem:[%s2528 + $0x18] sm:$0xf]
      %v2536 = vld [vmem:[%s2528 + $0x1c] sm:$0xf]
      %v2545 = vunpack.c.l.b16 %v2529
      %v2546 = vunpack.c.l.b16 %v2530
      %v2547 = vunpack.c.l.b16 %v2531
      %v2548 = vunpack.c.l.b16 %v2532
      %v2549 = vunpack.c.l.b16 %v2533
      %v2550 = vunpack.c.l.b16 %v2534
      %v2551 = vunpack.c.l.b16 %v2535
      %v2552 = vunpack.c.l.b16 %v2536
      %v2553 = vpack.c.b16 %v2546, %v2545
      %v2554 = vpack.c.b16 %v2548, %v2547
      %v2555 = vpack.c.b16 %v2550, %v2549
      %v2556 = vpack.c.b16 %v2552, %v2551
      %v2562 = vsel %vm811, %v2384, 0
      %2564 = vmatprep.subr.bf16.mxu0 0
      %2565 = vmatpush1.bf16.msra.mxu0 %v2553
      %2566 = vmatprep.subr.bf16.mxu0 0
      %2567 = vmatpush1.bf16.msra.mxu0 %v2554
      %2568 = vmatprep.subr.bf16.mxu0 0
      %2569 = vmatpush1.bf16.msra.mxu0 %v2555
      %2570 = vmatprep.subr.bf16.mxu0 0
      %2571 = vmatpush1.bf16.msra.mxu0 %v2556
      %2572 = vmatprep.subr.bf16.mxu0 0
      %2573 = vmatpush1.bf16.msra.mxu0 0
      %2574 = vmatprep.subr.bf16.mxu0 0
      %2575 = vmatpush1.bf16.msra.mxu0 0
      %2576 = vmatprep.subr.bf16.mxu0 0
      %2577 = vmatpush1.bf16.msra.mxu0 0
      %2578 = vmatprep.subr.bf16.mxu0 0
      %2579 = vmatpush1.bf16.msra.mxu0 0
      %2580 = vmatprep.subr.bf16.mxu0 0
      %2581 = vmatpush1.bf16.msra.mxu0 0
      %2582 = vmatprep.subr.bf16.mxu0 0
      %2583 = vmatpush1.bf16.msra.mxu0 0
      %2584 = vmatprep.subr.bf16.mxu0 0
      %2585 = vmatpush1.bf16.msra.mxu0 0
      %2586 = vmatprep.subr.bf16.mxu0 0
      %2587 = vmatpush1.bf16.msra.mxu0 0
      %2588 = vmatprep.subr.bf16.mxu0 0
      %2589 = vmatpush1.bf16.msra.mxu0 0
      %2590 = vmatprep.subr.bf16.mxu0 0
      %2591 = vmatpush1.bf16.msra.mxu0 0
      %2592 = vmatprep.subr.bf16.mxu0 0
      %2593 = vmatpush1.bf16.msra.mxu0 0
      %2594 = vmatprep.subr.bf16.mxu0 0
      %2595 = vmatpush1.bf16.msra.mxu0 0
      %2596 = vmatprep.mubr.bf16.mxu0 0
      %2597 = vmatmul.mubr.bf16.gmra.mrb[0].mxu0 %v2562
      %v2598 = vpop.f32.mrb[0].mxu0
      %v2599 = vadd.f32 0.0, %v2598
      %v2600 = vpop.f32.mrb[0].mxu0
      %v2601 = vpop.f32.mrb[0].mxu0
      %v2602 = vadd.f32 0.0, %v2601
      %v2603 = vpop.f32.mrb[0].mxu0
      %2604 = vdwg.mxu0
      %v2605 = vadd.f32 %v2522, %v2599
      %v2606 = vadd.f32 %v2525, %v2602
      %v2607 = vld [vmem:[%s6] sm:$0x1]
      %v2609 = vlaneseq
      %v2610 = vshrl.u32 %v2609, 7
      %v2611 = vsub.s32 0, %v2610
      %v2612 = vrot.slane %v2607, %v2611
      %v2614 = vadd.f32 %v2605, %v2612
      %v2615 = vadd.f32 %v2606, %v2612
      %v2616 = vmax.f32 %v2614, 0.0
      %v2617 = vmax.f32 %v2615, 0.0
      %2618 = vst [vmem:[%s531] sm:$0xff] %v2616
      %2619 = vst [vmem:[%s531 + $0x8] sm:$0xf] %v2617
      %v2620 = vpack.c.bf16 %v2617, %v2616
      %v2621 = vpack.c.bf16 %v1107, %v1107
      %v2622 = vpack.c.bf16 %v1118, %v1118
      %v2624 = vsel %vm2290, %v2621, 0
      %v2627 = vsel %vm2294, %v2620, 0
      %2629 = vmatprep.subr.bf16.mxu0 0
      %2630 = vmatpush1.bf16.msra.mxu0 %v2627
      %2631 = vmatprep.subr.bf16.mxu0 0
      %2632 = vmatpush1.bf16.msra.mxu0 0
      %2633 = vmatprep.subr.bf16.mxu0 0
      %2634 = vmatpush1.bf16.msra.mxu0 0
      %2635 = vmatprep.subr.bf16.mxu0 0
      %2636 = vmatpush1.bf16.msra.mxu0 0
      %2637 = vmatprep.subr.bf16.mxu0 0
      %2638 = vmatpush1.bf16.msra.mxu0 0
      %2639 = vmatprep.subr.bf16.mxu0 0
      %2640 = vmatpush1.bf16.msra.mxu0 0
      %2641 = vmatprep.subr.bf16.mxu0 0
      %2642 = vmatpush1.bf16.msra.mxu0 0
      %2643 = vmatprep.subr.bf16.mxu0 0
      %2644 = vmatpush1.bf16.msra.mxu0 0
      %2645 = vmatprep.subr.bf16.mxu0 0
      %2646 = vmatpush1.bf16.msra.mxu0 0
      %2647 = vmatprep.subr.bf16.mxu0 0
      %2648 = vmatpush1.bf16.msra.mxu0 0
      %2649 = vmatprep.subr.bf16.mxu0 0
      %2650 = vmatpush1.bf16.msra.mxu0 0
      %2651 = vmatprep.subr.bf16.mxu0 0
      %2652 = vmatpush1.bf16.msra.mxu0 0
      %2653 = vmatprep.subr.bf16.mxu0 0
      %2654 = vmatpush1.bf16.msra.mxu0 0
      %2655 = vmatprep.subr.bf16.mxu0 0
      %2656 = vmatpush1.bf16.msra.mxu0 0
      %2657 = vmatprep.subr.bf16.mxu0 0
      %2658 = vmatpush1.bf16.msra.mxu0 0
      %2659 = vmatprep.subr.bf16.mxu0 0
      %2660 = vmatpush1.bf16.msra.mxu0 0
      %2661 = vmatprep.mubr.bf16.mxu0 0
      %2662 = vmatmul.mubr.bf16.gmra.mrb[0].mxu0 %v2624
      %v2663 = vpop.f32.mrb[0].mxu0
      %v2664 = vadd.f32 0.0, %v2663
      %v2665 = vpop.f32.mrb[0].mxu0
      %v2666 = vpop.f32.mrb[0].mxu0
      %v2667 = vpop.f32.mrb[0].mxu0
      %2668 = vdwg.mxu0
      %v2670 = vsel %vm2290, %v2622, 0
      %2672 = vmatprep.subr.bf16.mxu0 0
      %2673 = vmatpush1.bf16.msra.mxu0 %v2627
      %2674 = vmatprep.subr.bf16.mxu0 0
      %2675 = vmatpush1.bf16.msra.mxu0 0
      %2676 = vmatprep.subr.bf16.mxu0 0
      %2677 = vmatpush1.bf16.msra.mxu0 0
      %2678 = vmatprep.subr.bf16.mxu0 0
      %2679 = vmatpush1.bf16.msra.mxu0 0
      %2680 = vmatprep.subr.bf16.mxu0 0
      %2681 = vmatpush1.bf16.msra.mxu0 0
      %2682 = vmatprep.subr.bf16.mxu0 0
      %2683 = vmatpush1.bf16.msra.mxu0 0
      %2684 = vmatprep.subr.bf16.mxu0 0
      %2685 = vmatpush1.bf16.msra.mxu0 0
      %2686 = vmatprep.subr.bf16.mxu0 0
      %2687 = vmatpush1.bf16.msra.mxu0 0
      %2688 = vmatprep.subr.bf16.mxu0 0
      %2689 = vmatpush1.bf16.msra.mxu0 0
      %2690 = vmatprep.subr.bf16.mxu0 0
      %2691 = vmatpush1.bf16.msra.mxu0 0
      %2692 = vmatprep.subr.bf16.mxu0 0
      %2693 = vmatpush1.bf16.msra.mxu0 0
      %2694 = vmatprep.subr.bf16.mxu0 0
      %2695 = vmatpush1.bf16.msra.mxu0 0
      %2696 = vmatprep.subr.bf16.mxu0 0
      %2697 = vmatpush1.bf16.msra.mxu0 0
      %2698 = vmatprep.subr.bf16.mxu0 0
      %2699 = vmatpush1.bf16.msra.mxu0 0
      %2700 = vmatprep.subr.bf16.mxu0 0
      %2701 = vmatpush1.bf16.msra.mxu0 0
      %2702 = vmatprep.subr.bf16.mxu0 0
      %2703 = vmatpush1.bf16.msra.mxu0 0
      %2704 = vmatprep.mubr.bf16.mxu0 0
      %2705 = vmatmul.mubr.bf16.gmra.mrb[0].mxu0 %v2670
      %v2706 = vpop.f32.mrb[0].mxu0
      %v2707 = vadd.f32 0.0, %v2706
      %v2708 = vpop.f32.mrb[0].mxu0
      %v2709 = vpop.f32.mrb[0].mxu0
      %v2710 = vpop.f32.mrb[0].mxu0
      %2711 = vdwg.mxu0
      %v2712 = vmax.f32 %v2664, %v2707
      %v2713 = vpack.c.bf16 %v2712, %v2712
      %v2714 = vshra.s32 %v560, 5
      %v2715 = vshra.s32 %v561, 5
      %v2716 = vshra.s32 %v562, 5
      %v2717 = vshra.s32 %v563, 5
      %v2718 = vshra.s32 %v564, 5
      %v2719 = vshra.s32 %v565, 5
      %v2720 = vshra.s32 %v1236, 5
      %v2721 = vshra.s32 %v1237, 5
      %v2722 = vshra.s32 %v1238, 5
      %v2723 = vshra.s32 %v1239, 5
      %v2724 = vshra.s32 %v1240, 5
      %v2725 = vshra.s32 %v1241, 5
      %v2726 = vshra.s32 %v1242, 5
      %v2727 = vshra.s32 %v1243, 5
      %v2728 = vshra.s32 %v1244, 5
      %v2729 = vshra.s32 %v1245, 5
      %v2730 = vshra.s32 %v567, 5
      %v2731 = vmul.u32 %v2730, 2
      %vm2732 = vcmp.eq.s32.totalorder %v2714, %v2731
      %vm2733 = vcmp.eq.s32.totalorder %v2715, %v2731
      %vm2734 = vcmp.eq.s32.totalorder %v2716, %v2731
      %vm2735 = vcmp.eq.s32.totalorder %v2717, %v2731
      %vm2736 = vcmp.eq.s32.totalorder %v2718, %v2731
      %vm2737 = vcmp.eq.s32.totalorder %v2719, %v2731
      %vm2738 = vcmp.eq.s32.totalorder %v2720, %v2731
      %vm2739 = vcmp.eq.s32.totalorder %v2721, %v2731
      %vm2740 = vcmp.eq.s32.totalorder %v2722, %v2731
      %vm2741 = vcmp.eq.s32.totalorder %v2723, %v2731
      %vm2742 = vcmp.eq.s32.totalorder %v2724, %v2731
      %vm2743 = vcmp.eq.s32.totalorder %v2725, %v2731
      %vm2744 = vcmp.eq.s32.totalorder %v2726, %v2731
      %vm2745 = vcmp.eq.s32.totalorder %v2727, %v2731
      %vm2746 = vcmp.eq.s32.totalorder %v2728, %v2731
      %vm2747 = vcmp.eq.s32.totalorder %v2729, %v2731
      %v2748 = vand.u32 %v560, 31
      %v2749 = vand.u32 %v561, 31
      %v2750 = vand.u32 %v562, 31
      %v2751 = vand.u32 %v563, 31
      %v2752 = vand.u32 %v564, 31
      %v2753 = vand.u32 %v565, 31
      %v2754 = vand.u32 %v1236, 31
      %v2755 = vand.u32 %v1237, 31
      %v2756 = vand.u32 %v1238, 31
      %v2757 = vand.u32 %v1239, 31
      %v2758 = vand.u32 %v1240, 31
      %v2759 = vand.u32 %v1241, 31
      %v2760 = vand.u32 %v1242, 31
      %v2761 = vand.u32 %v1243, 31
      %v2762 = vand.u32 %v1244, 31
      %v2763 = vand.u32 %v1245, 31
      %v2764 = vand.u32 %v567, 31
      %vm2765 = vcmp.eq.s32.totalorder %v2748, %v2764
      %vm2766 = vcmp.eq.s32.totalorder %v2749, %v2764
      %vm2767 = vcmp.eq.s32.totalorder %v2750, %v2764
      %vm2768 = vcmp.eq.s32.totalorder %v2751, %v2764
      %vm2769 = vcmp.eq.s32.totalorder %v2752, %v2764
      %vm2770 = vcmp.eq.s32.totalorder %v2753, %v2764
      %vm2771 = vcmp.eq.s32.totalorder %v2754, %v2764
      %vm2772 = vcmp.eq.s32.totalorder %v2755, %v2764
      %vm2773 = vcmp.eq.s32.totalorder %v2756, %v2764
      %vm2774 = vcmp.eq.s32.totalorder %v2757, %v2764
      %vm2775 = vcmp.eq.s32.totalorder %v2758, %v2764
      %vm2776 = vcmp.eq.s32.totalorder %v2759, %v2764
      %vm2777 = vcmp.eq.s32.totalorder %v2760, %v2764
      %vm2778 = vcmp.eq.s32.totalorder %v2761, %v2764
      %vm2779 = vcmp.eq.s32.totalorder %v2762, %v2764
      %vm2780 = vcmp.eq.s32.totalorder %v2763, %v2764
      %vm2781 = vmand %vm2732, %vm2765
      %vm2782 = vmand %vm2733, %vm2766
      %vm2783 = vmand %vm2734, %vm2767
      %vm2784 = vmand %vm2735, %vm2768
      %vm2785 = vmand %vm2736, %vm2769
      %vm2786 = vmand %vm2737, %vm2770
      %vm2787 = vmand %vm2738, %vm2771
      %vm2788 = vmand %vm2739, %vm2772
      %vm2789 = vmand %vm2740, %vm2773
      %vm2790 = vmand %vm2741, %vm2774
      %vm2791 = vmand %vm2742, %vm2775
      %vm2792 = vmand %vm2743, %vm2776
      %vm2793 = vmand %vm2744, %vm2777
      %vm2794 = vmand %vm2745, %vm2778
      %vm2795 = vmand %vm2746, %vm2779
      %vm2796 = vmand %vm2747, %vm2780
      %v2797 = vsel %vm2781, 1.0, 0.0
      %v2798 = vsel %vm2782, 1.0, 0.0
      %v2799 = vsel %vm2783, 1.0, 0.0
      %v2800 = vsel %vm2784, 1.0, 0.0
      %v2801 = vsel %vm2785, 1.0, 0.0
      %v2802 = vsel %vm2786, 1.0, 0.0
      %v2803 = vsel %vm2787, 1.0, 0.0
      %v2804 = vsel %vm2788, 1.0, 0.0
      %v2805 = vsel %vm2789, 1.0, 0.0
      %v2806 = vsel %vm2790, 1.0, 0.0
      %v2807 = vsel %vm2791, 1.0, 0.0
      %v2808 = vsel %vm2792, 1.0, 0.0
      %v2809 = vsel %vm2793, 1.0, 0.0
      %v2810 = vsel %vm2794, 1.0, 0.0
      %v2811 = vsel %vm2795, 1.0, 0.0
      %v2812 = vsel %vm2796, 1.0, 0.0
      %v2813 = vpack.c.bf16 %v2798, %v2797
      %v2814 = vpack.c.bf16 %v2800, %v2799
      %v2815 = vpack.c.bf16 %v2802, %v2801
      %v2816 = vpack.c.bf16 %v2804, %v2803
      %v2817 = vpack.c.bf16 %v2806, %v2805
      %v2818 = vpack.c.bf16 %v2808, %v2807
      %v2819 = vpack.c.bf16 %v2810, %v2809
      %v2820 = vpack.c.bf16 %v2812, %v2811
      %v2821 = vadd.s32 %v2731, 1
      %vm2822 = vcmp.eq.s32.totalorder %v2714, %v2821
      %vm2823 = vcmp.eq.s32.totalorder %v2715, %v2821
      %vm2824 = vcmp.eq.s32.totalorder %v2716, %v2821
      %vm2825 = vcmp.eq.s32.totalorder %v2717, %v2821
      %vm2826 = vcmp.eq.s32.totalorder %v2718, %v2821
      %vm2827 = vcmp.eq.s32.totalorder %v2719, %v2821
      %vm2828 = vcmp.eq.s32.totalorder %v2720, %v2821
      %vm2829 = vcmp.eq.s32.totalorder %v2721, %v2821
      %vm2830 = vcmp.eq.s32.totalorder %v2722, %v2821
      %vm2831 = vcmp.eq.s32.totalorder %v2723, %v2821
      %vm2832 = vcmp.eq.s32.totalorder %v2724, %v2821
      %vm2833 = vcmp.eq.s32.totalorder %v2725, %v2821
      %vm2834 = vcmp.eq.s32.totalorder %v2726, %v2821
      %vm2835 = vcmp.eq.s32.totalorder %v2727, %v2821
      %vm2836 = vcmp.eq.s32.totalorder %v2728, %v2821
      %vm2837 = vcmp.eq.s32.totalorder %v2729, %v2821
      %vm2838 = vmand %vm2822, %vm2765
      %vm2839 = vmand %vm2823, %vm2766
      %vm2840 = vmand %vm2824, %vm2767
      %vm2841 = vmand %vm2825, %vm2768
      %vm2842 = vmand %vm2826, %vm2769
      %vm2843 = vmand %vm2827, %vm2770
      %vm2844 = vmand %vm2828, %vm2771
      %vm2845 = vmand %vm2829, %vm2772
      %vm2846 = vmand %vm2830, %vm2773
      %vm2847 = vmand %vm2831, %vm2774
      %vm2848 = vmand %vm2832, %vm2775
      %vm2849 = vmand %vm2833, %vm2776
      %vm2850 = vmand %vm2834, %vm2777
      %vm2851 = vmand %vm2835, %vm2778
      %vm2852 = vmand %vm2836, %vm2779
      %vm2853 = vmand %vm2837, %vm2780
      %v2854 = vsel %vm2838, 1.0, 0.0
      %v2855 = vsel %vm2839, 1.0, 0.0
      %v2856 = vsel %vm2840, 1.0, 0.0
      %v2857 = vsel %vm2841, 1.0, 0.0
      %v2858 = vsel %vm2842, 1.0, 0.0
      %v2859 = vsel %vm2843, 1.0, 0.0
      %v2860 = vsel %vm2844, 1.0, 0.0
      %v2861 = vsel %vm2845, 1.0, 0.0
      %v2862 = vsel %vm2846, 1.0, 0.0
      %v2863 = vsel %vm2847, 1.0, 0.0
      %v2864 = vsel %vm2848, 1.0, 0.0
      %v2865 = vsel %vm2849, 1.0, 0.0
      %v2866 = vsel %vm2850, 1.0, 0.0
      %v2867 = vsel %vm2851, 1.0, 0.0
      %v2868 = vsel %vm2852, 1.0, 0.0
      %v2869 = vsel %vm2853, 1.0, 0.0
      %v2870 = vpack.c.bf16 %v2855, %v2854
      %v2871 = vpack.c.bf16 %v2857, %v2856
      %v2872 = vpack.c.bf16 %v2859, %v2858
      %v2873 = vpack.c.bf16 %v2861, %v2860
      %v2874 = vpack.c.bf16 %v2863, %v2862
      %v2875 = vpack.c.bf16 %v2865, %v2864
      %v2876 = vpack.c.bf16 %v2867, %v2866
      %v2877 = vpack.c.bf16 %v2869, %v2868
      %2878 = vmatprep.subr.bf16.mxu0 0
      %2879 = vmatpush1.bf16.msra.mxu0 %v2813
      %2880 = vmatprep.subr.bf16.mxu0 0
      %2881 = vmatpush1.bf16.msra.mxu0 %v2814
      %2882 = vmatprep.subr.bf16.mxu0 0
      %2883 = vmatpush1.bf16.msra.mxu0 %v2815
      %2884 = vmatprep.subr.bf16.mxu0 0
      %2885 = vmatpush1.bf16.msra.mxu0 %v2816
      %2886 = vmatprep.subr.bf16.mxu0 0
      %2887 = vmatpush1.bf16.msra.mxu0 %v2817
      %2888 = vmatprep.subr.bf16.mxu0 0
      %2889 = vmatpush1.bf16.msra.mxu0 %v2818
      %2890 = vmatprep.subr.bf16.mxu0 0
      %2891 = vmatpush1.bf16.msra.mxu0 %v2819
      %2892 = vmatprep.subr.bf16.mxu0 0
      %2893 = vmatpush1.bf16.msra.mxu0 %v2820
      %2894 = vmatprep.subr.bf16.mxu0 0
      %2895 = vmatpush1.bf16.msra.mxu0 0
      %2896 = vmatprep.subr.bf16.mxu0 0
      %2897 = vmatpush1.bf16.msra.mxu0 0
      %2898 = vmatprep.subr.bf16.mxu0 0
      %2899 = vmatpush1.bf16.msra.mxu0 0
      %2900 = vmatprep.subr.bf16.mxu0 0
      %2901 = vmatpush1.bf16.msra.mxu0 0
      %2902 = vmatprep.subr.bf16.mxu0 0
      %2903 = vmatpush1.bf16.msra.mxu0 0
      %2904 = vmatprep.subr.bf16.mxu0 0
      %2905 = vmatpush1.bf16.msra.mxu0 0
      %2906 = vmatprep.subr.bf16.mxu0 0
      %2907 = vmatpush1.bf16.msra.mxu0 0
      %2908 = vmatprep.subr.bf16.mxu0 0
      %2909 = vmatpush1.bf16.msra.mxu0 0
      %2910 = vmatprep.mubr.bf16.mxu0 0
      %2911 = vmatmul.mubr.bf16.gmra.mrb[0].mxu0 %v2713
      %v2912 = vpop.f32.mrb[0].mxu0
      %v2913 = vadd.f32 0.0, %v2912
      %v2914 = vpop.f32.mrb[0].mxu0
      %v2915 = vpop.f32.mrb[0].mxu0
      %v2916 = vpop.f32.mrb[0].mxu0
      %2917 = vdwg.mxu0
      %2918 = vmatprep.subr.bf16.mxu0 0
      %2919 = vmatpush1.bf16.msra.mxu0 %v2870
      %2920 = vmatprep.subr.bf16.mxu0 0
      %2921 = vmatpush1.bf16.msra.mxu0 %v2871
      %2922 = vmatprep.subr.bf16.mxu0 0
      %2923 = vmatpush1.bf16.msra.mxu0 %v2872
      %2924 = vmatprep.subr.bf16.mxu0 0
      %2925 = vmatpush1.bf16.msra.mxu0 %v2873
      %2926 = vmatprep.subr.bf16.mxu0 0
      %2927 = vmatpush1.bf16.msra.mxu0 %v2874
      %2928 = vmatprep.subr.bf16.mxu0 0
      %2929 = vmatpush1.bf16.msra.mxu0 %v2875
      %2930 = vmatprep.subr.bf16.mxu0 0
      %2931 = vmatpush1.bf16.msra.mxu0 %v2876
      %2932 = vmatprep.subr.bf16.mxu0 0
      %2933 = vmatpush1.bf16.msra.mxu0 %v2877
      %2934 = vmatprep.subr.bf16.mxu0 0
      %2935 = vmatpush1.bf16.msra.mxu0 0
      %2936 = vmatprep.subr.bf16.mxu0 0
      %2937 = vmatpush1.bf16.msra.mxu0 0
      %2938 = vmatprep.subr.bf16.mxu0 0
      %2939 = vmatpush1.bf16.msra.mxu0 0
      %2940 = vmatprep.subr.bf16.mxu0 0
      %2941 = vmatpush1.bf16.msra.mxu0 0
      %2942 = vmatprep.subr.bf16.mxu0 0
      %2943 = vmatpush1.bf16.msra.mxu0 0
      %2944 = vmatprep.subr.bf16.mxu0 0
      %2945 = vmatpush1.bf16.msra.mxu0 0
      %2946 = vmatprep.subr.bf16.mxu0 0
      %2947 = vmatpush1.bf16.msra.mxu0 0
      %2948 = vmatprep.subr.bf16.mxu0 0
      %2949 = vmatpush1.bf16.msra.mxu0 0
      %2950 = vmatprep.mubr.bf16.mxu0 0
      %2951 = vmatmul.mubr.bf16.gmra.mrb[0].mxu0 %v2713
      %v2952 = vpop.f32.mrb[0].mxu0
      %v2953 = vadd.f32 0.0, %v2952
      %v2954 = vpop.f32.mrb[0].mxu0
      %v2955 = vpop.f32.mrb[0].mxu0
      %v2956 = vpop.f32.mrb[0].mxu0
      %2957 = vdwg.mxu0
      %v2958 = vmax.f32 %v2913, %v2953
      %v2959 = vpack.c.bf16 %v2958, %v2958
      %s2960 = scalar_lea.vmem %s7, 32
      %v2961 = vld [vmem:[%s2960] sm:$0xf]
      %v2962 = vld [vmem:[%s2960 + $0x4] sm:$0xf]
      %v2963 = vld [vmem:[%s2960 + $0x8] sm:$0xf]
      %v2964 = vld [vmem:[%s2960 + $0xc] sm:$0xf]
      %v2965 = vld [vmem:[%s2960 + $0x10] sm:$0xf]
      %v2966 = vld [vmem:[%s2960 + $0x14] sm:$0xf]
      %v2967 = vld [vmem:[%s2960 + $0x18] sm:$0xf]
      %v2968 = vld [vmem:[%s2960 + $0x1c] sm:$0xf]
      %v2969 = vand.u32 %v560, 1
      %vm2970 = vcmp.ne.s32.totalorder %v2969, 0
      %vm2971 = vmand %vm574, %vm2970
      %v2972 = vsel %vm2971, 1.0, 0.0
      %v2973 = vpack.c.bf16 %v2972, %v2972
      %vm2974 = vcmp.ne.s32.totalorder %v2969, 1
      %vm2975 = vmand %vm613, %vm2974
      %v2976 = vsel %vm2975, 1.0, 0.0
      %v2977 = vpack.c.bf16 %v2976, %v2976
      %vm2978 = vcmask 48128
      %v2980 = vsel %vm2978, %v2973, 0
      %vm2982 = vcmask 1042432
      %v2984 = vsel %vm2982, %v2959, 0
      %2986 = vmatprep.subr.bf16.mxu0 0
      %2987 = vmatpush1.bf16.msra.mxu0 %v2984
      %2988 = vmatprep.subr.bf16.mxu0 0
      %2989 = vmatpush1.bf16.msra.mxu0 0
      %2990 = vmatprep.subr.bf16.mxu0 0
      %2991 = vmatpush1.bf16.msra.mxu0 0
      %2992 = vmatprep.subr.bf16.mxu0 0
      %2993 = vmatpush1.bf16.msra.mxu0 0
      %2994 = vmatprep.subr.bf16.mxu0 0
      %2995 = vmatpush1.bf16.msra.mxu0 0
      %2996 = vmatprep.subr.bf16.mxu0 0
      %2997 = vmatpush1.bf16.msra.mxu0 0
      %2998 = vmatprep.subr.bf16.mxu0 0
      %2999 = vmatpush1.bf16.msra.mxu0 0
      %3000 = vmatprep.subr.bf16.mxu0 0
      %3001 = vmatpush1.bf16.msra.mxu0 0
      %3002 = vmatprep.subr.bf16.mxu0 0
      %3003 = vmatpush1.bf16.msra.mxu0 0
      %3004 = vmatprep.subr.bf16.mxu0 0
      %3005 = vmatpush1.bf16.msra.mxu0 0
      %3006 = vmatprep.subr.bf16.mxu0 0
      %3007 = vmatpush1.bf16.msra.mxu0 0
      %3008 = vmatprep.subr.bf16.mxu0 0
      %3009 = vmatpush1.bf16.msra.mxu0 0
      %3010 = vmatprep.subr.bf16.mxu0 0
      %3011 = vmatpush1.bf16.msra.mxu0 0
      %3012 = vmatprep.subr.bf16.mxu0 0
      %3013 = vmatpush1.bf16.msra.mxu0 0
      %3014 = vmatprep.subr.bf16.mxu0 0
      %3015 = vmatpush1.bf16.msra.mxu0 0
      %3016 = vmatprep.subr.bf16.mxu0 0
      %3017 = vmatpush1.bf16.msra.mxu0 0
      %3018 = vmatprep.mubr.bf16.mxu0 0
      %3019 = vmatmul.mubr.bf16.gmra.mrb[0].mxu0 %v2980
      %v3020 = vpop.f32.mrb[0].mxu0
      %v3021 = vadd.f32 0.0, %v3020
      %v3022 = vpop.f32.mrb[0].mxu0
      %v3023 = vpop.f32.mrb[0].mxu0
      %v3024 = vpop.f32.mrb[0].mxu0
      %3025 = vdwg.mxu0
      %v3026 = vpack.c.bf16 %v3021, %v3021
      %v3028 = vsel %vm2978, %v2977, 0
      %3030 = vmatprep.subr.bf16.mxu0 0
      %3031 = vmatpush1.bf16.msra.mxu0 %v2984
      %3032 = vmatprep.subr.bf16.mxu0 0
      %3033 = vmatpush1.bf16.msra.mxu0 0
      %3034 = vmatprep.subr.bf16.mxu0 0
      %3035 = vmatpush1.bf16.msra.mxu0 0
      %3036 = vmatprep.subr.bf16.mxu0 0
      %3037 = vmatpush1.bf16.msra.mxu0 0
      %3038 = vmatprep.subr.bf16.mxu0 0
      %3039 = vmatpush1.bf16.msra.mxu0 0
      %3040 = vmatprep.subr.bf16.mxu0 0
      %3041 = vmatpush1.bf16.msra.mxu0 0
      %3042 = vmatprep.subr.bf16.mxu0 0
      %3043 = vmatpush1.bf16.msra.mxu0 0
      %3044 = vmatprep.subr.bf16.mxu0 0
      %3045 = vmatpush1.bf16.msra.mxu0 0
      %3046 = vmatprep.subr.bf16.mxu0 0
      %3047 = vmatpush1.bf16.msra.mxu0 0
      %3048 = vmatprep.subr.bf16.mxu0 0
      %3049 = vmatpush1.bf16.msra.mxu0 0
      %3050 = vmatprep.subr.bf16.mxu0 0
      %3051 = vmatpush1.bf16.msra.mxu0 0
      %3052 = vmatprep.subr.bf16.mxu0 0
      %3053 = vmatpush1.bf16.msra.mxu0 0
      %3054 = vmatprep.subr.bf16.mxu0 0
      %3055 = vmatpush1.bf16.msra.mxu0 0
      %3056 = vmatprep.subr.bf16.mxu0 0
      %3057 = vmatpush1.bf16.msra.mxu0 0
      %3058 = vmatprep.subr.bf16.mxu0 0
      %3059 = vmatpush1.bf16.msra.mxu0 0
      %3060 = vmatprep.subr.bf16.mxu0 0
      %3061 = vmatpush1.bf16.msra.mxu0 0
      %3062 = vmatprep.mubr.bf16.mxu0 0
      %3063 = vmatmul.mubr.bf16.gmra.mrb[0].mxu0 %v3028
      %v3064 = vpop.f32.mrb[0].mxu0
      %v3065 = vadd.f32 0.0, %v3064
      %v3066 = vpop.f32.mrb[0].mxu0
      %v3067 = vpop.f32.mrb[0].mxu0
      %v3068 = vpop.f32.mrb[0].mxu0
      %3069 = vdwg.mxu0
      %v3070 = vpack.c.bf16 %v3065, %v3065
      %v3071 = vld [vmem:[%s7] sm:$0xf]
      %v3072 = vld [vmem:[%s7 + $0x4] sm:$0xf]
      %v3073 = vld [vmem:[%s7 + $0x8] sm:$0xf]
      %v3074 = vld [vmem:[%s7 + $0xc] sm:$0xf]
      %v3075 = vld [vmem:[%s7 + $0x10] sm:$0xf]
      %v3076 = vld [vmem:[%s7 + $0x14] sm:$0xf]
      %v3077 = vld [vmem:[%s7 + $0x18] sm:$0xf]
      %v3078 = vld [vmem:[%s7 + $0x1c] sm:$0xf]
      %v3087 = vunpack.c.l.b16 %v3071
      %v3088 = vunpack.c.l.b16 %v3072
      %v3089 = vunpack.c.l.b16 %v3073
      %v3090 = vunpack.c.l.b16 %v3074
      %v3091 = vunpack.c.l.b16 %v3075
      %v3092 = vunpack.c.l.b16 %v3076
      %v3093 = vunpack.c.l.b16 %v3077
      %v3094 = vunpack.c.l.b16 %v3078
      %v3095 = vpack.c.b16 %v3088, %v3087
      %v3096 = vpack.c.b16 %v3090, %v3089
      %v3097 = vpack.c.b16 %v3092, %v3091
      %v3098 = vpack.c.b16 %v3094, %v3093
      %v3104 = vsel %vm811, %v3026, 0
      %3106 = vmatprep.subr.bf16.mxu0 0
      %3107 = vmatpush1.bf16.msra.mxu0 %v3095
      %3108 = vmatprep.subr.bf16.mxu0 0
      %3109 = vmatpush1.bf16.msra.mxu0 %v3096
      %3110 = vmatprep.subr.bf16.mxu0 0
      %3111 = vmatpush1.bf16.msra.mxu0 %v3097
      %3112 = vmatprep.subr.bf16.mxu0 0
      %3113 = vmatpush1.bf16.msra.mxu0 %v3098
      %3114 = vmatprep.subr.bf16.mxu0 0
      %3115 = vmatpush1.bf16.msra.mxu0 0
      %3116 = vmatprep.subr.bf16.mxu0 0
      %3117 = vmatpush1.bf16.msra.mxu0 0
      %3118 = vmatprep.subr.bf16.mxu0 0
      %3119 = vmatpush1.bf16.msra.mxu0 0
      %3120 = vmatprep.subr.bf16.mxu0 0
      %3121 = vmatpush1.bf16.msra.mxu0 0
      %3122 = vmatprep.subr.bf16.mxu0 0
      %3123 = vmatpush1.bf16.msra.mxu0 0
      %3124 = vmatprep.subr.bf16.mxu0 0
      %3125 = vmatpush1.bf16.msra.mxu0 0
      %3126 = vmatprep.subr.bf16.mxu0 0
      %3127 = vmatpush1.bf16.msra.mxu0 0
      %3128 = vmatprep.subr.bf16.mxu0 0
      %3129 = vmatpush1.bf16.msra.mxu0 0
      %3130 = vmatprep.subr.bf16.mxu0 0
      %3131 = vmatpush1.bf16.msra.mxu0 0
      %3132 = vmatprep.subr.bf16.mxu0 0
      %3133 = vmatpush1.bf16.msra.mxu0 0
      %3134 = vmatprep.subr.bf16.mxu0 0
      %3135 = vmatpush1.bf16.msra.mxu0 0
      %3136 = vmatprep.subr.bf16.mxu0 0
      %3137 = vmatpush1.bf16.msra.mxu0 0
      %3138 = vmatprep.mubr.bf16.mxu0 0
      %3139 = vmatmul.mubr.bf16.gmra.mrb[0].mxu0 %v3104
      %v3140 = vpop.f32.mrb[0].mxu0
      %v3141 = vadd.f32 0.0, %v3140
      %v3142 = vpop.f32.mrb[0].mxu0
      %v3143 = vpop.f32.mrb[0].mxu0
      %v3144 = vpop.f32.mrb[0].mxu0
      %3145 = vdwg.mxu0
      %v3154 = vunpack.c.l.b16 %v2961
      %v3155 = vunpack.c.l.b16 %v2962
      %v3156 = vunpack.c.l.b16 %v2963
      %v3157 = vunpack.c.l.b16 %v2964
      %v3158 = vunpack.c.l.b16 %v2965
      %v3159 = vunpack.c.l.b16 %v2966
      %v3160 = vunpack.c.l.b16 %v2967
      %v3161 = vunpack.c.l.b16 %v2968
      %v3162 = vpack.c.b16 %v3155, %v3154
      %v3163 = vpack.c.b16 %v3157, %v3156
      %v3164 = vpack.c.b16 %v3159, %v3158
      %v3165 = vpack.c.b16 %v3161, %v3160
      %v3170 = vsel %vm811, %v2959, 0
      %3172 = vmatprep.subr.bf16.mxu0 0
      %3173 = vmatpush1.bf16.msra.mxu0 %v3162
      %3174 = vmatprep.subr.bf16.mxu0 0
      %3175 = vmatpush1.bf16.msra.mxu0 %v3163
      %3176 = vmatprep.subr.bf16.mxu0 0
      %3177 = vmatpush1.bf16.msra.mxu0 %v3164
      %3178 = vmatprep.subr.bf16.mxu0 0
      %3179 = vmatpush1.bf16.msra.mxu0 %v3165
      %3180 = vmatprep.subr.bf16.mxu0 0
      %3181 = vmatpush1.bf16.msra.mxu0 0
      %3182 = vmatprep.subr.bf16.mxu0 0
      %3183 = vmatpush1.bf16.msra.mxu0 0
      %3184 = vmatprep.subr.bf16.mxu0 0
      %3185 = vmatpush1.bf16.msra.mxu0 0
      %3186 = vmatprep.subr.bf16.mxu0 0
      %3187 = vmatpush1.bf16.msra.mxu0 0
      %3188 = vmatprep.subr.bf16.mxu0 0
      %3189 = vmatpush1.bf16.msra.mxu0 0
      %3190 = vmatprep.subr.bf16.mxu0 0
      %3191 = vmatpush1.bf16.msra.mxu0 0
      %3192 = vmatprep.subr.bf16.mxu0 0
      %3193 = vmatpush1.bf16.msra.mxu0 0
      %3194 = vmatprep.subr.bf16.mxu0 0
      %3195 = vmatpush1.bf16.msra.mxu0 0
      %3196 = vmatprep.subr.bf16.mxu0 0
      %3197 = vmatpush1.bf16.msra.mxu0 0
      %3198 = vmatprep.subr.bf16.mxu0 0
      %3199 = vmatpush1.bf16.msra.mxu0 0
      %3200 = vmatprep.subr.bf16.mxu0 0
      %3201 = vmatpush1.bf16.msra.mxu0 0
      %3202 = vmatprep.subr.bf16.mxu0 0
      %3203 = vmatpush1.bf16.msra.mxu0 0
      %3204 = vmatprep.mubr.bf16.mxu0 0
      %3205 = vmatmul.mubr.bf16.gmra.mrb[0].mxu0 %v3170
      %v3206 = vpop.f32.mrb[0].mxu0
      %v3207 = vadd.f32 %v3141, %v3206
      %v3208 = vpop.f32.mrb[0].mxu0
      %v3209 = vpop.f32.mrb[0].mxu0
      %v3210 = vpop.f32.mrb[0].mxu0
      %3211 = vdwg.mxu0
      %s3212 = scalar_lea.vmem %s7, 64
      %v3213 = vld [vmem:[%s3212] sm:$0xf]
      %v3214 = vld [vmem:[%s3212 + $0x4] sm:$0xf]
      %v3215 = vld [vmem:[%s3212 + $0x8] sm:$0xf]
      %v3216 = vld [vmem:[%s3212 + $0xc] sm:$0xf]
      %v3217 = vld [vmem:[%s3212 + $0x10] sm:$0xf]
      %v3218 = vld [vmem:[%s3212 + $0x14] sm:$0xf]
      %v3219 = vld [vmem:[%s3212 + $0x18] sm:$0xf]
      %v3220 = vld [vmem:[%s3212 + $0x1c] sm:$0xf]
      %v3229 = vunpack.c.l.b16 %v3213
      %v3230 = vunpack.c.l.b16 %v3214
      %v3231 = vunpack.c.l.b16 %v3215
      %v3232 = vunpack.c.l.b16 %v3216
      %v3233 = vunpack.c.l.b16 %v3217
      %v3234 = vunpack.c.l.b16 %v3218
      %v3235 = vunpack.c.l.b16 %v3219
      %v3236 = vunpack.c.l.b16 %v3220
      %v3237 = vpack.c.b16 %v3230, %v3229
      %v3238 = vpack.c.b16 %v3232, %v3231
      %v3239 = vpack.c.b16 %v3234, %v3233
      %v3240 = vpack.c.b16 %v3236, %v3235
      %v3246 = vsel %vm811, %v3070, 0
      %3248 = vmatprep.subr.bf16.mxu0 0
      %3249 = vmatpush1.bf16.msra.mxu0 %v3237
      %3250 = vmatprep.subr.bf16.mxu0 0
      %3251 = vmatpush1.bf16.msra.mxu0 %v3238
      %3252 = vmatprep.subr.bf16.mxu0 0
      %3253 = vmatpush1.bf16.msra.mxu0 %v3239
      %3254 = vmatprep.subr.bf16.mxu0 0
      %3255 = vmatpush1.bf16.msra.mxu0 %v3240
      %3256 = vmatprep.subr.bf16.mxu0 0
      %3257 = vmatpush1.bf16.msra.mxu0 0
      %3258 = vmatprep.subr.bf16.mxu0 0
      %3259 = vmatpush1.bf16.msra.mxu0 0
      %3260 = vmatprep.subr.bf16.mxu0 0
      %3261 = vmatpush1.bf16.msra.mxu0 0
      %3262 = vmatprep.subr.bf16.mxu0 0
      %3263 = vmatpush1.bf16.msra.mxu0 0
      %3264 = vmatprep.subr.bf16.mxu0 0
      %3265 = vmatpush1.bf16.msra.mxu0 0
      %3266 = vmatprep.subr.bf16.mxu0 0
      %3267 = vmatpush1.bf16.msra.mxu0 0
      %3268 = vmatprep.subr.bf16.mxu0 0
      %3269 = vmatpush1.bf16.msra.mxu0 0
      %3270 = vmatprep.subr.bf16.mxu0 0
      %3271 = vmatpush1.bf16.msra.mxu0 0
      %3272 = vmatprep.subr.bf16.mxu0 0
      %3273 = vmatpush1.bf16.msra.mxu0 0
      %3274 = vmatprep.subr.bf16.mxu0 0
      %3275 = vmatpush1.bf16.msra.mxu0 0
      %3276 = vmatprep.subr.bf16.mxu0 0
      %3277 = vmatpush1.bf16.msra.mxu0 0
      %3278 = vmatprep.subr.bf16.mxu0 0
      %3279 = vmatpush1.bf16.msra.mxu0 0
      %3280 = vmatprep.mubr.bf16.mxu0 0
      %3281 = vmatmul.mubr.bf16.gmra.mrb[0].mxu0 %v3246
      %v3282 = vpop.f32.mrb[0].mxu0
      %v3283 = vadd.f32 0.0, %v3282
      %v3284 = vpop.f32.mrb[0].mxu0
      %v3285 = vpop.f32.mrb[0].mxu0
      %v3286 = vpop.f32.mrb[0].mxu0
      %3287 = vdwg.mxu0
      %v3288 = vadd.f32 %v3207, %v3283
      %v3289 = vld [vmem:[%s8] sm:$0x1]
      %v3291 = vlaneseq
      %v3292 = vshrl.u32 %v3291, 7
      %v3293 = vsub.s32 0, %v3292
      %v3294 = vrot.slane %v3289, %v3293
      %v3296 = vadd.f32 %v3288, %v3294
      %v3297 = vmax.f32 %v3296, 0.0
      %vm3298 = vcmask 521216
      %3299 = vst.msk [vmem:[%s535] sm:$0x3f] %vm3298, %v3297
      %v3300 = vpack.c.bf16 %v3297, %v3297
      %v3301 = vsel %vm2978, %v2621, 0
      %v3304 = vsel %vm2982, %v3300, 0
      %3306 = vmatprep.subr.bf16.mxu0 0
      %3307 = vmatpush1.bf16.msra.mxu0 %v3304
      %3308 = vmatprep.subr.bf16.mxu0 0
      %3309 = vmatpush1.bf16.msra.mxu0 0
      %3310 = vmatprep.subr.bf16.mxu0 0
      %3311 = vmatpush1.bf16.msra.mxu0 0
      %3312 = vmatprep.subr.bf16.mxu0 0
      %3313 = vmatpush1.bf16.msra.mxu0 0
      %3314 = vmatprep.subr.bf16.mxu0 0
      %3315 = vmatpush1.bf16.msra.mxu0 0
      %3316 = vmatprep.subr.bf16.mxu0 0
      %3317 = vmatpush1.bf16.msra.mxu0 0
      %3318 = vmatprep.subr.bf16.mxu0 0
      %3319 = vmatpush1.bf16.msra.mxu0 0
      %3320 = vmatprep.subr.bf16.mxu0 0
      %3321 = vmatpush1.bf16.msra.mxu0 0
      %3322 = vmatprep.subr.bf16.mxu0 0
      %3323 = vmatpush1.bf16.msra.mxu0 0
      %3324 = vmatprep.subr.bf16.mxu0 0
      %3325 = vmatpush1.bf16.msra.mxu0 0
      %3326 = vmatprep.subr.bf16.mxu0 0
      %3327 = vmatpush1.bf16.msra.mxu0 0
      %3328 = vmatprep.subr.bf16.mxu0 0
      %3329 = vmatpush1.bf16.msra.mxu0 0
      %3330 = vmatprep.subr.bf16.mxu0 0
      %3331 = vmatpush1.bf16.msra.mxu0 0
      %3332 = vmatprep.subr.bf16.mxu0 0
      %3333 = vmatpush1.bf16.msra.mxu0 0
      %3334 = vmatprep.subr.bf16.mxu0 0
      %3335 = vmatpush1.bf16.msra.mxu0 0
      %3336 = vmatprep.subr.bf16.mxu0 0
      %3337 = vmatpush1.bf16.msra.mxu0 0
      %3338 = vmatprep.mubr.bf16.mxu0 0
      %3339 = vmatmul.mubr.bf16.gmra.mrb[0].mxu0 %v3301
      %v3340 = vpop.f32.mrb[0].mxu0
      %v3341 = vadd.f32 0.0, %v3340
      %v3342 = vpop.f32.mrb[0].mxu0
      %v3343 = vpop.f32.mrb[0].mxu0
      %v3344 = vpop.f32.mrb[0].mxu0
      %3345 = vdwg.mxu0
      %v3346 = vsel %vm2978, %v2622, 0
      %3348 = vmatprep.subr.bf16.mxu0 0
      %3349 = vmatpush1.bf16.msra.mxu0 %v3304
      %3350 = vmatprep.subr.bf16.mxu0 0
      %3351 = vmatpush1.bf16.msra.mxu0 0
      %3352 = vmatprep.subr.bf16.mxu0 0
      %3353 = vmatpush1.bf16.msra.mxu0 0
      %3354 = vmatprep.subr.bf16.mxu0 0
      %3355 = vmatpush1.bf16.msra.mxu0 0
      %3356 = vmatprep.subr.bf16.mxu0 0
      %3357 = vmatpush1.bf16.msra.mxu0 0
      %3358 = vmatprep.subr.bf16.mxu0 0
      %3359 = vmatpush1.bf16.msra.mxu0 0
      %3360 = vmatprep.subr.bf16.mxu0 0
      %3361 = vmatpush1.bf16.msra.mxu0 0
      %3362 = vmatprep.subr.bf16.mxu0 0
      %3363 = vmatpush1.bf16.msra.mxu0 0
      %3364 = vmatprep.subr.bf16.mxu0 0
      %3365 = vmatpush1.bf16.msra.mxu0 0
      %3366 = vmatprep.subr.bf16.mxu0 0
      %3367 = vmatpush1.bf16.msra.mxu0 0
      %3368 = vmatprep.subr.bf16.mxu0 0
      %3369 = vmatpush1.bf16.msra.mxu0 0
      %3370 = vmatprep.subr.bf16.mxu0 0
      %3371 = vmatpush1.bf16.msra.mxu0 0
      %3372 = vmatprep.subr.bf16.mxu0 0
      %3373 = vmatpush1.bf16.msra.mxu0 0
      %3374 = vmatprep.subr.bf16.mxu0 0
      %3375 = vmatpush1.bf16.msra.mxu0 0
      %3376 = vmatprep.subr.bf16.mxu0 0
      %3377 = vmatpush1.bf16.msra.mxu0 0
      %3378 = vmatprep.subr.bf16.mxu0 0
      %3379 = vmatpush1.bf16.msra.mxu0 0
      %3380 = vmatprep.mubr.bf16.mxu0 0
      %3381 = vmatmul.mubr.bf16.gmra.mrb[0].mxu0 %v3346
      %v3382 = vpop.f32.mrb[0].mxu0
      %v3383 = vadd.f32 0.0, %v3382
      %v3384 = vpop.f32.mrb[0].mxu0
      %v3385 = vpop.f32.mrb[0].mxu0
      %v3386 = vpop.f32.mrb[0].mxu0
      %3387 = vdwg.mxu0
      %v3388 = vmax.f32 %v3341, %v3383
      %v3389 = vpack.c.bf16 %v3388, %v3388
      %v3391 = vsel %vm811, %v3389, 0
      %3393 = vmatprep.subr.bf16.mxu0 0
      %3394 = vmatpush1.bf16.msra.mxu0 %v2813
      %3395 = vmatprep.subr.bf16.mxu0 0
      %3396 = vmatpush1.bf16.msra.mxu0 %v2814
      %3397 = vmatprep.subr.bf16.mxu0 0
      %3398 = vmatpush1.bf16.msra.mxu0 %v2815
      %3399 = vmatprep.subr.bf16.mxu0 0
      %3400 = vmatpush1.bf16.msra.mxu0 %v2816
      %3401 = vmatprep.subr.bf16.mxu0 0
      %3402 = vmatpush1.bf16.msra.mxu0 0
      %3403 = vmatprep.subr.bf16.mxu0 0
      %3404 = vmatpush1.bf16.msra.mxu0 0
      %3405 = vmatprep.subr.bf16.mxu0 0
      %3406 = vmatpush1.bf16.msra.mxu0 0
      %3407 = vmatprep.subr.bf16.mxu0 0
      %3408 = vmatpush1.bf16.msra.mxu0 0
      %3409 = vmatprep.subr.bf16.mxu0 0
      %3410 = vmatpush1.bf16.msra.mxu0 0
      %3411 = vmatprep.subr.bf16.mxu0 0
      %3412 = vmatpush1.bf16.msra.mxu0 0
      %3413 = vmatprep.subr.bf16.mxu0 0
      %3414 = vmatpush1.bf16.msra.mxu0 0
      %3415 = vmatprep.subr.bf16.mxu0 0
      %3416 = vmatpush1.bf16.msra.mxu0 0
      %3417 = vmatprep.subr.bf16.mxu0 0
      %3418 = vmatpush1.bf16.msra.mxu0 0
      %3419 = vmatprep.subr.bf16.mxu0 0
      %3420 = vmatpush1.bf16.msra.mxu0 0
      %3421 = vmatprep.subr.bf16.mxu0 0
      %3422 = vmatpush1.bf16.msra.mxu0 0
      %3423 = vmatprep.subr.bf16.mxu0 0
      %3424 = vmatpush1.bf16.msra.mxu0 0
      %3425 = vmatprep.mubr.bf16.mxu0 0
      %3426 = vmatmul.mubr.bf16.gmra.mrb[0].mxu0 %v3391
      %v3427 = vpop.f32.mrb[0].mxu0
      %v3428 = vadd.f32 0.0, %v3427
      %v3429 = vpop.f32.mrb[0].mxu0
      %v3430 = vpop.f32.mrb[0].mxu0
      %v3431 = vpop.f32.mrb[0].mxu0
      %3432 = vdwg.mxu0
      %3433 = vmatprep.subr.bf16.mxu0 0
      %3434 = vmatpush1.bf16.msra.mxu0 %v2870
      %3435 = vmatprep.subr.bf16.mxu0 0
      %3436 = vmatpush1.bf16.msra.mxu0 %v2871
      %3437 = vmatprep.subr.bf16.mxu0 0
      %3438 = vmatpush1.bf16.msra.mxu0 %v2872
      %3439 = vmatprep.subr.bf16.mxu0 0
      %3440 = vmatpush1.bf16.msra.mxu0 %v2873
      %3441 = vmatprep.subr.bf16.mxu0 0
      %3442 = vmatpush1.bf16.msra.mxu0 0
      %3443 = vmatprep.subr.bf16.mxu0 0
      %3444 = vmatpush1.bf16.msra.mxu0 0
      %3445 = vmatprep.subr.bf16.mxu0 0
      %3446 = vmatpush1.bf16.msra.mxu0 0
      %3447 = vmatprep.subr.bf16.mxu0 0
      %3448 = vmatpush1.bf16.msra.mxu0 0
      %3449 = vmatprep.subr.bf16.mxu0 0
      %3450 = vmatpush1.bf16.msra.mxu0 0
      %3451 = vmatprep.subr.bf16.mxu0 0
      %3452 = vmatpush1.bf16.msra.mxu0 0
      %3453 = vmatprep.subr.bf16.mxu0 0
      %3454 = vmatpush1.bf16.msra.mxu0 0
      %3455 = vmatprep.subr.bf16.mxu0 0
      %3456 = vmatpush1.bf16.msra.mxu0 0
      %3457 = vmatprep.subr.bf16.mxu0 0
      %3458 = vmatpush1.bf16.msra.mxu0 0
      %3459 = vmatprep.subr.bf16.mxu0 0
      %3460 = vmatpush1.bf16.msra.mxu0 0
      %3461 = vmatprep.subr.bf16.mxu0 0
      %3462 = vmatpush1.bf16.msra.mxu0 0
      %3463 = vmatprep.subr.bf16.mxu0 0
      %3464 = vmatpush1.bf16.msra.mxu0 0
      %3465 = vmatprep.mubr.bf16.mxu0 0
      %3466 = vmatmul.mubr.bf16.gmra.mrb[0].mxu0 %v3391
      %v3467 = vpop.f32.mrb[0].mxu0
      %v3468 = vadd.f32 0.0, %v3467
      %v3469 = vpop.f32.mrb[0].mxu0
      %v3470 = vpop.f32.mrb[0].mxu0
      %v3471 = vpop.f32.mrb[0].mxu0
      %3472 = vdwg.mxu0
      %v3473 = vmax.f32 %v3428, %v3468
      %v3474 = vpack.c.bf16 %v3473, %v3473
      %s3475 = scalar_lea.vmem %s9, 16
      %v3476 = vld [vmem:[%s3475] sm:$0xf]
      %v3477 = vld [vmem:[%s3475 + $0x4] sm:$0xf]
      %v3478 = vld [vmem:[%s3475 + $0x8] sm:$0xf]
      %v3479 = vld [vmem:[%s3475 + $0xc] sm:$0xf]
      %v3480 = vld [vmem:[%s10] sm:$0x1]
      %v3482 = vlaneseq
      %v3483 = vshrl.u32 %v3482, 7
      %v3484 = vsub.s32 0, %v3483
      %v3485 = vrot.slane %v3480, %v3484
      %v3491 = vunpack.c.l.b16 %v3476
      %v3492 = vunpack.c.l.b16 %v3477
      %v3493 = vunpack.c.l.b16 %v3478
      %v3494 = vunpack.c.l.b16 %v3479
      %v3495 = vpack.c.b16 %v3492, %v3491
      %v3496 = vpack.c.b16 %v3494, %v3493
      %vm3499 = vcmask 261120
      %v3501 = vsel %vm3499, %v3474, 0
      %3503 = vmatprep.subr.bf16.mxu0 0
      %3504 = vmatpush1.bf16.msra.mxu0 %v3495
      %3505 = vmatprep.subr.bf16.mxu0 0
      %3506 = vmatpush1.bf16.msra.mxu0 %v3496
      %3507 = vmatprep.subr.bf16.mxu0 0
      %3508 = vmatpush1.bf16.msra.mxu0 0
      %3509 = vmatprep.subr.bf16.mxu0 0
      %3510 = vmatpush1.bf16.msra.mxu0 0
      %3511 = vmatprep.subr.bf16.mxu0 0
      %3512 = vmatpush1.bf16.msra.mxu0 0
      %3513 = vmatprep.subr.bf16.mxu0 0
      %3514 = vmatpush1.bf16.msra.mxu0 0
      %3515 = vmatprep.subr.bf16.mxu0 0
      %3516 = vmatpush1.bf16.msra.mxu0 0
      %3517 = vmatprep.subr.bf16.mxu0 0
      %3518 = vmatpush1.bf16.msra.mxu0 0
      %3519 = vmatprep.subr.bf16.mxu0 0
      %3520 = vmatpush1.bf16.msra.mxu0 0
      %3521 = vmatprep.subr.bf16.mxu0 0
      %3522 = vmatpush1.bf16.msra.mxu0 0
      %3523 = vmatprep.subr.bf16.mxu0 0
      %3524 = vmatpush1.bf16.msra.mxu0 0
      %3525 = vmatprep.subr.bf16.mxu0 0
      %3526 = vmatpush1.bf16.msra.mxu0 0
      %3527 = vmatprep.subr.bf16.mxu0 0
      %3528 = vmatpush1.bf16.msra.mxu0 0
      %3529 = vmatprep.subr.bf16.mxu0 0
      %3530 = vmatpush1.bf16.msra.mxu0 0
      %3531 = vmatprep.subr.bf16.mxu0 0
      %3532 = vmatpush1.bf16.msra.mxu0 0
      %3533 = vmatprep.subr.bf16.mxu0 0
      %3534 = vmatpush1.bf16.msra.mxu0 0
      %3535 = vmatprep.mubr.bf16.mxu0 0
      %3536 = vmatmul.mubr.bf16.gmra.mrb[0].mxu0 %v3501
      %v3537 = vpop.f32.mrb[0].mxu0
      %v3538 = vadd.f32 %v3485, %v3537
      %v3539 = vpop.f32.mrb[0].mxu0
      %v3540 = vpop.f32.mrb[0].mxu0
      %v3541 = vpop.f32.mrb[0].mxu0
      %3542 = vdwg.mxu0
      %v3543 = vmax.f32 %v3538, 0.0
      %vm3544 = vcmask 256000
      %3545 = vst.msk [vmem:[%s539] sm:$0x7] %vm3544, %v3543
      %p3546 = scmp.lt.s32.totalorder %s27, 1
      %s3547 = scalar_select %p3546, %s27, 1
      %s3548 = smul.addr %s3547, 6
      %s3549 = smul.addr %s3548, 8
      %s3550 = scalar_lea.vmem %s11, %s3549
      %p3551 = scmp.lt.s32.totalorder %s27, 1
      %s3552 = scalar_select %p3551, %s27, 1
      %s3553 = smul.addr %s3552, 3
      %s3554 = smul.addr %s3553, 8
      %s3555 = scalar_lea.vmem %s12, %s3554
      %p3556 = scmp.lt.s32.totalorder %s27, 1
      %s3557 = scalar_select %p3556, %s27, 1
      %s3558 = smul.addr %s3557, 2
      %s3559 = smul.addr %s3558, 8
      %s3560 = scalar_lea.vmem %s13, %s3559
      %p3561 = scmp.lt.s32.totalorder %s27, 1
      %s3562 = scalar_select %p3561, %s27, 1
      %s3563 = smul.addr %s3562, 8
      %s3564 = scalar_lea.vmem %s14, %s3563
      %p3565 = scmp.lt.s32.totalorder %s27, 1
      %s3566 = scalar_select %p3565, %s27, 1
      %s3567 = smul.addr %s3566, 4
      %s3568 = scalar_lea.vmem %s15, %s3567
      // Predicated region
      $region65: #{time_distributed_down.1} parent=63 // pred_check
        %p3569 = pneg %p281
      $region66: #{time_distributed_down.1} parent=63 // pred_check_branch
        %3571 = sbr.rel (%p3569) target = $region68
      $region67: #{time_distributed_down.1} parent=63 // pred_region
        _
      $region68: #{time_distributed_down.1} parent=63 // pred_fallthru
        _
      // Predicated region
      $region69: #{time_distributed_down.1} parent=63 // pred_check
        %p3572 = pneg %p307
      $region70: #{time_distributed_down.1} parent=63 // pred_check_branch
        %3574 = sbr.rel (%p3572) target = $region72
      $region71: #{time_distributed_down.1} parent=63 // pred_region
        _
      $region72: #{time_distributed_down.1} parent=63 // pred_fallthru
        _
      // Predicated region
      $region73: #{time_distributed_down.1} parent=63 // pred_check
        %p3575 = pneg %p333
      $region74: #{time_distributed_down.1} parent=63 // pred_check_branch
        %3577 = sbr.rel (%p3575) target = $region76
      $region75: #{time_distributed_down.1} parent=63 // pred_region
        _
      $region76: #{time_distributed_down.1} parent=63 // pred_fallthru
        _
      // Predicated region
      $region77: #{time_distributed_down.1} parent=63 // pred_check
        %p3578 = pneg %p359
      $region78: #{time_distributed_down.1} parent=63 // pred_check_branch
        %3580 = sbr.rel (%p3578) target = $region80
      $region79: #{time_distributed_down.1} parent=63 // pred_region
        _
      $region80: #{time_distributed_down.1} parent=63 // pred_fallthru
        _
      // Predicated region
      $region81: #{time_distributed_down.1} parent=63 // pred_check
        %p3581 = pneg %p385
      $region82: #{time_distributed_down.1} parent=63 // pred_check_branch
        %3583 = sbr.rel (%p3581) target = $region84
      $region83: #{time_distributed_down.1} parent=63 // pred_region
        _
      $region84: #{time_distributed_down.1} parent=63 // pred_fallthru
        _
    $region64: #{time_distributed_down.1} parent=5 // pred_fallthru
      _
    %p3584 = scmp.le.s32.totalorder 2, %s22
    // Predicated region
    $region85: #{time_distributed_down.1} parent=5 // pred_check
      %p3585 = pneg %p3584
    $region86: #{time_distributed_down.1} parent=5 // pred_check_branch
      %3587 = sbr.rel (%p3585) target = $region88
    $region87: #{time_distributed_down.1} parent=5 // pred_region
      %s3588 = ssub.s32 %s22, 2
      // Predicated region
      $region89: #{time_distributed_down.1} parent=87 // pred_check
        %p3589 = pneg %p287
      $region90: #{time_distributed_down.1} parent=87 // pred_check_branch
        %3591 = sbr.rel (%p3589) target = $region92
      $region91: #{time_distributed_down.1} parent=87 // pred_region
        %p3592 = scmp.lt.s32.totalorder %s28, 1
        %s3593 = scalar_select %p3592, %s28, 1
        %s3594 = smul.addr %s3593, 6
        %s3595 = smul.addr %s3594, 8
        %s3596 = scalar_lea.vmem %s11, %s3595
      $region92: #{time_distributed_down.1} parent=87 // pred_fallthru
        _
      // Predicated region
      $region93: #{time_distributed_down.1} parent=87 // pred_check
        %p3597 = pneg %p313
      $region94: #{time_distributed_down.1} parent=87 // pred_check_branch
        %3599 = sbr.rel (%p3597) target = $region96
      $region95: #{time_distributed_down.1} parent=87 // pred_region
        %p3600 = scmp.lt.s32.totalorder %s28, 1
        %s3601 = scalar_select %p3600, %s28, 1
        %s3602 = smul.addr %s3601, 3
        %s3603 = smul.addr %s3602, 8
        %s3604 = scalar_lea.vmem %s12, %s3603
      $region96: #{time_distributed_down.1} parent=87 // pred_fallthru
        _
      // Predicated region
      $region97: #{time_distributed_down.1} parent=87 // pred_check
        %p3605 = pneg %p339
      $region98: #{time_distributed_down.1} parent=87 // pred_check_branch
        %3607 = sbr.rel (%p3605) target = $region100
      $region99: #{time_distributed_down.1} parent=87 // pred_region
        %p3608 = scmp.lt.s32.totalorder %s28, 1
        %s3609 = scalar_select %p3608, %s28, 1
        %s3610 = smul.addr %s3609, 2
        %s3611 = smul.addr %s3610, 8
        %s3612 = scalar_lea.vmem %s13, %s3611
      $region100: #{time_distributed_down.1} parent=87 // pred_fallthru
        _
      // Predicated region
      $region101: #{time_distributed_down.1} parent=87 // pred_check
        %p3613 = pneg %p365
      $region102: #{time_distributed_down.1} parent=87 // pred_check_branch
        %3615 = sbr.rel (%p3613) target = $region104
      $region103: #{time_distributed_down.1} parent=87 // pred_region
        %p3616 = scmp.lt.s32.totalorder %s28, 1
        %s3617 = scalar_select %p3616, %s28, 1
        %s3618 = smul.addr %s3617, 8
        %s3619 = scalar_lea.vmem %s14, %s3618
      $region104: #{time_distributed_down.1} parent=87 // pred_fallthru
        _
      // Predicated region
      $region105: #{time_distributed_down.1} parent=87 // pred_check
        %p3620 = pneg %p391
      $region106: #{time_distributed_down.1} parent=87 // pred_check_branch
        %3622 = sbr.rel (%p3620) target = $region108
      $region107: #{time_distributed_down.1} parent=87 // pred_region
        %p3623 = scmp.lt.s32.totalorder %s28, 1
        %s3624 = scalar_select %p3623, %s28, 1
        %s3625 = smul.addr %s3624, 4
        %s3626 = scalar_lea.vmem %s15, %s3625
      $region108: #{time_distributed_down.1} parent=87 // pred_fallthru
        _
    $region88: #{time_distributed_down.1} parent=5 // pred_fallthru
      _
  $region6: #{time_distributed_down.1} parent=0 // loop_footer
    %s26 = sadd.s32 1, %s22
  $region7: #{time_distributed_down.1} parent=0 // loop_footer_branch
    %21 = sbr.rel target = $region3
  $region8: #{time_distributed_down.1} parent=0 // loop_exit
    _

</llo_original>
